<compile_context>
chip_gen: v5e
topology: v5e:2x2
jax: 0.10.0
libtpu: 0.0.40
codegen_flags: <defaults>
</compile_context>

<pallas_src>
import functools
import math

import numpy as np
import jax
import jax.numpy as jnp
from jax import lax
from jax.experimental import pallas as pl
from jax.experimental.pallas import tpu as pltpu

# ----------------------------- config (2-stage MBLM) -----------------------------
B = 2                      # batch
L = 13                     # flat input sequence length (not a multiple of P2 -> exercises padding)
SEQ_LENS = (4, 8)          # (P1 global patches, P2 local patch size)
HIDDEN_DIMS = (64, 32)     # (D_global, D_local)
NUM_LAYERS = (1, 1)        # transformer layers per stage
NUM_HEADS = 2
FF_MULT = 2
VOCAB = 64
PAD_ID = 0
EPS_LN = 1e-5
EPS_RMS = 1e-6
NEG_INF = -1e9
EXACT_SOFTMAX = False      # set True when validating against an exact reference softmax


# ----------------------------- in-kernel building blocks -----------------------------
def _rms(x, g):
    """RMSNorm on a 2-D (S, D) value; g is a (1, D) gain.  Stats stay f32."""
    ms = jnp.mean(x * x, axis=-1, keepdims=True)
    return x * lax.rsqrt(ms + EPS_RMS) * g


def _decoder(x, bias, g1_ref, wqkv_ref, wo_ref, g2_ref, w1_ref, b1_ref, w2_ref, b2_ref,
             gf_ref, num_layers, num_heads, head_dim):
    """Causal pre-RMSNorm decoder on one merged 2-D sequence (S, D).

    `bias` is a precomputed additive block-diagonal causal mask (0 / -1e9), so the per-batch
    / per-patch structure costs nothing in-kernel.  MXU matmuls take bf16 inputs with f32
    accumulation; norm stats, softmax and residual adds stay f32.  bf16 casts of q/k/v are
    hoisted out of the head loop; the 1/sqrt(hd) scale is folded into a single q cast.
    """
    D = x.shape[-1]
    scale = 1.0 / math.sqrt(head_dim)
    for l in range(num_layers):                               # static unroll
        h = _rms(x, g1_ref[l]).astype(jnp.bfloat16)
        # fused QKV: a single (S, D) @ (D, 3D) matmul
        qkv = jnp.dot(h, wqkv_ref[l], preferred_element_type=jnp.float32)
        q = (qkv[:, :D] * scale).astype(jnp.bfloat16)
        k = qkv[:, D:2 * D].astype(jnp.bfloat16)
        v = qkv[:, 2 * D:].astype(jnp.bfloat16)
        attn_out = None
        for hh in range(num_heads):                           # static unroll (H == 2)
            lo, hi = hh * head_dim, (hh + 1) * head_dim
            s = lax.dot_general(q[:, lo:hi], k[:, lo:hi], (((1,), (1,)), ((), ())),
                                preferred_element_type=jnp.float32) + bias
            m = jnp.max(s, axis=-1, keepdims=True)
            p = jnp.exp(s - m)
            denom = jnp.sum(p, axis=-1, keepdims=True)
            if EXACT_SOFTMAX:
                inv = 1.0 / denom
            else:
                inv = pl.reciprocal(denom, approx=True)       # EUP slot, ~free
            oh = jnp.dot((p * inv).astype(jnp.bfloat16), v[:, lo:hi],
                         preferred_element_type=jnp.float32)
            proj = jnp.dot(oh.astype(jnp.bfloat16), wo_ref[l, lo:hi, :],
                           preferred_element_type=jnp.float32)
            attn_out = proj if attn_out is None else attn_out + proj
        x = x + attn_out

        h2 = _rms(x, g2_ref[l]).astype(jnp.bfloat16)
        f = jnp.dot(h2, w1_ref[l], preferred_element_type=jnp.float32) + b1_ref[l]
        f = jax.nn.gelu(f).astype(jnp.bfloat16)
        x = x + jnp.dot(f, w2_ref[l], preferred_element_type=jnp.float32) + b2_ref[l]
    return _rms(x, gf_ref[0])


# ----------------------------- the single fused kernel -----------------------------
def _fused_kernel(Bb, P1p, L0, L1,
                  eids_ref, agg_ref, bias0_ref, bias1_ref, posg_ref, posl_ref,
                  t1_ref, gwcol_ref, pec_ref, peg2_ref, peb2_ref,
                  start0_ref, start1_ref,
                  g0a_ref, wqkv0_ref, wo0_ref, g0b_ref, w01_ref, b01_ref, w02_ref, b02_ref,
                  gf0_ref,
                  projw_ref, projb_ref,
                  g1a_ref, wqkv1_ref, wo1_ref, g1b_ref, w11_ref, b11_ref, w12_ref, b12_ref,
                  gf1_ref,
                  o_ref, tok0_buf, tok1_buf):
    """Whole MBLM forward (HIDDEN_STATE) for the full batch in one grid-less invocation.

    Token-row order everywhere is position-major (n, m, b): row t = n*NP + m*B + b with
    NP = B*P1p, so every prev-projection lane slice lines up with a contiguous sublane slab.
    """
    P2 = SEQ_LENS[1]
    Dg, Dl = HIDDEN_DIMS
    V = VOCAB
    NP = Bb * P1p                       # number of local patches  (4)
    T = NP * P2                         # total token rows         (32)
    hd0 = Dg // NUM_HEADS
    hd1 = Dl // NUM_HEADS

    # ---- fused token-embedding lookup (both stages) via extended one-hot on the MXU ----
    # eids already hold  in_patch_pos*VOCAB + id,  so one compare builds the one-hot.
    eids = eids_ref[...]                                                    # (T, 1) int32
    iota = lax.broadcasted_iota(jnp.int32, (T, P2 * V), 1)
    oh_ext = jnp.where(iota == eids, 1.0, 0.0).astype(jnp.bfloat16)         # (T, P2*V)
    # packed table: [ E_all = emb_global @ (gamma1*W)_slice | emb_local | emb_global ]
    yl = jnp.dot(oh_ext, t1_ref[...], preferred_element_type=jnp.float32)   # (T, Dg+2*Dl)
    emb_l = yl[:, Dg:Dg + Dl]            # local token embeddings           (T, Dl)
    emb_g = yl[:, Dg + Dl:]              # global token embeddings (stats)  (T, Dl)

    # ---- stage-0 patch embedding: LN(P2*Dl) -> Linear -> LN(Dg) -> +pos, fully folded ----
    a = agg_ref[...]                                                        # (NP, T) 0/1 f32
    agg = jnp.dot(a, yl, preferred_element_type=jnp.float32)                # per-patch sums
    xw = agg[:, :Dg]                                    # sum_t (x_flat*gamma1) @ W
    sum_x = jnp.sum(agg[:, Dg + Dl:], axis=-1, keepdims=True)               # (NP, 1)
    sum_x2 = jnp.sum(jnp.dot(a, emb_g * emb_g, preferred_element_type=jnp.float32),
                     axis=-1, keepdims=True)
    kdim = float(P2 * Dl)
    mu = sum_x / kdim
    var = sum_x2 / kdim - mu * mu
    inv = lax.rsqrt(var + EPS_LN)
    h = inv * (xw - mu * gwcol_ref[...]) + pec_ref[...]                     # LN1 + Linear
    mu2 = jnp.mean(h, axis=-1, keepdims=True)
    var2 = jnp.mean((h - mu2) ** 2, axis=-1, keepdims=True)
    patches = (h - mu2) * lax.rsqrt(var2 + EPS_LN) * peg2_ref[...] + peb2_ref[...]
    patches = patches + posg_ref[...]                                       # (NP, Dg)

    # ---- global decoder over the batch-merged sequence (start rows 0..B-1, patches after) ----
    tok0_buf[0:Bb, :] = jnp.broadcast_to(start0_ref[...], (Bb, Dg))
    tok0_buf[Bb:Bb + NP, :] = patches
    att0 = _decoder(tok0_buf[...], bias0_ref[...], g0a_ref, wqkv0_ref, wo0_ref, g0b_ref,
                    w01_ref, b01_ref, w02_ref, b02_ref, gf0_ref, L0, NUM_HEADS, hd0)

    # ---- projection to the local stage: global positions 0..P1p-1 of every batch element ----
    prev = jnp.dot(att0[0:NP, :].astype(jnp.bfloat16), projw_ref[...],
                   preferred_element_type=jnp.float32) + projb_ref[...]     # (NP, P2*Dl)

    # ---- local decoder: all patches merged, position-major token rows, start rows at the end ----
    # (the start rows receive no prev, matching F.pad(prev, (0,0,1,0)) in the reference)
    for n_pos in range(P2):                              # static unroll: one slab per position
        r0 = n_pos * NP
        tok1_buf[r0:r0 + NP, :] = (emb_l[r0:r0 + NP, :]
                                   + prev[:, n_pos * Dl:(n_pos + 1) * Dl]
                                   + posl_ref[n_pos:n_pos + 1, :])
    tok1_buf[T:T + NP, :] = jnp.broadcast_to(start1_ref[...], (NP, Dl))
    att1 = _decoder(tok1_buf[...], bias1_ref[...], g1a_ref, wqkv1_ref, wo1_ref, g1b_ref,
                    w11_ref, b11_ref, w12_ref, b12_ref, gf1_ref, L1, NUM_HEADS, hd1)

    # one aligned (T, Dl) slab store (start rows dropped)
    o_ref[...] = att1[0:T, :]


# ----------------------------- host-side static masks / helpers -----------------------------
def _bias_global(Bb, P1p):
    """Batch-block-diagonal causal bias for the merged global sequence, row = g*B + b."""
    S = (P1p + 1) * Bb
    r = np.arange(S)
    g, b = r // Bb, r % Bb
    ok = (b[:, None] == b[None, :]) & (g[None, :] <= g[:, None])
    return np.where(ok, 0.0, NEG_INF).astype(np.float32)


def _bias_local(NP, P2):
    """Per-patch causal bias for the merged local sequence: token row t = n*NP + q
    (position-major), start row for patch q = NP*P2 + q."""
    T = NP * P2
    q = np.concatenate([np.arange(T) % NP, np.arange(NP)])
    pos = np.concatenate([np.arange(T) // NP + 1, np.zeros(NP, np.int64)])
    ok = (q[:, None] == q[None, :]) & (pos[None, :] <= pos[:, None])
    return np.where(ok, 0.0, NEG_INF).astype(np.float32)


def _patch_agg(NP, P2):
    """0/1 aggregation matrix: A[q, t] = 1 iff token row t belongs to patch q (= t % NP)."""
    T = NP * P2
    return (np.arange(T)[None, :] % NP == np.arange(NP)[:, None]).astype(np.float32)


# ----------------------------- pallas_call wrapper -----------------------------
def run_fused(ids_ext, params, Bb, P1p):
    P2 = SEQ_LENS[1]
    Dg, Dl = HIDDEN_DIMS
    NP = Bb * P1p
    T = NP * P2
    s0, s1 = params["stage0"], params["stage1"]
    L0 = s0["wqkv"].shape[0]
    L1 = s1["wqkv"].shape[0]

    bias0 = jnp.asarray(_bias_global(Bb, P1p))                   # (B*(P1p+1),)^2
    bias1 = jnp.asarray(_bias_local(NP, P2))                     # (T+NP,)^2
    a_mat = jnp.asarray(_patch_agg(NP, P2))                      # (NP, T)
    pos_g_rows = jnp.repeat(params["pos_global"][:P1p], Bb, axis=0)   # (NP, Dg), rows (m, b)

    kern = functools.partial(_fused_kernel, Bb, P1p, L0, L1)
    return pl.pallas_call(
        kern,
        out_shape=jax.ShapeDtypeStruct((T, Dl), jnp.float32),
        scratch_shapes=[pltpu.VMEM((Bb * (P1p + 1), Dg), jnp.float32),   # global token buffer
                        pltpu.VMEM((T + NP, Dl), jnp.float32)],          # local token buffer
    )(ids_ext, a_mat, bias0, bias1, pos_g_rows, params["pos_local"],
      params["t1"], params["gw_colsum"], params["pe_c"], params["pe_g2"], params["pe_b2"],
      params["start0"], params["start1"],
      s0["g1"], s0["wqkv"], s0["wo"], s0["g2"], s0["w1"], s0["b1"], s0["w2"], s0["b2"], s0["gf"],
      params["proj_w"], params["proj_b"],
      s1["g1"], s1["wqkv"], s1["wo"], s1["g2"], s1["w1"], s1["b1"], s1["w2"], s1["b2"], s1["gf"])


# ----------------------------- model forward (HIDDEN_STATE path) -----------------------------
def mblm_encoder_forward(params, input_ids):
    """MBLMEncoder.forward(masked_input_ids) with default return_type=HIDDEN_STATE."""
    Bb, Lflat = input_ids.shape
    P1, P2 = SEQ_LENS
    Dg, Dl = HIDDEN_DIMS

    # flatten -> pad -> patchify (tiny static glue; everything heavy lives in the kernel)
    pad = (-Lflat) % P2
    ids = jnp.pad(input_ids, ((0, 0), (0, pad)), constant_values=PAD_ID)
    ids = ids.reshape(Bb, -1, P2).astype(jnp.int32)              # (B, P1p, P2)
    P1p = ids.shape[1]
    assert P1p <= P1, "fixed global patch embedding requires P1' <= seq_lens[0]"
    NP = Bb * P1p
    T = NP * P2

    # position-major (n, m, b) token-row order; fold the one-hot position offset into the ids.
    ext_off = jnp.asarray((np.arange(T)[:, None] // NP * VOCAB).astype(np.int32))
    ids_ext = jnp.transpose(ids, (2, 1, 0)).reshape(T, 1) + ext_off

    out = run_fused(ids_ext, params, Bb, P1p)                    # (T, Dl), rows (n, m, b)

    # reorder back to (b, m, n), flatten, trim padding  (free reshape + one tiny transpose)
    hidden = out.reshape(P2, P1p, Bb, Dl).transpose(2, 1, 0, 3).reshape(Bb, P1p * P2, Dl)
    return hidden[:, :Lflat]


# ----------------------------- deterministic parameter init -----------------------------
def init_params(key):
    P1, P2 = SEQ_LENS
    Dg, Dl = HIDDEN_DIMS
    K = P2 * Dl
    ks = iter(jax.random.split(key, 64))

    def nrm(shape, s=0.02):
        return (s * jax.random.normal(next(ks), shape)).astype(jnp.float32)

    def emb_table(vocab, dim):
        t = jax.random.normal(next(ks), (vocab, dim), jnp.float32)
        return t.at[PAD_ID].set(0.0)                   # padding_idx -> zero row

    def stage(D, layers):
        F = FF_MULT * D
        return dict(
            g1=jnp.ones((layers, 1, D), jnp.float32),
            wqkv=nrm((layers, D, 3 * D)).astype(jnp.bfloat16),   # fused Q|K|V projection
            wo=nrm((layers, D, D)).astype(jnp.bfloat16),
            g2=jnp.ones((layers, 1, D), jnp.float32),
            w1=nrm((layers, D, F)).astype(jnp.bfloat16),
            b1=jnp.zeros((layers, 1, F), jnp.float32),
            w2=nrm((layers, F, D)).astype(jnp.bfloat16),
            b2=jnp.zeros((layers, 1, D), jnp.float32),
            gf=jnp.ones((1, 1, D), jnp.float32),
        )

    emb_local = emb_table(VOCAB, Dl)       # token_embs_rev[0]
    emb_global = emb_table(VOCAB, Dl)      # Embedding inside token_embs_rev[1]

    # --- token_embs_rev[1] patch-embedding head (reference parameters) ---
    pe_g1 = jnp.ones((K,), jnp.float32)
    pe_b1 = jnp.zeros((K,), jnp.float32)
    pe_w = nrm((K, Dg))
    pe_bw = jnp.zeros((Dg,), jnp.float32)

    # --- exact algebraic fold into kernel-format tables (done once at init) ---
    wg = pe_w * pe_g1[:, None]                                              # diag(g1) @ W
    e_all = jnp.einsum("vd,pdg->pvg", emb_global,
                       wg.reshape(P2, Dl, Dg)).reshape(P2 * VOCAB, Dg)       # (P2*V, Dg)
    t1 = jnp.concatenate([e_all,
                          jnp.tile(emb_local, (P2, 1)),
                          jnp.tile(emb_global, (P2, 1))], axis=-1).astype(jnp.bfloat16)
    gw_colsum = jnp.sum(wg, axis=0, keepdims=True)                          # (1, Dg)
    pe_c = pe_b1[None, :] @ pe_w + pe_bw[None, :]                           # (1, Dg)

    return dict(
        start0=jax.random.normal(next(ks), (1, Dg), jnp.float32),
        start1=jax.random.normal(next(ks), (1, Dl), jnp.float32),
        pos_global=jax.random.normal(next(ks), (P1, Dg), jnp.float32),
        pos_local=jax.random.normal(next(ks), (P2, Dl), jnp.float32),
        # fused embedding / patch-embedding tables
        t1=t1, gw_colsum=gw_colsum, pe_c=pe_c,
        pe_g2=jnp.ones((1, Dg), jnp.float32), pe_b2=jnp.zeros((1, Dg), jnp.float32),
        # to_next_stage_proj[0]
        proj_w=nrm((Dg, K)).astype(jnp.bfloat16),
        proj_b=jnp.zeros((1, K), jnp.float32),
        stage0=stage(Dg, NUM_LAYERS[0]),
        stage1=stage(Dl, NUM_LAYERS[1]),
    )


if __name__ == "__main__":
    key = jax.random.PRNGKey(0)
    pkey, dkey = jax.random.split(key)
    params = init_params(pkey)
    # masked token ids in [1, VOCAB) so PAD_ID only appears via internal padding
    masked_input_ids = jax.random.randint(dkey, (B, L), 1, VOCAB, dtype=jnp.int32)

    hidden = jax.jit(mblm_encoder_forward)(params, masked_input_ids)
    hidden = jax.block_until_ready(hidden)

    assert hidden.shape == (B, L, HIDDEN_DIMS[-1]), hidden.shape
    assert hidden.dtype == jnp.float32
    assert bool(jnp.all(jnp.isfinite(hidden)))
    print("KERNEL_OK")
</pallas_src>

<mosaic_0001>
module attributes {stable_mosaic.version = 11 : i64} {
  func.func @_fused_kernel(%arg0: memref<32x1xi32, #tpu.memory_space<vmem>>, %arg1: memref<4x32xf32, #tpu.memory_space<vmem>>, %arg2: memref<6x6xf32, #tpu.memory_space<vmem>>, %arg3: memref<36x36xf32, #tpu.memory_space<vmem>>, %arg4: memref<4x64xf32, #tpu.memory_space<vmem>>, %arg5: memref<8x32xf32, #tpu.memory_space<vmem>>, %arg6: memref<512x128xbf16, #tpu.memory_space<vmem>>, %arg7: memref<1x64xf32, #tpu.memory_space<vmem>>, %arg8: memref<1x64xf32, #tpu.memory_space<vmem>>, %arg9: memref<1x64xf32, #tpu.memory_space<vmem>>, %arg10: memref<1x64xf32, #tpu.memory_space<vmem>>, %arg11: memref<1x64xf32, #tpu.memory_space<vmem>>, %arg12: memref<1x32xf32, #tpu.memory_space<vmem>>, %arg13: memref<1x1x64xf32, #tpu.memory_space<vmem>>, %arg14: memref<1x64x192xbf16, #tpu.memory_space<vmem>>, %arg15: memref<1x64x64xbf16, #tpu.memory_space<vmem>>, %arg16: memref<1x1x64xf32, #tpu.memory_space<vmem>>, %arg17: memref<1x64x128xbf16, #tpu.memory_space<vmem>>, %arg18: memref<1x1x128xf32, #tpu.memory_space<vmem>>, %arg19: memref<1x128x64xbf16, #tpu.memory_space<vmem>>, %arg20: memref<1x1x64xf32, #tpu.memory_space<vmem>>, %arg21: memref<1x1x64xf32, #tpu.memory_space<vmem>>, %arg22: memref<64x256xbf16, #tpu.memory_space<vmem>>, %arg23: memref<1x256xf32, #tpu.memory_space<vmem>>, %arg24: memref<1x1x32xf32, #tpu.memory_space<vmem>>, %arg25: memref<1x32x96xbf16, #tpu.memory_space<vmem>>, %arg26: memref<1x32x32xbf16, #tpu.memory_space<vmem>>, %arg27: memref<1x1x32xf32, #tpu.memory_space<vmem>>, %arg28: memref<1x32x64xbf16, #tpu.memory_space<vmem>>, %arg29: memref<1x1x64xf32, #tpu.memory_space<vmem>>, %arg30: memref<1x64x32xbf16, #tpu.memory_space<vmem>>, %arg31: memref<1x1x32xf32, #tpu.memory_space<vmem>>, %arg32: memref<1x1x32xf32, #tpu.memory_space<vmem>>, %arg33: memref<32x32xf32, #tpu.memory_space<vmem>>, %arg34: memref<6x64xf32, #tpu.memory_space<vmem>>, %arg35: memref<36x32xf32, #tpu.memory_space<vmem>>) attributes {dimension_semantics = [], scalar_prefetch = 0 : i64, scratch_operands = 2 : i64, tpu.core_type = #tpu.core_type<tc>} {
    %c0 = arith.constant 0 : index
    %c0_0 = arith.constant 0 : index
    %0 = vector.load %arg0[%c0, %c0_0] : memref<32x1xi32, #tpu.memory_space<vmem>>, vector<32x1xi32>
    %1 = tpu.iota {dimensions = array<i32: 1>} : vector<32x512xi32>
    %2 = vector.broadcast %0 : vector<32x1xi32> to vector<32x512xi32>
    %3 = arith.cmpi eq, %1, %2 : vector<32x512xi32>
    %cst = arith.constant 1.000000e+00 : f32
    %cst_1 = arith.constant 0.000000e+00 : f32
    %4 = vector.broadcast %cst : f32 to vector<32x512xf32>
    %5 = vector.broadcast %cst_1 : f32 to vector<32x512xf32>
    %6 = arith.select %3, %4, %5 : vector<32x512xi1>, vector<32x512xf32>
    %7 = arith.truncf %6 : vector<32x512xf32> to vector<32x512xbf16>
    %c0_2 = arith.constant 0 : index
    %c0_3 = arith.constant 0 : index
    %8 = vector.load %arg6[%c0_2, %c0_3] : memref<512x128xbf16, #tpu.memory_space<vmem>>, vector<512x128xbf16>
    %cst_4 = arith.constant dense<0.000000e+00> : vector<32x128xf32>
    %9 = tpu.matmul %7, %8, %cst_4 {dimension_numbers = #tpu.dot_dimension_numbers<[1], [0], [0], [1], [0, 0, 1, 1], [], []>} : vector<32x512xbf16>, vector<512x128xbf16>, vector<32x128xf32> -> vector<32x128xf32>
    %10 = vector.extract_strided_slice %9 {offsets = [0, 64], sizes = [32, 32], strides = [1, 1]} : vector<32x128xf32> to vector<32x32xf32>
    %11 = vector.extract_strided_slice %9 {offsets = [0, 96], sizes = [32, 32], strides = [1, 1]} : vector<32x128xf32> to vector<32x32xf32>
    %c0_5 = arith.constant 0 : index
    %c0_6 = arith.constant 0 : index
    %12 = vector.load %arg1[%c0_5, %c0_6] : memref<4x32xf32, #tpu.memory_space<vmem>>, vector<4x32xf32>
    %cst_7 = arith.constant dense<0.000000e+00> : vector<4x128xf32>
    %13 = tpu.matmul %12, %9, %cst_7 {dimension_numbers = #tpu.dot_dimension_numbers<[1], [0], [0], [1], [0, 0, 1, 1], [], []>} : vector<4x32xf32>, vector<32x128xf32>, vector<4x128xf32> -> vector<4x128xf32>
    %14 = vector.extract_strided_slice %13 {offsets = [0, 0], sizes = [4, 64], strides = [1, 1]} : vector<4x128xf32> to vector<4x64xf32>
    %15 = vector.extract_strided_slice %13 {offsets = [0, 96], sizes = [4, 32], strides = [1, 1]} : vector<4x128xf32> to vector<4x32xf32>
    %cst_8 = arith.constant dense<0.000000e+00> : vector<4xf32>
    %16 = vector.multi_reduction <add>, %15, %cst_8 [1] : vector<4x32xf32> to vector<4xf32>
    %17 = vector.shape_cast %16 : vector<4xf32> to vector<4x1xf32>
    %18 = arith.mulf %11, %11 : vector<32x32xf32>
    %cst_9 = arith.constant dense<0.000000e+00> : vector<4x32xf32>
    %19 = tpu.matmul %12, %18, %cst_9 {dimension_numbers = #tpu.dot_dimension_numbers<[1], [0], [0], [1], [0, 0, 1, 1], [], []>} : vector<4x32xf32>, vector<32x32xf32>, vector<4x32xf32> -> vector<4x32xf32>
    %cst_10 = arith.constant dense<0.000000e+00> : vector<4xf32>
    %20 = vector.multi_reduction <add>, %19, %cst_10 [1] : vector<4x32xf32> to vector<4xf32>
    %21 = vector.shape_cast %20 : vector<4xf32> to vector<4x1xf32>
    %cst_11 = arith.constant 2.560000e+02 : f32
    %22 = vector.broadcast %cst_11 : f32 to vector<4x1xf32>
    %23 = arith.divf %17, %22 : vector<4x1xf32>
    %cst_12 = arith.constant 2.560000e+02 : f32
    %24 = vector.broadcast %cst_12 : f32 to vector<4x1xf32>
    %25 = arith.divf %21, %24 : vector<4x1xf32>
    %26 = arith.mulf %23, %23 : vector<4x1xf32>
    %27 = arith.subf %25, %26 : vector<4x1xf32>
    %cst_13 = arith.constant 9.99999974E-6 : f32
    %28 = vector.broadcast %cst_13 : f32 to vector<4x1xf32>
    %29 = arith.addf %27, %28 : vector<4x1xf32>
    %30 = math.rsqrt %29 : vector<4x1xf32>
    %c0_14 = arith.constant 0 : index
    %c0_15 = arith.constant 0 : index
    %31 = vector.load %arg7[%c0_14, %c0_15] : memref<1x64xf32, #tpu.memory_space<vmem>>, vector<1x64xf32>
    %32 = vector.broadcast %23 : vector<4x1xf32> to vector<4x64xf32>
    %33 = vector.broadcast %31 : vector<1x64xf32> to vector<4x64xf32>
    %34 = arith.mulf %32, %33 : vector<4x64xf32>
    %35 = arith.subf %14, %34 : vector<4x64xf32>
    %36 = vector.broadcast %30 : vector<4x1xf32> to vector<4x64xf32>
    %37 = arith.mulf %36, %35 : vector<4x64xf32>
    %c0_16 = arith.constant 0 : index
    %c0_17 = arith.constant 0 : index
    %38 = vector.load %arg8[%c0_16, %c0_17] : memref<1x64xf32, #tpu.memory_space<vmem>>, vector<1x64xf32>
    %39 = vector.broadcast %38 : vector<1x64xf32> to vector<4x64xf32>
    %40 = arith.addf %37, %39 : vector<4x64xf32>
    %cst_18 = arith.constant dense<0.000000e+00> : vector<4xf32>
    %41 = vector.multi_reduction <add>, %40, %cst_18 [1] : vector<4x64xf32> to vector<4xf32>
    %42 = vector.shape_cast %41 : vector<4xf32> to vector<4x1xf32>
    %cst_19 = arith.constant 6.400000e+01 : f32
    %43 = vector.broadcast %cst_19 : f32 to vector<4x1xf32>
    %44 = arith.divf %42, %43 : vector<4x1xf32>
    %45 = vector.broadcast %44 : vector<4x1xf32> to vector<4x64xf32>
    %46 = arith.subf %40, %45 : vector<4x64xf32>
    %47 = arith.mulf %46, %46 : vector<4x64xf32>
    %cst_20 = arith.constant dense<0.000000e+00> : vector<4xf32>
    %48 = vector.multi_reduction <add>, %47, %cst_20 [1] : vector<4x64xf32> to vector<4xf32>
    %49 = vector.shape_cast %48 : vector<4xf32> to vector<4x1xf32>
    %cst_21 = arith.constant 6.400000e+01 : f32
    %50 = vector.broadcast %cst_21 : f32 to vector<4x1xf32>
    %51 = arith.divf %49, %50 : vector<4x1xf32>
    %52 = vector.broadcast %44 : vector<4x1xf32> to vector<4x64xf32>
    %53 = arith.subf %40, %52 : vector<4x64xf32>
    %cst_22 = arith.constant 9.99999974E-6 : f32
    %54 = vector.broadcast %cst_22 : f32 to vector<4x1xf32>
    %55 = arith.addf %51, %54 : vector<4x1xf32>
    %56 = math.rsqrt %55 : vector<4x1xf32>
    %57 = vector.broadcast %56 : vector<4x1xf32> to vector<4x64xf32>
    %58 = arith.mulf %53, %57 : vector<4x64xf32>
    %c0_23 = arith.constant 0 : index
    %c0_24 = arith.constant 0 : index
    %59 = vector.load %arg9[%c0_23, %c0_24] : memref<1x64xf32, #tpu.memory_space<vmem>>, vector<1x64xf32>
    %60 = vector.broadcast %59 : vector<1x64xf32> to vector<4x64xf32>
    %61 = arith.mulf %58, %60 : vector<4x64xf32>
    %c0_25 = arith.constant 0 : index
    %c0_26 = arith.constant 0 : index
    %62 = vector.load %arg10[%c0_25, %c0_26] : memref<1x64xf32, #tpu.memory_space<vmem>>, vector<1x64xf32>
    %63 = vector.broadcast %62 : vector<1x64xf32> to vector<4x64xf32>
    %64 = arith.addf %61, %63 : vector<4x64xf32>
    %c0_27 = arith.constant 0 : index
    %c0_28 = arith.constant 0 : index
    %65 = vector.load %arg4[%c0_27, %c0_28] : memref<4x64xf32, #tpu.memory_space<vmem>>, vector<4x64xf32>
    %66 = arith.addf %64, %65 : vector<4x64xf32>
    %c0_29 = arith.constant 0 : index
    %c0_30 = arith.constant 0 : index
    %67 = vector.load %arg11[%c0_29, %c0_30] : memref<1x64xf32, #tpu.memory_space<vmem>>, vector<1x64xf32>
    %68 = vector.shape_cast %67 : vector<1x64xf32> to vector<1x64xf32>
    %69 = vector.broadcast %68 : vector<1x64xf32> to vector<2x64xf32>
    %c0_31 = arith.constant 0 : index
    %c0_32 = arith.constant 0 : index
    %70 = vector.load %arg34[%c0_31, %c0_32] : memref<6x64xf32, #tpu.memory_space<vmem>>, vector<2x64xf32>
    tpu.vector_store %arg34[%c0_31, %c0_32], %69 {strides = array<i32>} : memref<6x64xf32, #tpu.memory_space<vmem>>, vector<2x64xf32>,
    %c2 = arith.constant 2 : index
    %c0_33 = arith.constant 0 : index
    %71 = vector.load %arg34[%c2, %c0_33] : memref<6x64xf32, #tpu.memory_space<vmem>>, vector<4x64xf32>
    tpu.vector_store %arg34[%c2, %c0_33], %66 {strides = array<i32>} : memref<6x64xf32, #tpu.memory_space<vmem>>, vector<4x64xf32>,
    %c0_34 = arith.constant 0 : index
    %c0_35 = arith.constant 0 : index
    %72 = vector.load %arg34[%c0_34, %c0_35] : memref<6x64xf32, #tpu.memory_space<vmem>>, vector<6x64xf32>
    %c0_36 = arith.constant 0 : index
    %c0_37 = arith.constant 0 : index
    %73 = vector.load %arg2[%c0_36, %c0_37] : memref<6x6xf32, #tpu.memory_space<vmem>>, vector<6x6xf32>
    %c0_38 = arith.constant 0 : index
    %c0_39 = arith.constant 0 : index
    %c0_40 = arith.constant 0 : index
    %74 = vector.load %arg13[%c0_38, %c0_39, %c0_40] : memref<1x1x64xf32, #tpu.memory_space<vmem>>, vector<1x1x64xf32>
    %75 = vector.shape_cast %74 : vector<1x1x64xf32> to vector<1x64xf32>
    %76 = arith.mulf %72, %72 : vector<6x64xf32>
    %cst_41 = arith.constant dense<0.000000e+00> : vector<6xf32>
    %77 = vector.multi_reduction <add>, %76, %cst_41 [1] : vector<6x64xf32> to vector<6xf32>
    %78 = vector.shape_cast %77 : vector<6xf32> to vector<6x1xf32>
    %cst_42 = arith.constant 6.400000e+01 : f32
    %79 = vector.broadcast %cst_42 : f32 to vector<6x1xf32>
    %80 = arith.divf %78, %79 : vector<6x1xf32>
    %cst_43 = arith.constant 9.99999997E-7 : f32
    %81 = vector.broadcast %cst_43 : f32 to vector<6x1xf32>
    %82 = arith.addf %80, %81 : vector<6x1xf32>
    %83 = math.rsqrt %82 : vector<6x1xf32>
    %84 = vector.broadcast %83 : vector<6x1xf32> to vector<6x64xf32>
    %85 = arith.mulf %72, %84 : vector<6x64xf32>
    %86 = vector.broadcast %75 : vector<1x64xf32> to vector<6x64xf32>
    %87 = arith.mulf %85, %86 : vector<6x64xf32>
    %88 = arith.truncf %87 : vector<6x64xf32> to vector<6x64xbf16>
    %c0_44 = arith.constant 0 : index
    %c0_45 = arith.constant 0 : index
    %c0_46 = arith.constant 0 : index
    %89 = vector.load %arg14[%c0_44, %c0_45, %c0_46] : memref<1x64x192xbf16, #tpu.memory_space<vmem>>, vector<1x64x192xbf16>
    %90 = vector.shape_cast %89 : vector<1x64x192xbf16> to vector<64x192xbf16>
    %cst_47 = arith.constant dense<0.000000e+00> : vector<6x192xf32>
    %91 = tpu.matmul %88, %90, %cst_47 {dimension_numbers = #tpu.dot_dimension_numbers<[1], [0], [0], [1], [0, 0, 1, 1], [], []>} : vector<6x64xbf16>, vector<64x192xbf16>, vector<6x192xf32> -> vector<6x192xf32>
    %92 = vector.extract_strided_slice %91 {offsets = [0, 0], sizes = [6, 64], strides = [1, 1]} : vector<6x192xf32> to vector<6x64xf32>
    %cst_48 = arith.constant 0.176776692 : f32
    %93 = vector.broadcast %cst_48 : f32 to vector<6x64xf32>
    %94 = arith.mulf %92, %93 : vector<6x64xf32>
    %95 = arith.truncf %94 : vector<6x64xf32> to vector<6x64xbf16>
    %96 = vector.extract_strided_slice %91 {offsets = [0, 64], sizes = [6, 64], strides = [1, 1]} : vector<6x192xf32> to vector<6x64xf32>
    %97 = arith.truncf %96 : vector<6x64xf32> to vector<6x64xbf16>
    %98 = vector.extract_strided_slice %91 {offsets = [0, 128], sizes = [6, 64], strides = [1, 1]} : vector<6x192xf32> to vector<6x64xf32>
    %99 = arith.truncf %98 : vector<6x64xf32> to vector<6x64xbf16>
    %100 = vector.extract_strided_slice %95 {offsets = [0, 0], sizes = [6, 32], strides = [1, 1]} : vector<6x64xbf16> to vector<6x32xbf16>
    %101 = vector.extract_strided_slice %97 {offsets = [0, 0], sizes = [6, 32], strides = [1, 1]} : vector<6x64xbf16> to vector<6x32xbf16>
    %cst_49 = arith.constant dense<0.000000e+00> : vector<6x6xf32>
    %102 = tpu.matmul %100, %101, %cst_49 {dimension_numbers = #tpu.dot_dimension_numbers<[1], [1], [0], [0], [0, 0, 1, 0], [], []>} : vector<6x32xbf16>, vector<6x32xbf16>, vector<6x6xf32> -> vector<6x6xf32>
    %103 = arith.addf %102, %73 : vector<6x6xf32>
    %cst_50 = arith.constant dense<0xFF800000> : vector<6xf32>
    %104 = vector.multi_reduction <maximumf>, %103, %cst_50 [1] : vector<6x6xf32> to vector<6xf32>
    %105 = vector.shape_cast %104 : vector<6xf32> to vector<6x1xf32>
    %106 = vector.broadcast %105 : vector<6x1xf32> to vector<6x6xf32>
    %107 = arith.subf %103, %106 : vector<6x6xf32>
    %108 = math.exp %107 : vector<6x6xf32>
    %cst_51 = arith.constant dense<0.000000e+00> : vector<6xf32>
    %109 = vector.multi_reduction <add>, %108, %cst_51 [1] : vector<6x6xf32> to vector<6xf32>
    %110 = vector.shape_cast %109 : vector<6xf32> to vector<6x1xf32>
    %111 = tpu.reciprocal %110 {approx = true} : vector<6x1xf32> -> vector<6x1xf32>
    %112 = vector.broadcast %111 : vector<6x1xf32> to vector<6x6xf32>
    %113 = arith.mulf %108, %112 : vector<6x6xf32>
    %114 = arith.truncf %113 : vector<6x6xf32> to vector<6x6xbf16>
    %115 = vector.extract_strided_slice %99 {offsets = [0, 0], sizes = [6, 32], strides = [1, 1]} : vector<6x64xbf16> to vector<6x32xbf16>
    %cst_52 = arith.constant dense<0.000000e+00> : vector<6x32xf32>
    %116 = tpu.matmul %114, %115, %cst_52 {dimension_numbers = #tpu.dot_dimension_numbers<[1], [0], [0], [1], [0, 0, 1, 1], [], []>} : vector<6x6xbf16>, vector<6x32xbf16>, vector<6x32xf32> -> vector<6x32xf32>
    %117 = arith.truncf %116 : vector<6x32xf32> to vector<6x32xbf16>
    %c0_53 = arith.constant 0 : index
    %c0_54 = arith.constant 0 : index
    %c0_55 = arith.constant 0 : index
    %118 = vector.load %arg15[%c0_53, %c0_54, %c0_55] : memref<1x64x64xbf16, #tpu.memory_space<vmem>>, vector<1x32x64xbf16>
    %119 = vector.shape_cast %118 : vector<1x32x64xbf16> to vector<32x64xbf16>
    %cst_56 = arith.constant dense<0.000000e+00> : vector<6x64xf32>
    %120 = tpu.matmul %117, %119, %cst_56 {dimension_numbers = #tpu.dot_dimension_numbers<[1], [0], [0], [1], [0, 0, 1, 1], [], []>} : vector<6x32xbf16>, vector<32x64xbf16>, vector<6x64xf32> -> vector<6x64xf32>
    %121 = vector.extract_strided_slice %95 {offsets = [0, 32], sizes = [6, 32], strides = [1, 1]} : vector<6x64xbf16> to vector<6x32xbf16>
    %122 = vector.extract_strided_slice %97 {offsets = [0, 32], sizes = [6, 32], strides = [1, 1]} : vector<6x64xbf16> to vector<6x32xbf16>
    %cst_57 = arith.constant dense<0.000000e+00> : vector<6x6xf32>
    %123 = tpu.matmul %121, %122, %cst_57 {dimension_numbers = #tpu.dot_dimension_numbers<[1], [1], [0], [0], [0, 0, 1, 0], [], []>} : vector<6x32xbf16>, vector<6x32xbf16>, vector<6x6xf32> -> vector<6x6xf32>
    %124 = arith.addf %123, %73 : vector<6x6xf32>
    %cst_58 = arith.constant dense<0xFF800000> : vector<6xf32>
    %125 = vector.multi_reduction <maximumf>, %124, %cst_58 [1] : vector<6x6xf32> to vector<6xf32>
    %126 = vector.shape_cast %125 : vector<6xf32> to vector<6x1xf32>
    %127 = vector.broadcast %126 : vector<6x1xf32> to vector<6x6xf32>
    %128 = arith.subf %124, %127 : vector<6x6xf32>
    %129 = math.exp %128 : vector<6x6xf32>
    %cst_59 = arith.constant dense<0.000000e+00> : vector<6xf32>
    %130 = vector.multi_reduction <add>, %129, %cst_59 [1] : vector<6x6xf32> to vector<6xf32>
    %131 = vector.shape_cast %130 : vector<6xf32> to vector<6x1xf32>
    %132 = tpu.reciprocal %131 {approx = true} : vector<6x1xf32> -> vector<6x1xf32>
    %133 = vector.broadcast %132 : vector<6x1xf32> to vector<6x6xf32>
    %134 = arith.mulf %129, %133 : vector<6x6xf32>
    %135 = arith.truncf %134 : vector<6x6xf32> to vector<6x6xbf16>
    %136 = vector.extract_strided_slice %99 {offsets = [0, 32], sizes = [6, 32], strides = [1, 1]} : vector<6x64xbf16> to vector<6x32xbf16>
    %cst_60 = arith.constant dense<0.000000e+00> : vector<6x32xf32>
    %137 = tpu.matmul %135, %136, %cst_60 {dimension_numbers = #tpu.dot_dimension_numbers<[1], [0], [0], [1], [0, 0, 1, 1], [], []>} : vector<6x6xbf16>, vector<6x32xbf16>, vector<6x32xf32> -> vector<6x32xf32>
    %138 = arith.truncf %137 : vector<6x32xf32> to vector<6x32xbf16>
    %c0_61 = arith.constant 0 : index
    %c32 = arith.constant 32 : index
    %c0_62 = arith.constant 0 : index
    %139 = vector.load %arg15[%c0_61, %c32, %c0_62] : memref<1x64x64xbf16, #tpu.memory_space<vmem>>, vector<1x32x64xbf16>
    %140 = vector.shape_cast %139 : vector<1x32x64xbf16> to vector<32x64xbf16>
    %cst_63 = arith.constant dense<0.000000e+00> : vector<6x64xf32>
    %141 = tpu.matmul %138, %140, %cst_63 {dimension_numbers = #tpu.dot_dimension_numbers<[1], [0], [0], [1], [0, 0, 1, 1], [], []>} : vector<6x32xbf16>, vector<32x64xbf16>, vector<6x64xf32> -> vector<6x64xf32>
    %142 = arith.addf %120, %141 : vector<6x64xf32>
    %143 = arith.addf %72, %142 : vector<6x64xf32>
    %c0_64 = arith.constant 0 : index
    %c0_65 = arith.constant 0 : index
    %c0_66 = arith.constant 0 : index
    %144 = vector.load %arg16[%c0_64, %c0_65, %c0_66] : memref<1x1x64xf32, #tpu.memory_space<vmem>>, vector<1x1x64xf32>
    %145 = vector.shape_cast %144 : vector<1x1x64xf32> to vector<1x64xf32>
    %146 = arith.mulf %143, %143 : vector<6x64xf32>
    %cst_67 = arith.constant dense<0.000000e+00> : vector<6xf32>
    %147 = vector.multi_reduction <add>, %146, %cst_67 [1] : vector<6x64xf32> to vector<6xf32>
    %148 = vector.shape_cast %147 : vector<6xf32> to vector<6x1xf32>
    %cst_68 = arith.constant 6.400000e+01 : f32
    %149 = vector.broadcast %cst_68 : f32 to vector<6x1xf32>
    %150 = arith.divf %148, %149 : vector<6x1xf32>
    %cst_69 = arith.constant 9.99999997E-7 : f32
    %151 = vector.broadcast %cst_69 : f32 to vector<6x1xf32>
    %152 = arith.addf %150, %151 : vector<6x1xf32>
    %153 = math.rsqrt %152 : vector<6x1xf32>
    %154 = vector.broadcast %153 : vector<6x1xf32> to vector<6x64xf32>
    %155 = arith.mulf %143, %154 : vector<6x64xf32>
    %156 = vector.broadcast %145 : vector<1x64xf32> to vector<6x64xf32>
    %157 = arith.mulf %155, %156 : vector<6x64xf32>
    %158 = arith.truncf %157 : vector<6x64xf32> to vector<6x64xbf16>
    %c0_70 = arith.constant 0 : index
    %c0_71 = arith.constant 0 : index
    %c0_72 = arith.constant 0 : index
    %159 = vector.load %arg17[%c0_70, %c0_71, %c0_72] : memref<1x64x128xbf16, #tpu.memory_space<vmem>>, vector<1x64x128xbf16>
    %160 = vector.shape_cast %159 : vector<1x64x128xbf16> to vector<64x128xbf16>
    %cst_73 = arith.constant dense<0.000000e+00> : vector<6x128xf32>
    %161 = tpu.matmul %158, %160, %cst_73 {dimension_numbers = #tpu.dot_dimension_numbers<[1], [0], [0], [1], [0, 0, 1, 1], [], []>} : vector<6x64xbf16>, vector<64x128xbf16>, vector<6x128xf32> -> vector<6x128xf32>
    %c0_74 = arith.constant 0 : index
    %c0_75 = arith.constant 0 : index
    %c0_76 = arith.constant 0 : index
    %162 = vector.load %arg18[%c0_74, %c0_75, %c0_76] : memref<1x1x128xf32, #tpu.memory_space<vmem>>, vector<1x1x128xf32>
    %163 = vector.shape_cast %162 : vector<1x1x128xf32> to vector<1x128xf32>
    %164 = vector.broadcast %163 : vector<1x128xf32> to vector<6x128xf32>
    %165 = arith.addf %161, %164 : vector<6x128xf32>
    %166 = arith.mulf %165, %165 : vector<6x128xf32>
    %167 = arith.mulf %165, %166 : vector<6x128xf32>
    %cst_77 = arith.constant 4.471500e-02 : f32
    %168 = vector.broadcast %cst_77 : f32 to vector<6x128xf32>
    %169 = arith.mulf %168, %167 : vector<6x128xf32>
    %170 = arith.addf %165, %169 : vector<6x128xf32>
    %cst_78 = arith.constant 0.797884583 : f32
    %171 = vector.broadcast %cst_78 : f32 to vector<6x128xf32>
    %172 = arith.mulf %171, %170 : vector<6x128xf32>
    %173 = math.tanh %172 : vector<6x128xf32>
    %cst_79 = arith.constant 1.000000e+00 : f32
    %174 = vector.broadcast %cst_79 : f32 to vector<6x128xf32>
    %175 = arith.addf %174, %173 : vector<6x128xf32>
    %cst_80 = arith.constant 5.000000e-01 : f32
    %176 = vector.broadcast %cst_80 : f32 to vector<6x128xf32>
    %177 = arith.mulf %176, %175 : vector<6x128xf32>
    %178 = arith.mulf %165, %177 : vector<6x128xf32>
    %179 = arith.truncf %178 : vector<6x128xf32> to vector<6x128xbf16>
    %c0_81 = arith.constant 0 : index
    %c0_82 = arith.constant 0 : index
    %c0_83 = arith.constant 0 : index
    %180 = vector.load %arg19[%c0_81, %c0_82, %c0_83] : memref<1x128x64xbf16, #tpu.memory_space<vmem>>, vector<1x128x64xbf16>
    %181 = vector.shape_cast %180 : vector<1x128x64xbf16> to vector<128x64xbf16>
    %cst_84 = arith.constant dense<0.000000e+00> : vector<6x64xf32>
    %182 = tpu.matmul %179, %181, %cst_84 {dimension_numbers = #tpu.dot_dimension_numbers<[1], [0], [0], [1], [0, 0, 1, 1], [], []>} : vector<6x128xbf16>, vector<128x64xbf16>, vector<6x64xf32> -> vector<6x64xf32>
    %183 = arith.addf %143, %182 : vector<6x64xf32>
    %c0_85 = arith.constant 0 : index
    %c0_86 = arith.constant 0 : index
    %c0_87 = arith.constant 0 : index
    %184 = vector.load %arg20[%c0_85, %c0_86, %c0_87] : memref<1x1x64xf32, #tpu.memory_space<vmem>>, vector<1x1x64xf32>
    %185 = vector.shape_cast %184 : vector<1x1x64xf32> to vector<1x64xf32>
    %186 = vector.broadcast %185 : vector<1x64xf32> to vector<6x64xf32>
    %187 = arith.addf %183, %186 : vector<6x64xf32>
    %c0_88 = arith.constant 0 : index
    %c0_89 = arith.constant 0 : index
    %c0_90 = arith.constant 0 : index
    %188 = vector.load %arg21[%c0_88, %c0_89, %c0_90] : memref<1x1x64xf32, #tpu.memory_space<vmem>>, vector<1x1x64xf32>
    %189 = vector.shape_cast %188 : vector<1x1x64xf32> to vector<1x64xf32>
    %190 = arith.mulf %187, %187 : vector<6x64xf32>
    %cst_91 = arith.constant dense<0.000000e+00> : vector<6xf32>
    %191 = vector.multi_reduction <add>, %190, %cst_91 [1] : vector<6x64xf32> to vector<6xf32>
    %192 = vector.shape_cast %191 : vector<6xf32> to vector<6x1xf32>
    %cst_92 = arith.constant 6.400000e+01 : f32
    %193 = vector.broadcast %cst_92 : f32 to vector<6x1xf32>
    %194 = arith.divf %192, %193 : vector<6x1xf32>
    %cst_93 = arith.constant 9.99999997E-7 : f32
    %195 = vector.broadcast %cst_93 : f32 to vector<6x1xf32>
    %196 = arith.addf %194, %195 : vector<6x1xf32>
    %197 = math.rsqrt %196 : vector<6x1xf32>
    %198 = vector.broadcast %197 : vector<6x1xf32> to vector<6x64xf32>
    %199 = arith.mulf %187, %198 : vector<6x64xf32>
    %200 = vector.broadcast %189 : vector<1x64xf32> to vector<6x64xf32>
    %201 = arith.mulf %199, %200 : vector<6x64xf32>
    %202 = vector.extract_strided_slice %201 {offsets = [0, 0], sizes = [4, 64], strides = [1, 1]} : vector<6x64xf32> to vector<4x64xf32>
    %203 = arith.truncf %202 : vector<4x64xf32> to vector<4x64xbf16>
    %c0_94 = arith.constant 0 : index
    %c0_95 = arith.constant 0 : index
    %204 = vector.load %arg22[%c0_94, %c0_95] : memref<64x256xbf16, #tpu.memory_space<vmem>>, vector<64x256xbf16>
    %cst_96 = arith.constant dense<0.000000e+00> : vector<4x256xf32>
    %205 = tpu.matmul %203, %204, %cst_96 {dimension_numbers = #tpu.dot_dimension_numbers<[1], [0], [0], [1], [0, 0, 1, 1], [], []>} : vector<4x64xbf16>, vector<64x256xbf16>, vector<4x256xf32> -> vector<4x256xf32>
    %c0_97 = arith.constant 0 : index
    %c0_98 = arith.constant 0 : index
    %206 = vector.load %arg23[%c0_97, %c0_98] : memref<1x256xf32, #tpu.memory_space<vmem>>, vector<1x256xf32>
    %207 = vector.broadcast %206 : vector<1x256xf32> to vector<4x256xf32>
    %208 = arith.addf %205, %207 : vector<4x256xf32>
    %209 = vector.extract_strided_slice %10 {offsets = [0, 0], sizes = [4, 32], strides = [1, 1]} : vector<32x32xf32> to vector<4x32xf32>
    %210 = vector.extract_strided_slice %208 {offsets = [0, 0], sizes = [4, 32], strides = [1, 1]} : vector<4x256xf32> to vector<4x32xf32>
    %211 = arith.addf %209, %210 : vector<4x32xf32>
    %c0_99 = arith.constant 0 : index
    %c0_100 = arith.constant 0 : index
    %212 = vector.load %arg5[%c0_99, %c0_100] : memref<8x32xf32, #tpu.memory_space<vmem>>, vector<1x32xf32>
    %213 = vector.broadcast %212 : vector<1x32xf32> to vector<4x32xf32>
    %214 = arith.addf %211, %213 : vector<4x32xf32>
    %c0_101 = arith.constant 0 : index
    %c0_102 = arith.constant 0 : index
    %215 = vector.load %arg35[%c0_101, %c0_102] : memref<36x32xf32, #tpu.memory_space<vmem>>, vector<4x32xf32>
    tpu.vector_store %arg35[%c0_101, %c0_102], %214 {strides = array<i32>} : memref<36x32xf32, #tpu.memory_space<vmem>>, vector<4x32xf32>,
    %216 = vector.extract_strided_slice %10 {offsets = [4, 0], sizes = [4, 32], strides = [1, 1]} : vector<32x32xf32> to vector<4x32xf32>
    %217 = vector.extract_strided_slice %208 {offsets = [0, 32], sizes = [4, 32], strides = [1, 1]} : vector<4x256xf32> to vector<4x32xf32>
    %218 = arith.addf %216, %217 : vector<4x32xf32>
    %c1 = arith.constant 1 : index
    %c0_103 = arith.constant 0 : index
    %219 = vector.load %arg5[%c1, %c0_103] : memref<8x32xf32, #tpu.memory_space<vmem>>, vector<1x32xf32>
    %220 = vector.broadcast %219 : vector<1x32xf32> to vector<4x32xf32>
    %221 = arith.addf %218, %220 : vector<4x32xf32>
    %c4 = arith.constant 4 : index
    %c0_104 = arith.constant 0 : index
    %222 = vector.load %arg35[%c4, %c0_104] : memref<36x32xf32, #tpu.memory_space<vmem>>, vector<4x32xf32>
    tpu.vector_store %arg35[%c4, %c0_104], %221 {strides = array<i32>} : memref<36x32xf32, #tpu.memory_space<vmem>>, vector<4x32xf32>,
    %223 = vector.extract_strided_slice %10 {offsets = [8, 0], sizes = [4, 32], strides = [1, 1]} : vector<32x32xf32> to vector<4x32xf32>
    %224 = vector.extract_strided_slice %208 {offsets = [0, 64], sizes = [4, 32], strides = [1, 1]} : vector<4x256xf32> to vector<4x32xf32>
    %225 = arith.addf %223, %224 : vector<4x32xf32>
    %c2_105 = arith.constant 2 : index
    %c0_106 = arith.constant 0 : index
    %226 = vector.load %arg5[%c2_105, %c0_106] : memref<8x32xf32, #tpu.memory_space<vmem>>, vector<1x32xf32>
    %227 = vector.broadcast %226 : vector<1x32xf32> to vector<4x32xf32>
    %228 = arith.addf %225, %227 : vector<4x32xf32>
    %c8 = arith.constant 8 : index
    %c0_107 = arith.constant 0 : index
    %229 = vector.load %arg35[%c8, %c0_107] : memref<36x32xf32, #tpu.memory_space<vmem>>, vector<4x32xf32>
    tpu.vector_store %arg35[%c8, %c0_107], %228 {strides = array<i32>} : memref<36x32xf32, #tpu.memory_space<vmem>>, vector<4x32xf32>,
    %230 = vector.extract_strided_slice %10 {offsets = [12, 0], sizes = [4, 32], strides = [1, 1]} : vector<32x32xf32> to vector<4x32xf32>
    %231 = vector.extract_strided_slice %208 {offsets = [0, 96], sizes = [4, 32], strides = [1, 1]} : vector<4x256xf32> to vector<4x32xf32>
    %232 = arith.addf %230, %231 : vector<4x32xf32>
    %c3 = arith.constant 3 : index
    %c0_108 = arith.constant 0 : index
    %233 = vector.load %arg5[%c3, %c0_108] : memref<8x32xf32, #tpu.memory_space<vmem>>, vector<1x32xf32>
    %234 = vector.broadcast %233 : vector<1x32xf32> to vector<4x32xf32>
    %235 = arith.addf %232, %234 : vector<4x32xf32>
    %c12 = arith.constant 12 : index
    %c0_109 = arith.constant 0 : index
    %236 = vector.load %arg35[%c12, %c0_109] : memref<36x32xf32, #tpu.memory_space<vmem>>, vector<4x32xf32>
    tpu.vector_store %arg35[%c12, %c0_109], %235 {strides = array<i32>} : memref<36x32xf32, #tpu.memory_space<vmem>>, vector<4x32xf32>,
    %237 = vector.extract_strided_slice %10 {offsets = [16, 0], sizes = [4, 32], strides = [1, 1]} : vector<32x32xf32> to vector<4x32xf32>
    %238 = vector.extract_strided_slice %208 {offsets = [0, 128], sizes = [4, 32], strides = [1, 1]} : vector<4x256xf32> to vector<4x32xf32>
    %239 = arith.addf %237, %238 : vector<4x32xf32>
    %c4_110 = arith.constant 4 : index
    %c0_111 = arith.constant 0 : index
    %240 = vector.load %arg5[%c4_110, %c0_111] : memref<8x32xf32, #tpu.memory_space<vmem>>, vector<1x32xf32>
    %241 = vector.broadcast %240 : vector<1x32xf32> to vector<4x32xf32>
    %242 = arith.addf %239, %241 : vector<4x32xf32>
    %c16 = arith.constant 16 : index
    %c0_112 = arith.constant 0 : index
    %243 = vector.load %arg35[%c16, %c0_112] : memref<36x32xf32, #tpu.memory_space<vmem>>, vector<4x32xf32>
    tpu.vector_store %arg35[%c16, %c0_112], %242 {strides = array<i32>} : memref<36x32xf32, #tpu.memory_space<vmem>>, vector<4x32xf32>,
    %244 = vector.extract_strided_slice %10 {offsets = [20, 0], sizes = [4, 32], strides = [1, 1]} : vector<32x32xf32> to vector<4x32xf32>
    %245 = vector.extract_strided_slice %208 {offsets = [0, 160], sizes = [4, 32], strides = [1, 1]} : vector<4x256xf32> to vector<4x32xf32>
    %246 = arith.addf %244, %245 : vector<4x32xf32>
    %c5 = arith.constant 5 : index
    %c0_113 = arith.constant 0 : index
    %247 = vector.load %arg5[%c5, %c0_113] : memref<8x32xf32, #tpu.memory_space<vmem>>, vector<1x32xf32>
    %248 = vector.broadcast %247 : vector<1x32xf32> to vector<4x32xf32>
    %249 = arith.addf %246, %248 : vector<4x32xf32>
    %c20 = arith.constant 20 : index
    %c0_114 = arith.constant 0 : index
    %250 = vector.load %arg35[%c20, %c0_114] : memref<36x32xf32, #tpu.memory_space<vmem>>, vector<4x32xf32>
    tpu.vector_store %arg35[%c20, %c0_114], %249 {strides = array<i32>} : memref<36x32xf32, #tpu.memory_space<vmem>>, vector<4x32xf32>,
    %251 = vector.extract_strided_slice %10 {offsets = [24, 0], sizes = [4, 32], strides = [1, 1]} : vector<32x32xf32> to vector<4x32xf32>
    %252 = vector.extract_strided_slice %208 {offsets = [0, 192], sizes = [4, 32], strides = [1, 1]} : vector<4x256xf32> to vector<4x32xf32>
    %253 = arith.addf %251, %252 : vector<4x32xf32>
    %c6 = arith.constant 6 : index
    %c0_115 = arith.constant 0 : index
    %254 = vector.load %arg5[%c6, %c0_115] : memref<8x32xf32, #tpu.memory_space<vmem>>, vector<1x32xf32>
    %255 = vector.broadcast %254 : vector<1x32xf32> to vector<4x32xf32>
    %256 = arith.addf %253, %255 : vector<4x32xf32>
    %c24 = arith.constant 24 : index
    %c0_116 = arith.constant 0 : index
    %257 = vector.load %arg35[%c24, %c0_116] : memref<36x32xf32, #tpu.memory_space<vmem>>, vector<4x32xf32>
    tpu.vector_store %arg35[%c24, %c0_116], %256 {strides = array<i32>} : memref<36x32xf32, #tpu.memory_space<vmem>>, vector<4x32xf32>,
    %258 = vector.extract_strided_slice %10 {offsets = [28, 0], sizes = [4, 32], strides = [1, 1]} : vector<32x32xf32> to vector<4x32xf32>
    %259 = vector.extract_strided_slice %208 {offsets = [0, 224], sizes = [4, 32], strides = [1, 1]} : vector<4x256xf32> to vector<4x32xf32>
    %260 = arith.addf %258, %259 : vector<4x32xf32>
    %c7 = arith.constant 7 : index
    %c0_117 = arith.constant 0 : index
    %261 = vector.load %arg5[%c7, %c0_117] : memref<8x32xf32, #tpu.memory_space<vmem>>, vector<1x32xf32>
    %262 = vector.broadcast %261 : vector<1x32xf32> to vector<4x32xf32>
    %263 = arith.addf %260, %262 : vector<4x32xf32>
    %c28 = arith.constant 28 : index
    %c0_118 = arith.constant 0 : index
    %264 = vector.load %arg35[%c28, %c0_118] : memref<36x32xf32, #tpu.memory_space<vmem>>, vector<4x32xf32>
    tpu.vector_store %arg35[%c28, %c0_118], %263 {strides = array<i32>} : memref<36x32xf32, #tpu.memory_space<vmem>>, vector<4x32xf32>,
    %c0_119 = arith.constant 0 : index
    %c0_120 = arith.constant 0 : index
    %265 = vector.load %arg12[%c0_119, %c0_120] : memref<1x32xf32, #tpu.memory_space<vmem>>, vector<1x32xf32>
    %266 = vector.shape_cast %265 : vector<1x32xf32> to vector<1x32xf32>
    %267 = vector.broadcast %266 : vector<1x32xf32> to vector<4x32xf32>
    %c32_121 = arith.constant 32 : index
    %c0_122 = arith.constant 0 : index
    %268 = vector.load %arg35[%c32_121, %c0_122] : memref<36x32xf32, #tpu.memory_space<vmem>>, vector<4x32xf32>
    tpu.vector_store %arg35[%c32_121, %c0_122], %267 {strides = array<i32>} : memref<36x32xf32, #tpu.memory_space<vmem>>, vector<4x32xf32>,
    %c0_123 = arith.constant 0 : index
    %c0_124 = arith.constant 0 : index
    %269 = vector.load %arg35[%c0_123, %c0_124] : memref<36x32xf32, #tpu.memory_space<vmem>>, vector<36x32xf32>
    %c0_125 = arith.constant 0 : index
    %c0_126 = arith.constant 0 : index
    %270 = vector.load %arg3[%c0_125, %c0_126] : memref<36x36xf32, #tpu.memory_space<vmem>>, vector<36x36xf32>
    %c0_127 = arith.constant 0 : index
    %c0_128 = arith.constant 0 : index
    %c0_129 = arith.constant 0 : index
    %271 = vector.load %arg24[%c0_127, %c0_128, %c0_129] : memref<1x1x32xf32, #tpu.memory_space<vmem>>, vector<1x1x32xf32>
    %272 = vector.shape_cast %271 : vector<1x1x32xf32> to vector<1x32xf32>
    %273 = arith.mulf %269, %269 : vector<36x32xf32>
    %cst_130 = arith.constant dense<0.000000e+00> : vector<36xf32>
    %274 = vector.multi_reduction <add>, %273, %cst_130 [1] : vector<36x32xf32> to vector<36xf32>
    %275 = vector.shape_cast %274 : vector<36xf32> to vector<36x1xf32>
    %cst_131 = arith.constant 3.200000e+01 : f32
    %276 = vector.broadcast %cst_131 : f32 to vector<36x1xf32>
    %277 = arith.divf %275, %276 : vector<36x1xf32>
    %cst_132 = arith.constant 9.99999997E-7 : f32
    %278 = vector.broadcast %cst_132 : f32 to vector<36x1xf32>
    %279 = arith.addf %277, %278 : vector<36x1xf32>
    %280 = math.rsqrt %279 : vector<36x1xf32>
    %281 = vector.broadcast %280 : vector<36x1xf32> to vector<36x32xf32>
    %282 = arith.mulf %269, %281 : vector<36x32xf32>
    %283 = vector.broadcast %272 : vector<1x32xf32> to vector<36x32xf32>
    %284 = arith.mulf %282, %283 : vector<36x32xf32>
    %285 = arith.truncf %284 : vector<36x32xf32> to vector<36x32xbf16>
    %c0_133 = arith.constant 0 : index
    %c0_134 = arith.constant 0 : index
    %c0_135 = arith.constant 0 : index
    %286 = vector.load %arg25[%c0_133, %c0_134, %c0_135] : memref<1x32x96xbf16, #tpu.memory_space<vmem>>, vector<1x32x96xbf16>
    %287 = vector.shape_cast %286 : vector<1x32x96xbf16> to vector<32x96xbf16>
    %cst_136 = arith.constant dense<0.000000e+00> : vector<36x96xf32>
    %288 = tpu.matmul %285, %287, %cst_136 {dimension_numbers = #tpu.dot_dimension_numbers<[1], [0], [0], [1], [0, 0, 1, 1], [], []>} : vector<36x32xbf16>, vector<32x96xbf16>, vector<36x96xf32> -> vector<36x96xf32>
    %289 = vector.extract_strided_slice %288 {offsets = [0, 0], sizes = [36, 32], strides = [1, 1]} : vector<36x96xf32> to vector<36x32xf32>
    %cst_137 = arith.constant 2.500000e-01 : f32
    %290 = vector.broadcast %cst_137 : f32 to vector<36x32xf32>
    %291 = arith.mulf %289, %290 : vector<36x32xf32>
    %292 = arith.truncf %291 : vector<36x32xf32> to vector<36x32xbf16>
    %293 = vector.extract_strided_slice %288 {offsets = [0, 32], sizes = [36, 32], strides = [1, 1]} : vector<36x96xf32> to vector<36x32xf32>
    %294 = arith.truncf %293 : vector<36x32xf32> to vector<36x32xbf16>
    %295 = vector.extract_strided_slice %288 {offsets = [0, 64], sizes = [36, 32], strides = [1, 1]} : vector<36x96xf32> to vector<36x32xf32>
    %296 = arith.truncf %295 : vector<36x32xf32> to vector<36x32xbf16>
    %297 = vector.extract_strided_slice %292 {offsets = [0, 0], sizes = [36, 16], strides = [1, 1]} : vector<36x32xbf16> to vector<36x16xbf16>
    %298 = vector.extract_strided_slice %294 {offsets = [0, 0], sizes = [36, 16], strides = [1, 1]} : vector<36x32xbf16> to vector<36x16xbf16>
    %cst_138 = arith.constant dense<0.000000e+00> : vector<36x36xf32>
    %299 = tpu.matmul %297, %298, %cst_138 {dimension_numbers = #tpu.dot_dimension_numbers<[1], [1], [0], [0], [0, 0, 1, 0], [], []>} : vector<36x16xbf16>, vector<36x16xbf16>, vector<36x36xf32> -> vector<36x36xf32>
    %300 = arith.addf %299, %270 : vector<36x36xf32>
    %cst_139 = arith.constant dense<0xFF800000> : vector<36xf32>
    %301 = vector.multi_reduction <maximumf>, %300, %cst_139 [1] : vector<36x36xf32> to vector<36xf32>
    %302 = vector.shape_cast %301 : vector<36xf32> to vector<36x1xf32>
    %303 = vector.broadcast %302 : vector<36x1xf32> to vector<36x36xf32>
    %304 = arith.subf %300, %303 : vector<36x36xf32>
    %305 = math.exp %304 : vector<36x36xf32>
    %cst_140 = arith.constant dense<0.000000e+00> : vector<36xf32>
    %306 = vector.multi_reduction <add>, %305, %cst_140 [1] : vector<36x36xf32> to vector<36xf32>
    %307 = vector.shape_cast %306 : vector<36xf32> to vector<36x1xf32>
    %308 = tpu.reciprocal %307 {approx = true} : vector<36x1xf32> -> vector<36x1xf32>
    %309 = vector.broadcast %308 : vector<36x1xf32> to vector<36x36xf32>
    %310 = arith.mulf %305, %309 : vector<36x36xf32>
    %311 = arith.truncf %310 : vector<36x36xf32> to vector<36x36xbf16>
    %312 = vector.extract_strided_slice %296 {offsets = [0, 0], sizes = [36, 16], strides = [1, 1]} : vector<36x32xbf16> to vector<36x16xbf16>
    %cst_141 = arith.constant dense<0.000000e+00> : vector<36x16xf32>
    %313 = tpu.matmul %311, %312, %cst_141 {dimension_numbers = #tpu.dot_dimension_numbers<[1], [0], [0], [1], [0, 0, 1, 1], [], []>} : vector<36x36xbf16>, vector<36x16xbf16>, vector<36x16xf32> -> vector<36x16xf32>
    %314 = arith.truncf %313 : vector<36x16xf32> to vector<36x16xbf16>
    %c0_142 = arith.constant 0 : index
    %c0_143 = arith.constant 0 : index
    %c0_144 = arith.constant 0 : index
    %315 = vector.load %arg26[%c0_142, %c0_143, %c0_144] : memref<1x32x32xbf16, #tpu.memory_space<vmem>>, vector<1x16x32xbf16>
    %316 = vector.shape_cast %315 : vector<1x16x32xbf16> to vector<16x32xbf16>
    %cst_145 = arith.constant dense<0.000000e+00> : vector<36x32xf32>
    %317 = tpu.matmul %314, %316, %cst_145 {dimension_numbers = #tpu.dot_dimension_numbers<[1], [0], [0], [1], [0, 0, 1, 1], [], []>} : vector<36x16xbf16>, vector<16x32xbf16>, vector<36x32xf32> -> vector<36x32xf32>
    %318 = vector.extract_strided_slice %292 {offsets = [0, 16], sizes = [36, 16], strides = [1, 1]} : vector<36x32xbf16> to vector<36x16xbf16>
    %319 = vector.extract_strided_slice %294 {offsets = [0, 16], sizes = [36, 16], strides = [1, 1]} : vector<36x32xbf16> to vector<36x16xbf16>
    %cst_146 = arith.constant dense<0.000000e+00> : vector<36x36xf32>
    %320 = tpu.matmul %318, %319, %cst_146 {dimension_numbers = #tpu.dot_dimension_numbers<[1], [1], [0], [0], [0, 0, 1, 0], [], []>} : vector<36x16xbf16>, vector<36x16xbf16>, vector<36x36xf32> -> vector<36x36xf32>
    %321 = arith.addf %320, %270 : vector<36x36xf32>
    %cst_147 = arith.constant dense<0xFF800000> : vector<36xf32>
    %322 = vector.multi_reduction <maximumf>, %321, %cst_147 [1] : vector<36x36xf32> to vector<36xf32>
    %323 = vector.shape_cast %322 : vector<36xf32> to vector<36x1xf32>
    %324 = vector.broadcast %323 : vector<36x1xf32> to vector<36x36xf32>
    %325 = arith.subf %321, %324 : vector<36x36xf32>
    %326 = math.exp %325 : vector<36x36xf32>
    %cst_148 = arith.constant dense<0.000000e+00> : vector<36xf32>
    %327 = vector.multi_reduction <add>, %326, %cst_148 [1] : vector<36x36xf32> to vector<36xf32>
    %328 = vector.shape_cast %327 : vector<36xf32> to vector<36x1xf32>
    %329 = tpu.reciprocal %328 {approx = true} : vector<36x1xf32> -> vector<36x1xf32>
    %330 = vector.broadcast %329 : vector<36x1xf32> to vector<36x36xf32>
    %331 = arith.mulf %326, %330 : vector<36x36xf32>
    %332 = arith.truncf %331 : vector<36x36xf32> to vector<36x36xbf16>
    %333 = vector.extract_strided_slice %296 {offsets = [0, 16], sizes = [36, 16], strides = [1, 1]} : vector<36x32xbf16> to vector<36x16xbf16>
    %cst_149 = arith.constant dense<0.000000e+00> : vector<36x16xf32>
    %334 = tpu.matmul %332, %333, %cst_149 {dimension_numbers = #tpu.dot_dimension_numbers<[1], [0], [0], [1], [0, 0, 1, 1], [], []>} : vector<36x36xbf16>, vector<36x16xbf16>, vector<36x16xf32> -> vector<36x16xf32>
    %335 = arith.truncf %334 : vector<36x16xf32> to vector<36x16xbf16>
    %c0_150 = arith.constant 0 : index
    %c16_151 = arith.constant 16 : index
    %c0_152 = arith.constant 0 : index
    %336 = vector.load %arg26[%c0_150, %c16_151, %c0_152] : memref<1x32x32xbf16, #tpu.memory_space<vmem>>, vector<1x16x32xbf16>
    %337 = vector.shape_cast %336 : vector<1x16x32xbf16> to vector<16x32xbf16>
    %cst_153 = arith.constant dense<0.000000e+00> : vector<36x32xf32>
    %338 = tpu.matmul %335, %337, %cst_153 {dimension_numbers = #tpu.dot_dimension_numbers<[1], [0], [0], [1], [0, 0, 1, 1], [], []>} : vector<36x16xbf16>, vector<16x32xbf16>, vector<36x32xf32> -> vector<36x32xf32>
    %339 = arith.addf %317, %338 : vector<36x32xf32>
    %340 = arith.addf %269, %339 : vector<36x32xf32>
    %c0_154 = arith.constant 0 : index
    %c0_155 = arith.constant 0 : index
    %c0_156 = arith.constant 0 : index
    %341 = vector.load %arg27[%c0_154, %c0_155, %c0_156] : memref<1x1x32xf32, #tpu.memory_space<vmem>>, vector<1x1x32xf32>
    %342 = vector.shape_cast %341 : vector<1x1x32xf32> to vector<1x32xf32>
    %343 = arith.mulf %340, %340 : vector<36x32xf32>
    %cst_157 = arith.constant dense<0.000000e+00> : vector<36xf32>
    %344 = vector.multi_reduction <add>, %343, %cst_157 [1] : vector<36x32xf32> to vector<36xf32>
    %345 = vector.shape_cast %344 : vector<36xf32> to vector<36x1xf32>
    %cst_158 = arith.constant 3.200000e+01 : f32
    %346 = vector.broadcast %cst_158 : f32 to vector<36x1xf32>
    %347 = arith.divf %345, %346 : vector<36x1xf32>
    %cst_159 = arith.constant 9.99999997E-7 : f32
    %348 = vector.broadcast %cst_159 : f32 to vector<36x1xf32>
    %349 = arith.addf %347, %348 : vector<36x1xf32>
    %350 = math.rsqrt %349 : vector<36x1xf32>
    %351 = vector.broadcast %350 : vector<36x1xf32> to vector<36x32xf32>
    %352 = arith.mulf %340, %351 : vector<36x32xf32>
    %353 = vector.broadcast %342 : vector<1x32xf32> to vector<36x32xf32>
    %354 = arith.mulf %352, %353 : vector<36x32xf32>
    %355 = arith.truncf %354 : vector<36x32xf32> to vector<36x32xbf16>
    %c0_160 = arith.constant 0 : index
    %c0_161 = arith.constant 0 : index
    %c0_162 = arith.constant 0 : index
    %356 = vector.load %arg28[%c0_160, %c0_161, %c0_162] : memref<1x32x64xbf16, #tpu.memory_space<vmem>>, vector<1x32x64xbf16>
    %357 = vector.shape_cast %356 : vector<1x32x64xbf16> to vector<32x64xbf16>
    %cst_163 = arith.constant dense<0.000000e+00> : vector<36x64xf32>
    %358 = tpu.matmul %355, %357, %cst_163 {dimension_numbers = #tpu.dot_dimension_numbers<[1], [0], [0], [1], [0, 0, 1, 1], [], []>} : vector<36x32xbf16>, vector<32x64xbf16>, vector<36x64xf32> -> vector<36x64xf32>
    %c0_164 = arith.constant 0 : index
    %c0_165 = arith.constant 0 : index
    %c0_166 = arith.constant 0 : index
    %359 = vector.load %arg29[%c0_164, %c0_165, %c0_166] : memref<1x1x64xf32, #tpu.memory_space<vmem>>, vector<1x1x64xf32>
    %360 = vector.shape_cast %359 : vector<1x1x64xf32> to vector<1x64xf32>
    %361 = vector.broadcast %360 : vector<1x64xf32> to vector<36x64xf32>
    %362 = arith.addf %358, %361 : vector<36x64xf32>
    %363 = arith.mulf %362, %362 : vector<36x64xf32>
    %364 = arith.mulf %362, %363 : vector<36x64xf32>
    %cst_167 = arith.constant 4.471500e-02 : f32
    %365 = vector.broadcast %cst_167 : f32 to vector<36x64xf32>
    %366 = arith.mulf %365, %364 : vector<36x64xf32>
    %367 = arith.addf %362, %366 : vector<36x64xf32>
    %cst_168 = arith.constant 0.797884583 : f32
    %368 = vector.broadcast %cst_168 : f32 to vector<36x64xf32>
    %369 = arith.mulf %368, %367 : vector<36x64xf32>
    %370 = math.tanh %369 : vector<36x64xf32>
    %cst_169 = arith.constant 1.000000e+00 : f32
    %371 = vector.broadcast %cst_169 : f32 to vector<36x64xf32>
    %372 = arith.addf %371, %370 : vector<36x64xf32>
    %cst_170 = arith.constant 5.000000e-01 : f32
    %373 = vector.broadcast %cst_170 : f32 to vector<36x64xf32>
    %374 = arith.mulf %373, %372 : vector<36x64xf32>
    %375 = arith.mulf %362, %374 : vector<36x64xf32>
    %376 = arith.truncf %375 : vector<36x64xf32> to vector<36x64xbf16>
    %c0_171 = arith.constant 0 : index
    %c0_172 = arith.constant 0 : index
    %c0_173 = arith.constant 0 : index
    %377 = vector.load %arg30[%c0_171, %c0_172, %c0_173] : memref<1x64x32xbf16, #tpu.memory_space<vmem>>, vector<1x64x32xbf16>
    %378 = vector.shape_cast %377 : vector<1x64x32xbf16> to vector<64x32xbf16>
    %cst_174 = arith.constant dense<0.000000e+00> : vector<36x32xf32>
    %379 = tpu.matmul %376, %378, %cst_174 {dimension_numbers = #tpu.dot_dimension_numbers<[1], [0], [0], [1], [0, 0, 1, 1], [], []>} : vector<36x64xbf16>, vector<64x32xbf16>, vector<36x32xf32> -> vector<36x32xf32>
    %380 = arith.addf %340, %379 : vector<36x32xf32>
    %c0_175 = arith.constant 0 : index
    %c0_176 = arith.constant 0 : index
    %c0_177 = arith.constant 0 : index
    %381 = vector.load %arg31[%c0_175, %c0_176, %c0_177] : memref<1x1x32xf32, #tpu.memory_space<vmem>>, vector<1x1x32xf32>
    %382 = vector.shape_cast %381 : vector<1x1x32xf32> to vector<1x32xf32>
    %383 = vector.broadcast %382 : vector<1x32xf32> to vector<36x32xf32>
    %384 = arith.addf %380, %383 : vector<36x32xf32>
    %c0_178 = arith.constant 0 : index
    %c0_179 = arith.constant 0 : index
    %c0_180 = arith.constant 0 : index
    %385 = vector.load %arg32[%c0_178, %c0_179, %c0_180] : memref<1x1x32xf32, #tpu.memory_space<vmem>>, vector<1x1x32xf32>
    %386 = vector.shape_cast %385 : vector<1x1x32xf32> to vector<1x32xf32>
    %387 = arith.mulf %384, %384 : vector<36x32xf32>
    %cst_181 = arith.constant dense<0.000000e+00> : vector<36xf32>
    %388 = vector.multi_reduction <add>, %387, %cst_181 [1] : vector<36x32xf32> to vector<36xf32>
    %389 = vector.shape_cast %388 : vector<36xf32> to vector<36x1xf32>
    %cst_182 = arith.constant 3.200000e+01 : f32
    %390 = vector.broadcast %cst_182 : f32 to vector<36x1xf32>
    %391 = arith.divf %389, %390 : vector<36x1xf32>
    %cst_183 = arith.constant 9.99999997E-7 : f32
    %392 = vector.broadcast %cst_183 : f32 to vector<36x1xf32>
    %393 = arith.addf %391, %392 : vector<36x1xf32>
    %394 = math.rsqrt %393 : vector<36x1xf32>
    %395 = vector.broadcast %394 : vector<36x1xf32> to vector<36x32xf32>
    %396 = arith.mulf %384, %395 : vector<36x32xf32>
    %397 = vector.broadcast %386 : vector<1x32xf32> to vector<36x32xf32>
    %398 = arith.mulf %396, %397 : vector<36x32xf32>
    %399 = vector.extract_strided_slice %398 {offsets = [0, 0], sizes = [32, 32], strides = [1, 1]} : vector<36x32xf32> to vector<32x32xf32>
    %c0_184 = arith.constant 0 : index
    %c0_185 = arith.constant 0 : index
    %400 = vector.load %arg33[%c0_184, %c0_185] : memref<32x32xf32, #tpu.memory_space<vmem>>, vector<32x32xf32>
    tpu.vector_store %arg33[%c0_184, %c0_185], %399 {strides = array<i32>} : memref<32x32xf32, #tpu.memory_space<vmem>>, vector<32x32xf32>,
    return
  }
}

</mosaic_0001>

<llo_original>
// kernel: mblm_encoder_forward.1
$region0: #{mblm_encoder_forward.1}
  #allocation0 [shape = 'u32[]', space=smem, size = 0x4, offset = 0x4, fixed_abs, tag = 'smem constant byte address 0x4 - core index']
  #allocation1 [shape = 'u32[72,128]{1,0:T(1,128)}', space=vmem, size = 0x9000, scoped, tag = 'internal scratch']
  #allocation2 [shape = 'f32[6,64]{1,0:T(8,128)}', space=vmem, size = 0x1000, scoped, tag = 'scratch operand']
  #allocation3 [shape = 'f32[36,32]{1,0:T(8,128)}', space=vmem, size = 0x5000, scoped, tag = 'scratch operand']
  %s0 = inlined_call_operand.smem [shape: u32[34], index: -1, kind: input, shape index: {}]
  %s1 = sld [smem:[%s0]]
  %s2 = scalar_lea.smem %s0, 1
  %s3 = sld [smem:[%s2]]
  %s4 = scalar_lea.smem %s0, 2
  %s5 = sld [smem:[%s4]]
  %s6 = scalar_lea.smem %s0, 3
  %s7 = sld [smem:[%s6]]
  %s8 = scalar_lea.smem %s0, 4
  %s9 = sld [smem:[%s8]]
  %s10 = scalar_lea.smem %s0, 5
  %s11 = sld [smem:[%s10]]
  %s12 = scalar_lea.smem %s0, 6
  %s13 = sld [smem:[%s12]]
  %s14 = scalar_lea.smem %s0, 7
  %s15 = sld [smem:[%s14]]
  %s16 = scalar_lea.smem %s0, 8
  %s17 = sld [smem:[%s16]]
  %s18 = scalar_lea.smem %s0, 9
  %s19 = sld [smem:[%s18]]
  %s20 = scalar_lea.smem %s0, 10
  %s21 = sld [smem:[%s20]]
  %s22 = scalar_lea.smem %s0, 11
  %s23 = sld [smem:[%s22]]
  %s24 = scalar_lea.smem %s0, 12
  %s25 = sld [smem:[%s24]]
  %s26 = scalar_lea.smem %s0, 13
  %s27 = sld [smem:[%s26]]
  %s28 = scalar_lea.smem %s0, 14
  %s29 = sld [smem:[%s28]]
  %s30 = scalar_lea.smem %s0, 15
  %s31 = sld [smem:[%s30]]
  %s32 = scalar_lea.smem %s0, 16
  %s33 = sld [smem:[%s32]]
  %s34 = scalar_lea.smem %s0, 17
  %s35 = sld [smem:[%s34]]
  %s36 = scalar_lea.smem %s0, 18
  %s37 = sld [smem:[%s36]]
  %s38 = scalar_lea.smem %s0, 19
  %s39 = sld [smem:[%s38]]
  %s40 = scalar_lea.smem %s0, 20
  %s41 = sld [smem:[%s40]]
  %s42 = scalar_lea.smem %s0, 21
  %s43 = sld [smem:[%s42]]
  %s44 = scalar_lea.smem %s0, 22
  %s45 = sld [smem:[%s44]]
  %s46 = scalar_lea.smem %s0, 23
  %s47 = sld [smem:[%s46]]
  %s48 = scalar_lea.smem %s0, 24
  %s49 = sld [smem:[%s48]]
  %s50 = scalar_lea.smem %s0, 25
  %s51 = sld [smem:[%s50]]
  %s52 = scalar_lea.smem %s0, 26
  %s53 = sld [smem:[%s52]]
  %s54 = scalar_lea.smem %s0, 27
  %s55 = sld [smem:[%s54]]
  %s56 = scalar_lea.smem %s0, 28
  %s57 = sld [smem:[%s56]]
  %s58 = scalar_lea.smem %s0, 29
  %s59 = sld [smem:[%s58]]
  %s60 = scalar_lea.smem %s0, 30
  %s61 = sld [smem:[%s60]]
  %s62 = scalar_lea.smem %s0, 31
  %s63 = sld [smem:[%s62]]
  %s64 = scalar_lea.smem %s0, 32
  %s65 = sld [smem:[%s64]]
  %s66 = scalar_lea.smem %s0, 33
  %s67 = sld [smem:[%s66]]
  %s68 = sld [smem:[#allocation0]]
  $region214: #{mblm_encoder_forward.1} parent=0
    _
  %s70 = ssub.s32 1, %s68
  %s71 = scalar_select 0, %s70, %s68
  $region1: #{mblm_encoder_forward.1} parent=0
    #allocation4 [shape = 'u8[131072]{0}', space=vmem, size = 0x20000, scoped, tag = 'input window, operand 6, single buffered']
    #allocation5 [shape = 's32[1]{0}', space=sflag, size = 0x4, scoped, tag = 'scoped memory for mblm_encoder_forward.1']
    #allocation6 [shape = 'u8[512]{0}', space=vmem, size = 0x400, scoped, tag = 'input window, operand 9, single buffered']
    #allocation7 [shape = 's32[1]{0}', space=sflag, size = 0x4, scoped, tag = 'scoped memory for mblm_encoder_forward.1']
    #allocation8 [shape = 'u8[512]{0}', space=vmem, size = 0x400, scoped, tag = 'input window, operand 10, single buffered']
    #allocation9 [shape = 'u8[512]{0}', space=vmem, size = 0x400, scoped, tag = 'input window, operand 11, single buffered']
    #allocation10 [shape = 's32[1]{0}', space=sflag, size = 0x4, scoped, tag = 'scoped memory for mblm_encoder_forward.1']
    #allocation11 [shape = 'u8[512]{0}', space=vmem, size = 0x400, scoped, tag = 'input window, operand 13, single buffered']
    #allocation12 [shape = 'u8[16384]{0}', space=vmem, size = 0x4000, scoped, tag = 'input window, operand 15, single buffered']
    #allocation13 [shape = 's32[1]{0}', space=sflag, size = 0x4, scoped, tag = 'scoped memory for mblm_encoder_forward.1']
    #allocation14 [shape = 'u8[512]{0}', space=vmem, size = 0x400, scoped, tag = 'input window, operand 16, single buffered']
    #allocation15 [shape = 'u8[16384]{0}', space=vmem, size = 0x4000, scoped, tag = 'input window, operand 17, single buffered']
    #allocation16 [shape = 's32[1]{0}', space=sflag, size = 0x4, scoped, tag = 'scoped memory for mblm_encoder_forward.1']
    #allocation17 [shape = 'u8[512]{0}', space=vmem, size = 0x400, scoped, tag = 'input window, operand 18, single buffered']
    #allocation18 [shape = 'u8[512]{0}', space=vmem, size = 0x400, scoped, tag = 'input window, operand 20, single buffered']
    #allocation19 [shape = 's32[1]{0}', space=sflag, size = 0x4, scoped, tag = 'scoped memory for mblm_encoder_forward.1']
    #allocation20 [shape = 'u8[512]{0}', space=vmem, size = 0x400, scoped, tag = 'input window, operand 21, single buffered']
    #allocation21 [shape = 'u8[512]{0}', space=vmem, size = 0x400, scoped, tag = 'input window, operand 24, single buffered']
    #allocation22 [shape = 's32[1]{0}', space=sflag, size = 0x4, scoped, tag = 'scoped memory for mblm_encoder_forward.1']
    #allocation23 [shape = 'u8[8192]{0}', space=vmem, size = 0x2000, scoped, tag = 'input window, operand 26, single buffered']
    #allocation24 [shape = 'u8[512]{0}', space=vmem, size = 0x400, scoped, tag = 'input window, operand 27, single buffered']
    #allocation25 [shape = 's32[1]{0}', space=sflag, size = 0x4, scoped, tag = 'scoped memory for mblm_encoder_forward.1']
    #allocation26 [shape = 'u8[8192]{0}', space=vmem, size = 0x2000, scoped, tag = 'input window, operand 28, single buffered']
    #allocation27 [shape = 'u8[512]{0}', space=vmem, size = 0x400, scoped, tag = 'input window, operand 29, single buffered']
    #allocation28 [shape = 's32[1]{0}', space=sflag, size = 0x4, scoped, tag = 'scoped memory for mblm_encoder_forward.1']
    #allocation29 [shape = 'u8[512]{0}', space=vmem, size = 0x400, scoped, tag = 'input window, operand 31, single buffered']
    #allocation30 [shape = 'u8[512]{0}', space=vmem, size = 0x400, scoped, tag = 'input window, operand 32, single buffered']
    #allocation31 [shape = 's32[1]{0}', space=sflag, size = 0x4, scoped, tag = 'scoped memory for mblm_encoder_forward.1']
    %72 = vsyncpa [#allocation5], 0
    %73 = vsyncpa [#allocation7], 0
    %74 = vsyncpa [#allocation10], 0
    %75 = vsyncpa [#allocation13], 0
    %76 = vsyncpa [#allocation16], 0
    %77 = vsyncpa [#allocation19], 0
    %78 = vsyncpa [#allocation22], 0
    %79 = vsyncpa [#allocation25], 0
    %80 = vsyncpa [#allocation28], 0
    %81 = vsyncpa [#allocation31], 0
    // Predicated region
    $region2: #{mblm_encoder_forward.1} parent=1 // pred_check
      _
    $region3: #{mblm_encoder_forward.1} parent=1 // pred_check_branch
      %83 = sbr.rel (0) target = $region5
    $region4: #{mblm_encoder_forward.1} parent=1 // pred_region
      _
    $region5: #{mblm_encoder_forward.1} parent=1 // pred_fallthru
      _
    // Predicated region
    $region6: #{mblm_encoder_forward.1} parent=1 // pred_check
      _
    $region7: #{mblm_encoder_forward.1} parent=1 // pred_check_branch
      %85 = sbr.rel (0) target = $region9
    $region8: #{mblm_encoder_forward.1} parent=1 // pred_region
      _
    $region9: #{mblm_encoder_forward.1} parent=1 // pred_fallthru
      _
    // Predicated region
    $region10: #{mblm_encoder_forward.1} parent=1 // pred_check
      _
    $region11: #{mblm_encoder_forward.1} parent=1 // pred_check_branch
      %87 = sbr.rel (0) target = $region13
    $region12: #{mblm_encoder_forward.1} parent=1 // pred_region
      _
    $region13: #{mblm_encoder_forward.1} parent=1 // pred_fallthru
      _
    // Predicated region
    $region14: #{mblm_encoder_forward.1} parent=1 // pred_check
      _
    $region15: #{mblm_encoder_forward.1} parent=1 // pred_check_branch
      %89 = sbr.rel (0) target = $region17
    $region16: #{mblm_encoder_forward.1} parent=1 // pred_region
      _
    $region17: #{mblm_encoder_forward.1} parent=1 // pred_fallthru
      _
    // Predicated region
    $region18: #{mblm_encoder_forward.1} parent=1 // pred_check
      _
    $region19: #{mblm_encoder_forward.1} parent=1 // pred_check_branch
      %91 = sbr.rel (0) target = $region21
    $region20: #{mblm_encoder_forward.1} parent=1 // pred_region
      _
    $region21: #{mblm_encoder_forward.1} parent=1 // pred_fallthru
      _
    // Predicated region
    $region22: #{mblm_encoder_forward.1} parent=1 // pred_check
      _
    $region23: #{mblm_encoder_forward.1} parent=1 // pred_check_branch
      %93 = sbr.rel (0) target = $region25
    $region24: #{mblm_encoder_forward.1} parent=1 // pred_region
      _
    $region25: #{mblm_encoder_forward.1} parent=1 // pred_fallthru
      _
    // Predicated region
    $region26: #{mblm_encoder_forward.1} parent=1 // pred_check
      _
    $region27: #{mblm_encoder_forward.1} parent=1 // pred_check_branch
      %95 = sbr.rel (0) target = $region29
    $region28: #{mblm_encoder_forward.1} parent=1 // pred_region
      %97 = vsyncadd [#allocation5], 0
      %s98 = sshll.u32 %s13, 4
      %s99 = int_to_ptr.hbm [resolvable:$true] %s98
      %s100 = sshll.u32 [#allocation4], 4
      %s101 = int_to_ptr.vmem [resolvable:$true] %s100
      %106 = dma.hbm_to_vmem [thread:$0]  %s99, 4096, %s101, [#allocation5], 64, 64, 4
    $region29: #{mblm_encoder_forward.1} parent=1 // pred_fallthru
      _
    // Predicated region
    $region30: #{mblm_encoder_forward.1} parent=1 // pred_check
      _
    $region31: #{mblm_encoder_forward.1} parent=1 // pred_check_branch
      %108 = sbr.rel (0) target = $region33
    $region32: #{mblm_encoder_forward.1} parent=1 // pred_region
      _
    $region33: #{mblm_encoder_forward.1} parent=1 // pred_fallthru
      _
    // Predicated region
    $region34: #{mblm_encoder_forward.1} parent=1 // pred_check
      _
    $region35: #{mblm_encoder_forward.1} parent=1 // pred_check_branch
      %110 = sbr.rel (0) target = $region37
    $region36: #{mblm_encoder_forward.1} parent=1 // pred_region
      _
    $region37: #{mblm_encoder_forward.1} parent=1 // pred_fallthru
      _
    // Predicated region
    $region38: #{mblm_encoder_forward.1} parent=1 // pred_check
      _
    $region39: #{mblm_encoder_forward.1} parent=1 // pred_check_branch
      %112 = sbr.rel (0) target = $region41
    $region40: #{mblm_encoder_forward.1} parent=1 // pred_region
      %114 = vsyncadd [#allocation7], 0
      %s116 = sshll.u32 %s19, 4
      %s117 = int_to_ptr.hbm [resolvable:$true] %s116
      %s118 = sshll.u32 [#allocation6], 4
      %s119 = int_to_ptr.vmem [resolvable:$true] %s118
      %121 = dma.hbm_to_vmem [thread:$0]  %s117, 16, %s119, [#allocation7]
    $region41: #{mblm_encoder_forward.1} parent=1 // pred_fallthru
      _
    // Predicated region
    $region42: #{mblm_encoder_forward.1} parent=1 // pred_check
      _
    $region43: #{mblm_encoder_forward.1} parent=1 // pred_check_branch
      %123 = sbr.rel (0) target = $region45
    $region44: #{mblm_encoder_forward.1} parent=1 // pred_region
      %125 = vsyncadd [#allocation7], 0
      %s127 = sshll.u32 %s21, 4
      %s128 = int_to_ptr.hbm [resolvable:$true] %s127
      %s129 = sshll.u32 [#allocation8], 4
      %s130 = int_to_ptr.vmem [resolvable:$true] %s129
      %132 = dma.hbm_to_vmem [thread:$0]  %s128, 16, %s130, [#allocation7]
    $region45: #{mblm_encoder_forward.1} parent=1 // pred_fallthru
      _
    // Predicated region
    $region46: #{mblm_encoder_forward.1} parent=1 // pred_check
      _
    $region47: #{mblm_encoder_forward.1} parent=1 // pred_check_branch
      %134 = sbr.rel (0) target = $region49
    $region48: #{mblm_encoder_forward.1} parent=1 // pred_region
      %136 = vsyncadd [#allocation10], 0
      %s138 = sshll.u32 %s23, 4
      %s139 = int_to_ptr.hbm [resolvable:$true] %s138
      %s140 = sshll.u32 [#allocation9], 4
      %s141 = int_to_ptr.vmem [resolvable:$true] %s140
      %143 = dma.hbm_to_vmem [thread:$0]  %s139, 16, %s141, [#allocation10]
    $region49: #{mblm_encoder_forward.1} parent=1 // pred_fallthru
      _
    // Predicated region
    $region50: #{mblm_encoder_forward.1} parent=1 // pred_check
      _
    $region51: #{mblm_encoder_forward.1} parent=1 // pred_check_branch
      %145 = sbr.rel (0) target = $region53
    $region52: #{mblm_encoder_forward.1} parent=1 // pred_region
      _
    $region53: #{mblm_encoder_forward.1} parent=1 // pred_fallthru
      _
    // Predicated region
    $region54: #{mblm_encoder_forward.1} parent=1 // pred_check
      _
    $region55: #{mblm_encoder_forward.1} parent=1 // pred_check_branch
      %147 = sbr.rel (0) target = $region57
    $region56: #{mblm_encoder_forward.1} parent=1 // pred_region
      %149 = vsyncadd [#allocation10], 0
      %s151 = sshll.u32 %s27, 4
      %s152 = int_to_ptr.hbm [resolvable:$true] %s151
      %s153 = sshll.u32 [#allocation11], 4
      %s154 = int_to_ptr.vmem [resolvable:$true] %s153
      %156 = dma.hbm_to_vmem [thread:$0]  %s152, 16, %s154, [#allocation10]
    $region57: #{mblm_encoder_forward.1} parent=1 // pred_fallthru
      _
    // Predicated region
    $region58: #{mblm_encoder_forward.1} parent=1 // pred_check
      _
    $region59: #{mblm_encoder_forward.1} parent=1 // pred_check_branch
      %158 = sbr.rel (0) target = $region61
    $region60: #{mblm_encoder_forward.1} parent=1 // pred_region
      _
    $region61: #{mblm_encoder_forward.1} parent=1 // pred_fallthru
      _
    // Predicated region
    $region62: #{mblm_encoder_forward.1} parent=1 // pred_check
      _
    $region63: #{mblm_encoder_forward.1} parent=1 // pred_check_branch
      %160 = sbr.rel (0) target = $region65
    $region64: #{mblm_encoder_forward.1} parent=1 // pred_region
      %162 = vsyncadd [#allocation13], 0
      %s163 = sshll.u32 %s31, 4
      %s164 = int_to_ptr.hbm [resolvable:$true] %s163
      %s165 = sshll.u32 [#allocation12], 4
      %s166 = int_to_ptr.vmem [resolvable:$true] %s165
      %171 = dma.hbm_to_vmem [thread:$0]  %s164, 512, %s166, [#allocation13], 64, 64, 4
    $region65: #{mblm_encoder_forward.1} parent=1 // pred_fallthru
      _
    // Predicated region
    $region66: #{mblm_encoder_forward.1} parent=1 // pred_check
      _
    $region67: #{mblm_encoder_forward.1} parent=1 // pred_check_branch
      %173 = sbr.rel (0) target = $region69
    $region68: #{mblm_encoder_forward.1} parent=1 // pred_region
      %175 = vsyncadd [#allocation13], 0
      %s177 = sshll.u32 %s33, 4
      %s178 = int_to_ptr.hbm [resolvable:$true] %s177
      %s179 = sshll.u32 [#allocation14], 4
      %s180 = int_to_ptr.vmem [resolvable:$true] %s179
      %182 = dma.hbm_to_vmem [thread:$0]  %s178, 16, %s180, [#allocation13]
    $region69: #{mblm_encoder_forward.1} parent=1 // pred_fallthru
      _
    // Predicated region
    $region70: #{mblm_encoder_forward.1} parent=1 // pred_check
      _
    $region71: #{mblm_encoder_forward.1} parent=1 // pred_check_branch
      %184 = sbr.rel (0) target = $region73
    $region72: #{mblm_encoder_forward.1} parent=1 // pred_region
      %186 = vsyncadd [#allocation16], 0
      %s187 = sshll.u32 %s35, 4
      %s188 = int_to_ptr.hbm [resolvable:$true] %s187
      %s189 = sshll.u32 [#allocation15], 4
      %s190 = int_to_ptr.vmem [resolvable:$true] %s189
      %195 = dma.hbm_to_vmem [thread:$0]  %s188, 512, %s190, [#allocation16], 64, 64, 4
    $region73: #{mblm_encoder_forward.1} parent=1 // pred_fallthru
      _
    // Predicated region
    $region74: #{mblm_encoder_forward.1} parent=1 // pred_check
      _
    $region75: #{mblm_encoder_forward.1} parent=1 // pred_check_branch
      %197 = sbr.rel (0) target = $region77
    $region76: #{mblm_encoder_forward.1} parent=1 // pred_region
      %199 = vsyncadd [#allocation16], 0
      %s201 = sshll.u32 %s37, 4
      %s202 = int_to_ptr.hbm [resolvable:$true] %s201
      %s203 = sshll.u32 [#allocation17], 4
      %s204 = int_to_ptr.vmem [resolvable:$true] %s203
      %206 = dma.hbm_to_vmem [thread:$0]  %s202, 16, %s204, [#allocation16]
    $region77: #{mblm_encoder_forward.1} parent=1 // pred_fallthru
      _
    // Predicated region
    $region78: #{mblm_encoder_forward.1} parent=1 // pred_check
      _
    $region79: #{mblm_encoder_forward.1} parent=1 // pred_check_branch
      %208 = sbr.rel (0) target = $region81
    $region80: #{mblm_encoder_forward.1} parent=1 // pred_region
      _
    $region81: #{mblm_encoder_forward.1} parent=1 // pred_fallthru
      _
    // Predicated region
    $region82: #{mblm_encoder_forward.1} parent=1 // pred_check
      _
    $region83: #{mblm_encoder_forward.1} parent=1 // pred_check_branch
      %210 = sbr.rel (0) target = $region85
    $region84: #{mblm_encoder_forward.1} parent=1 // pred_region
      %212 = vsyncadd [#allocation19], 0
      %s214 = sshll.u32 %s41, 4
      %s215 = int_to_ptr.hbm [resolvable:$true] %s214
      %s216 = sshll.u32 [#allocation18], 4
      %s217 = int_to_ptr.vmem [resolvable:$true] %s216
      %219 = dma.hbm_to_vmem [thread:$0]  %s215, 16, %s217, [#allocation19]
    $region85: #{mblm_encoder_forward.1} parent=1 // pred_fallthru
      _
    // Predicated region
    $region86: #{mblm_encoder_forward.1} parent=1 // pred_check
      _
    $region87: #{mblm_encoder_forward.1} parent=1 // pred_check_branch
      %221 = sbr.rel (0) target = $region89
    $region88: #{mblm_encoder_forward.1} parent=1 // pred_region
      %223 = vsyncadd [#allocation19], 0
      %s225 = sshll.u32 %s43, 4
      %s226 = int_to_ptr.hbm [resolvable:$true] %s225
      %s227 = sshll.u32 [#allocation20], 4
      %s228 = int_to_ptr.vmem [resolvable:$true] %s227
      %230 = dma.hbm_to_vmem [thread:$0]  %s226, 16, %s228, [#allocation19]
    $region89: #{mblm_encoder_forward.1} parent=1 // pred_fallthru
      _
    // Predicated region
    $region90: #{mblm_encoder_forward.1} parent=1 // pred_check
      _
    $region91: #{mblm_encoder_forward.1} parent=1 // pred_check_branch
      %232 = sbr.rel (0) target = $region93
    $region92: #{mblm_encoder_forward.1} parent=1 // pred_region
      _
    $region93: #{mblm_encoder_forward.1} parent=1 // pred_fallthru
      _
    // Predicated region
    $region94: #{mblm_encoder_forward.1} parent=1 // pred_check
      _
    $region95: #{mblm_encoder_forward.1} parent=1 // pred_check_branch
      %234 = sbr.rel (0) target = $region97
    $region96: #{mblm_encoder_forward.1} parent=1 // pred_region
      _
    $region97: #{mblm_encoder_forward.1} parent=1 // pred_fallthru
      _
    // Predicated region
    $region98: #{mblm_encoder_forward.1} parent=1 // pred_check
      _
    $region99: #{mblm_encoder_forward.1} parent=1 // pred_check_branch
      %236 = sbr.rel (0) target = $region101
    $region100: #{mblm_encoder_forward.1} parent=1 // pred_region
      %238 = vsyncadd [#allocation22], 0
      %s240 = sshll.u32 %s49, 4
      %s241 = int_to_ptr.hbm [resolvable:$true] %s240
      %s242 = sshll.u32 [#allocation21], 4
      %s243 = int_to_ptr.vmem [resolvable:$true] %s242
      %245 = dma.hbm_to_vmem [thread:$0]  %s241, 16, %s243, [#allocation22]
    $region101: #{mblm_encoder_forward.1} parent=1 // pred_fallthru
      _
    // Predicated region
    $region102: #{mblm_encoder_forward.1} parent=1 // pred_check
      _
    $region103: #{mblm_encoder_forward.1} parent=1 // pred_check_branch
      %247 = sbr.rel (0) target = $region105
    $region104: #{mblm_encoder_forward.1} parent=1 // pred_region
      _
    $region105: #{mblm_encoder_forward.1} parent=1 // pred_fallthru
      _
    // Predicated region
    $region106: #{mblm_encoder_forward.1} parent=1 // pred_check
      _
    $region107: #{mblm_encoder_forward.1} parent=1 // pred_check_branch
      %249 = sbr.rel (0) target = $region109
    $region108: #{mblm_encoder_forward.1} parent=1 // pred_region
      %251 = vsyncadd [#allocation22], 0
      %s252 = sshll.u32 %s53, 4
      %s253 = int_to_ptr.hbm [resolvable:$true] %s252
      %s254 = sshll.u32 [#allocation23], 4
      %s255 = int_to_ptr.vmem [resolvable:$true] %s254
      %260 = dma.hbm_to_vmem [thread:$0]  %s253, 256, %s255, [#allocation22], 64, 64, 4
    $region109: #{mblm_encoder_forward.1} parent=1 // pred_fallthru
      _
    // Predicated region
    $region110: #{mblm_encoder_forward.1} parent=1 // pred_check
      _
    $region111: #{mblm_encoder_forward.1} parent=1 // pred_check_branch
      %262 = sbr.rel (0) target = $region113
    $region112: #{mblm_encoder_forward.1} parent=1 // pred_region
      %264 = vsyncadd [#allocation25], 0
      %s266 = sshll.u32 %s55, 4
      %s267 = int_to_ptr.hbm [resolvable:$true] %s266
      %s268 = sshll.u32 [#allocation24], 4
      %s269 = int_to_ptr.vmem [resolvable:$true] %s268
      %271 = dma.hbm_to_vmem [thread:$0]  %s267, 16, %s269, [#allocation25]
    $region113: #{mblm_encoder_forward.1} parent=1 // pred_fallthru
      _
    // Predicated region
    $region114: #{mblm_encoder_forward.1} parent=1 // pred_check
      _
    $region115: #{mblm_encoder_forward.1} parent=1 // pred_check_branch
      %273 = sbr.rel (0) target = $region117
    $region116: #{mblm_encoder_forward.1} parent=1 // pred_region
      %275 = vsyncadd [#allocation25], 0
      %s276 = sshll.u32 %s57, 4
      %s277 = int_to_ptr.hbm [resolvable:$true] %s276
      %s278 = sshll.u32 [#allocation26], 4
      %s279 = int_to_ptr.vmem [resolvable:$true] %s278
      %284 = dma.hbm_to_vmem [thread:$0]  %s277, 256, %s279, [#allocation25], 64, 64, 4
    $region117: #{mblm_encoder_forward.1} parent=1 // pred_fallthru
      _
    // Predicated region
    $region118: #{mblm_encoder_forward.1} parent=1 // pred_check
      _
    $region119: #{mblm_encoder_forward.1} parent=1 // pred_check_branch
      %286 = sbr.rel (0) target = $region121
    $region120: #{mblm_encoder_forward.1} parent=1 // pred_region
      %288 = vsyncadd [#allocation28], 0
      %s290 = sshll.u32 %s59, 4
      %s291 = int_to_ptr.hbm [resolvable:$true] %s290
      %s292 = sshll.u32 [#allocation27], 4
      %s293 = int_to_ptr.vmem [resolvable:$true] %s292
      %295 = dma.hbm_to_vmem [thread:$0]  %s291, 16, %s293, [#allocation28]
    $region121: #{mblm_encoder_forward.1} parent=1 // pred_fallthru
      _
    // Predicated region
    $region122: #{mblm_encoder_forward.1} parent=1 // pred_check
      _
    $region123: #{mblm_encoder_forward.1} parent=1 // pred_check_branch
      %297 = sbr.rel (0) target = $region125
    $region124: #{mblm_encoder_forward.1} parent=1 // pred_region
      _
    $region125: #{mblm_encoder_forward.1} parent=1 // pred_fallthru
      _
    // Predicated region
    $region126: #{mblm_encoder_forward.1} parent=1 // pred_check
      _
    $region127: #{mblm_encoder_forward.1} parent=1 // pred_check_branch
      %299 = sbr.rel (0) target = $region129
    $region128: #{mblm_encoder_forward.1} parent=1 // pred_region
      %301 = vsyncadd [#allocation28], 0
      %s303 = sshll.u32 %s63, 4
      %s304 = int_to_ptr.hbm [resolvable:$true] %s303
      %s305 = sshll.u32 [#allocation29], 4
      %s306 = int_to_ptr.vmem [resolvable:$true] %s305
      %308 = dma.hbm_to_vmem [thread:$0]  %s304, 16, %s306, [#allocation28]
    $region129: #{mblm_encoder_forward.1} parent=1 // pred_fallthru
      _
    // Predicated region
    $region130: #{mblm_encoder_forward.1} parent=1 // pred_check
      _
    $region131: #{mblm_encoder_forward.1} parent=1 // pred_check_branch
      %310 = sbr.rel (0) target = $region133
    $region132: #{mblm_encoder_forward.1} parent=1 // pred_region
      %312 = vsyncadd [#allocation31], 0
      %s314 = sshll.u32 %s65, 4
      %s315 = int_to_ptr.hbm [resolvable:$true] %s314
      %s316 = sshll.u32 [#allocation30], 4
      %s317 = int_to_ptr.vmem [resolvable:$true] %s316
      %319 = dma.hbm_to_vmem [thread:$0]  %s315, 16, %s317, [#allocation31]
    $region133: #{mblm_encoder_forward.1} parent=1 // pred_fallthru
      _
    // Predicated region
    $region134: #{mblm_encoder_forward.1} parent=1 // pred_check
      _
    $region135: #{mblm_encoder_forward.1} parent=1 // pred_check_branch
      %321 = sbr.rel (0) target = $region137
    $region136: #{mblm_encoder_forward.1} parent=1 // pred_region
      %323 = dma.done [#allocation5], 4096
    $region137: #{mblm_encoder_forward.1} parent=1 // pred_fallthru
      _
    // Predicated region
    $region138: #{mblm_encoder_forward.1} parent=1 // pred_check
      _
    $region139: #{mblm_encoder_forward.1} parent=1 // pred_check_branch
      %325 = sbr.rel (0) target = $region141
    $region140: #{mblm_encoder_forward.1} parent=1 // pred_region
      %327 = dma.done [#allocation7], 16
    $region141: #{mblm_encoder_forward.1} parent=1 // pred_fallthru
      _
    // Predicated region
    $region142: #{mblm_encoder_forward.1} parent=1 // pred_check
      _
    $region143: #{mblm_encoder_forward.1} parent=1 // pred_check_branch
      %329 = sbr.rel (0) target = $region145
    $region144: #{mblm_encoder_forward.1} parent=1 // pred_region
      %331 = dma.done [#allocation7], 16
    $region145: #{mblm_encoder_forward.1} parent=1 // pred_fallthru
      _
    // Predicated region
    $region146: #{mblm_encoder_forward.1} parent=1 // pred_check
      _
    $region147: #{mblm_encoder_forward.1} parent=1 // pred_check_branch
      %333 = sbr.rel (0) target = $region149
    $region148: #{mblm_encoder_forward.1} parent=1 // pred_region
      %335 = dma.done [#allocation10], 16
    $region149: #{mblm_encoder_forward.1} parent=1 // pred_fallthru
      _
    // Predicated region
    $region150: #{mblm_encoder_forward.1} parent=1 // pred_check
      _
    $region151: #{mblm_encoder_forward.1} parent=1 // pred_check_branch
      %337 = sbr.rel (0) target = $region153
    $region152: #{mblm_encoder_forward.1} parent=1 // pred_region
      %339 = dma.done [#allocation10], 16
    $region153: #{mblm_encoder_forward.1} parent=1 // pred_fallthru
      _
    // Predicated region
    $region154: #{mblm_encoder_forward.1} parent=1 // pred_check
      _
    $region155: #{mblm_encoder_forward.1} parent=1 // pred_check_branch
      %341 = sbr.rel (0) target = $region157
    $region156: #{mblm_encoder_forward.1} parent=1 // pred_region
      %343 = dma.done [#allocation13], 512
    $region157: #{mblm_encoder_forward.1} parent=1 // pred_fallthru
      _
    // Predicated region
    $region158: #{mblm_encoder_forward.1} parent=1 // pred_check
      _
    $region159: #{mblm_encoder_forward.1} parent=1 // pred_check_branch
      %345 = sbr.rel (0) target = $region161
    $region160: #{mblm_encoder_forward.1} parent=1 // pred_region
      %347 = dma.done [#allocation13], 16
    $region161: #{mblm_encoder_forward.1} parent=1 // pred_fallthru
      _
    // Predicated region
    $region162: #{mblm_encoder_forward.1} parent=1 // pred_check
      _
    $region163: #{mblm_encoder_forward.1} parent=1 // pred_check_branch
      %349 = sbr.rel (0) target = $region165
    $region164: #{mblm_encoder_forward.1} parent=1 // pred_region
      %351 = dma.done [#allocation16], 512
    $region165: #{mblm_encoder_forward.1} parent=1 // pred_fallthru
      _
    // Predicated region
    $region166: #{mblm_encoder_forward.1} parent=1 // pred_check
      _
    $region167: #{mblm_encoder_forward.1} parent=1 // pred_check_branch
      %353 = sbr.rel (0) target = $region169
    $region168: #{mblm_encoder_forward.1} parent=1 // pred_region
      %355 = dma.done [#allocation16], 16
    $region169: #{mblm_encoder_forward.1} parent=1 // pred_fallthru
      _
    // Predicated region
    $region170: #{mblm_encoder_forward.1} parent=1 // pred_check
      _
    $region171: #{mblm_encoder_forward.1} parent=1 // pred_check_branch
      %357 = sbr.rel (0) target = $region173
    $region172: #{mblm_encoder_forward.1} parent=1 // pred_region
      %359 = dma.done [#allocation19], 16
    $region173: #{mblm_encoder_forward.1} parent=1 // pred_fallthru
      _
    // Predicated region
    $region174: #{mblm_encoder_forward.1} parent=1 // pred_check
      _
    $region175: #{mblm_encoder_forward.1} parent=1 // pred_check_branch
      %361 = sbr.rel (0) target = $region177
    $region176: #{mblm_encoder_forward.1} parent=1 // pred_region
      %363 = dma.done [#allocation19], 16
    $region177: #{mblm_encoder_forward.1} parent=1 // pred_fallthru
      _
    // Predicated region
    $region178: #{mblm_encoder_forward.1} parent=1 // pred_check
      _
    $region179: #{mblm_encoder_forward.1} parent=1 // pred_check_branch
      %365 = sbr.rel (0) target = $region181
    $region180: #{mblm_encoder_forward.1} parent=1 // pred_region
      %367 = dma.done [#allocation22], 16
    $region181: #{mblm_encoder_forward.1} parent=1 // pred_fallthru
      _
    // Predicated region
    $region182: #{mblm_encoder_forward.1} parent=1 // pred_check
      _
    $region183: #{mblm_encoder_forward.1} parent=1 // pred_check_branch
      %369 = sbr.rel (0) target = $region185
    $region184: #{mblm_encoder_forward.1} parent=1 // pred_region
      %371 = dma.done [#allocation22], 256
    $region185: #{mblm_encoder_forward.1} parent=1 // pred_fallthru
      _
    // Predicated region
    $region186: #{mblm_encoder_forward.1} parent=1 // pred_check
      _
    $region187: #{mblm_encoder_forward.1} parent=1 // pred_check_branch
      %373 = sbr.rel (0) target = $region189
    $region188: #{mblm_encoder_forward.1} parent=1 // pred_region
      %375 = dma.done [#allocation25], 16
    $region189: #{mblm_encoder_forward.1} parent=1 // pred_fallthru
      _
    // Predicated region
    $region190: #{mblm_encoder_forward.1} parent=1 // pred_check
      _
    $region191: #{mblm_encoder_forward.1} parent=1 // pred_check_branch
      %377 = sbr.rel (0) target = $region193
    $region192: #{mblm_encoder_forward.1} parent=1 // pred_region
      %379 = dma.done [#allocation25], 256
    $region193: #{mblm_encoder_forward.1} parent=1 // pred_fallthru
      _
    // Predicated region
    $region194: #{mblm_encoder_forward.1} parent=1 // pred_check
      _
    $region195: #{mblm_encoder_forward.1} parent=1 // pred_check_branch
      %381 = sbr.rel (0) target = $region197
    $region196: #{mblm_encoder_forward.1} parent=1 // pred_region
      %383 = dma.done [#allocation28], 16
    $region197: #{mblm_encoder_forward.1} parent=1 // pred_fallthru
      _
    // Predicated region
    $region198: #{mblm_encoder_forward.1} parent=1 // pred_check
      _
    $region199: #{mblm_encoder_forward.1} parent=1 // pred_check_branch
      %385 = sbr.rel (0) target = $region201
    $region200: #{mblm_encoder_forward.1} parent=1 // pred_region
      %387 = dma.done [#allocation28], 16
    $region201: #{mblm_encoder_forward.1} parent=1 // pred_fallthru
      _
    // Predicated region
    $region202: #{mblm_encoder_forward.1} parent=1 // pred_check
      _
    $region203: #{mblm_encoder_forward.1} parent=1 // pred_check_branch
      %389 = sbr.rel (0) target = $region205
    $region204: #{mblm_encoder_forward.1} parent=1 // pred_region
      %391 = dma.done [#allocation31], 16
    $region205: #{mblm_encoder_forward.1} parent=1 // pred_fallthru
      _
    %v393 = vld [vmem:[%s1] sm:$0xff]
    %v394 = vld [vmem:[%s1 + $0x8] sm:$0xff]
    %v395 = vld [vmem:[%s1 + $0x10] sm:$0xff]
    %v396 = vld [vmem:[%s1 + $0x18] sm:$0xff]
    %v397 = vlaneseq
    %v398 = vand.u32 %v397, 127
    %v399 = vadd.s32 %v398, 128
    %v400 = vadd.s32 %v398, 256
    %v401 = vadd.s32 %v398, 384
    %402 = vset.pattern.permute.xlu0 0
    %403 = vperm.xlu0 %402, %v393
    %v404 = vpop.permute.xlu0 %403
    %405 = vset.pattern.permute.xlu0 0
    %406 = vperm.xlu0 %405, %v394
    %v407 = vpop.permute.xlu0 %406
    %408 = vset.pattern.permute.xlu0 0
    %409 = vperm.xlu0 %408, %v395
    %v410 = vpop.permute.xlu0 %409
    %411 = vset.pattern.permute.xlu0 0
    %412 = vperm.xlu0 %411, %v396
    %v413 = vpop.permute.xlu0 %412
    %vm414 = vcmp.eq.s32.totalorder %v398, %v404
    %vm415 = vcmp.eq.s32.totalorder %v399, %v404
    %vm416 = vcmp.eq.s32.totalorder %v400, %v404
    %vm417 = vcmp.eq.s32.totalorder %v401, %v404
    %vm418 = vcmp.eq.s32.totalorder %v398, %v407
    %vm419 = vcmp.eq.s32.totalorder %v399, %v407
    %vm420 = vcmp.eq.s32.totalorder %v400, %v407
    %vm421 = vcmp.eq.s32.totalorder %v401, %v407
    %vm422 = vcmp.eq.s32.totalorder %v398, %v410
    %vm423 = vcmp.eq.s32.totalorder %v399, %v410
    %vm424 = vcmp.eq.s32.totalorder %v400, %v410
    %vm425 = vcmp.eq.s32.totalorder %v401, %v410
    %vm426 = vcmp.eq.s32.totalorder %v398, %v413
    %vm427 = vcmp.eq.s32.totalorder %v399, %v413
    %vm428 = vcmp.eq.s32.totalorder %v400, %v413
    %vm429 = vcmp.eq.s32.totalorder %v401, %v413
    %v430 = vsel %vm414, 1.0, 0.0
    %v431 = vsel %vm415, 1.0, 0.0
    %v432 = vsel %vm416, 1.0, 0.0
    %v433 = vsel %vm417, 1.0, 0.0
    %v434 = vsel %vm418, 1.0, 0.0
    %v435 = vsel %vm419, 1.0, 0.0
    %v436 = vsel %vm420, 1.0, 0.0
    %v437 = vsel %vm421, 1.0, 0.0
    %v438 = vsel %vm422, 1.0, 0.0
    %v439 = vsel %vm423, 1.0, 0.0
    %v440 = vsel %vm424, 1.0, 0.0
    %v441 = vsel %vm425, 1.0, 0.0
    %v442 = vsel %vm426, 1.0, 0.0
    %v443 = vsel %vm427, 1.0, 0.0
    %v444 = vsel %vm428, 1.0, 0.0
    %v445 = vsel %vm429, 1.0, 0.0
    %v446 = vpack.c.bf16 %v434, %v430
    %v447 = vpack.c.bf16 %v435, %v431
    %v448 = vpack.c.bf16 %v436, %v432
    %v449 = vpack.c.bf16 %v437, %v433
    %v450 = vpack.c.bf16 %v442, %v438
    %v451 = vpack.c.bf16 %v443, %v439
    %v452 = vpack.c.bf16 %v444, %v440
    %v453 = vpack.c.bf16 %v445, %v441
    %v454 = vld [vmem:[#allocation4] sm:$0xf]
    %v455 = vld [vmem:[#allocation4 + $0x4] sm:$0xf]
    %v456 = vld [vmem:[#allocation4 + $0x8] sm:$0xf]
    %v457 = vld [vmem:[#allocation4 + $0xc] sm:$0xf]
    %v458 = vld [vmem:[#allocation4 + $0x10] sm:$0xf]
    %v459 = vld [vmem:[#allocation4 + $0x14] sm:$0xf]
    %v460 = vld [vmem:[#allocation4 + $0x18] sm:$0xf]
    %v461 = vld [vmem:[#allocation4 + $0x1c] sm:$0xf]
    %v462 = vld [vmem:[#allocation4 + $0x20] sm:$0xf]
    %v463 = vld [vmem:[#allocation4 + $0x24] sm:$0xf]
    %v464 = vld [vmem:[#allocation4 + $0x28] sm:$0xf]
    %v465 = vld [vmem:[#allocation4 + $0x2c] sm:$0xf]
    %v466 = vld [vmem:[#allocation4 + $0x30] sm:$0xf]
    %v467 = vld [vmem:[#allocation4 + $0x34] sm:$0xf]
    %v468 = vld [vmem:[#allocation4 + $0x38] sm:$0xf]
    %v469 = vld [vmem:[#allocation4 + $0x3c] sm:$0xf]
    %v470 = vld [vmem:[#allocation4 + $0x40] sm:$0xf]
    %v471 = vld [vmem:[#allocation4 + $0x44] sm:$0xf]
    %v472 = vld [vmem:[#allocation4 + $0x48] sm:$0xf]
    %v473 = vld [vmem:[#allocation4 + $0x4c] sm:$0xf]
    %v474 = vld [vmem:[#allocation4 + $0x50] sm:$0xf]
    %v475 = vld [vmem:[#allocation4 + $0x54] sm:$0xf]
    %v476 = vld [vmem:[#allocation4 + $0x58] sm:$0xf]
    %v477 = vld [vmem:[#allocation4 + $0x5c] sm:$0xf]
    %v478 = vld [vmem:[#allocation4 + $0x60] sm:$0xf]
    %v479 = vld [vmem:[#allocation4 + $0x64] sm:$0xf]
    %v480 = vld [vmem:[#allocation4 + $0x68] sm:$0xf]
    %v481 = vld [vmem:[#allocation4 + $0x6c] sm:$0xf]
    %v482 = vld [vmem:[#allocation4 + $0x70] sm:$0xf]
    %v483 = vld [vmem:[#allocation4 + $0x74] sm:$0xf]
    %v484 = vld [vmem:[#allocation4 + $0x78] sm:$0xf]
    %v485 = vld [vmem:[#allocation4 + $0x7c] sm:$0xf]
    %v486 = vld [vmem:[#allocation4 + $0x80] sm:$0xf]
    %v487 = vld [vmem:[#allocation4 + $0x84] sm:$0xf]
    %v488 = vld [vmem:[#allocation4 + $0x88] sm:$0xf]
    %v489 = vld [vmem:[#allocation4 + $0x8c] sm:$0xf]
    %v490 = vld [vmem:[#allocation4 + $0x90] sm:$0xf]
    %v491 = vld [vmem:[#allocation4 + $0x94] sm:$0xf]
    %v492 = vld [vmem:[#allocation4 + $0x98] sm:$0xf]
    %v493 = vld [vmem:[#allocation4 + $0x9c] sm:$0xf]
    %v494 = vld [vmem:[#allocation4 + $0xa0] sm:$0xf]
    %v495 = vld [vmem:[#allocation4 + $0xa4] sm:$0xf]
    %v496 = vld [vmem:[#allocation4 + $0xa8] sm:$0xf]
    %v497 = vld [vmem:[#allocation4 + $0xac] sm:$0xf]
    %v498 = vld [vmem:[#allocation4 + $0xb0] sm:$0xf]
    %v499 = vld [vmem:[#allocation4 + $0xb4] sm:$0xf]
    %v500 = vld [vmem:[#allocation4 + $0xb8] sm:$0xf]
    %v501 = vld [vmem:[#allocation4 + $0xbc] sm:$0xf]
    %v502 = vld [vmem:[#allocation4 + $0xc0] sm:$0xf]
    %v503 = vld [vmem:[#allocation4 + $0xc4] sm:$0xf]
    %v504 = vld [vmem:[#allocation4 + $0xc8] sm:$0xf]
    %v505 = vld [vmem:[#allocation4 + $0xcc] sm:$0xf]
    %v506 = vld [vmem:[#allocation4 + $0xd0] sm:$0xf]
    %v507 = vld [vmem:[#allocation4 + $0xd4] sm:$0xf]
    %v508 = vld [vmem:[#allocation4 + $0xd8] sm:$0xf]
    %v509 = vld [vmem:[#allocation4 + $0xdc] sm:$0xf]
    %v510 = vld [vmem:[#allocation4 + $0xe0] sm:$0xf]
    %v511 = vld [vmem:[#allocation4 + $0xe4] sm:$0xf]
    %v512 = vld [vmem:[#allocation4 + $0xe8] sm:$0xf]
    %v513 = vld [vmem:[#allocation4 + $0xec] sm:$0xf]
    %v514 = vld [vmem:[#allocation4 + $0xf0] sm:$0xf]
    %v515 = vld [vmem:[#allocation4 + $0xf4] sm:$0xf]
    %v516 = vld [vmem:[#allocation4 + $0xf8] sm:$0xf]
    %v517 = vld [vmem:[#allocation4 + $0xfc] sm:$0xf]
    %v582 = vunpack.c.l.b16 %v454
    %v583 = vunpack.c.l.b16 %v455
    %v584 = vunpack.c.l.b16 %v456
    %v585 = vunpack.c.l.b16 %v457
    %v586 = vunpack.c.l.b16 %v458
    %v587 = vunpack.c.l.b16 %v459
    %v588 = vunpack.c.l.b16 %v460
    %v589 = vunpack.c.l.b16 %v461
    %v590 = vunpack.c.l.b16 %v462
    %v591 = vunpack.c.l.b16 %v463
    %v592 = vunpack.c.l.b16 %v464
    %v593 = vunpack.c.l.b16 %v465
    %v594 = vunpack.c.l.b16 %v466
    %v595 = vunpack.c.l.b16 %v467
    %v596 = vunpack.c.l.b16 %v468
    %v597 = vunpack.c.l.b16 %v469
    %v598 = vunpack.c.l.b16 %v470
    %v599 = vunpack.c.l.b16 %v471
    %v600 = vunpack.c.l.b16 %v472
    %v601 = vunpack.c.l.b16 %v473
    %v602 = vunpack.c.l.b16 %v474
    %v603 = vunpack.c.l.b16 %v475
    %v604 = vunpack.c.l.b16 %v476
    %v605 = vunpack.c.l.b16 %v477
    %v606 = vunpack.c.l.b16 %v478
    %v607 = vunpack.c.l.b16 %v479
    %v608 = vunpack.c.l.b16 %v480
    %v609 = vunpack.c.l.b16 %v481
    %v610 = vunpack.c.l.b16 %v482
    %v611 = vunpack.c.l.b16 %v483
    %v612 = vunpack.c.l.b16 %v484
    %v613 = vunpack.c.l.b16 %v485
    %v614 = vunpack.c.l.b16 %v486
    %v615 = vunpack.c.l.b16 %v487
    %v616 = vunpack.c.l.b16 %v488
    %v617 = vunpack.c.l.b16 %v489
    %v618 = vunpack.c.l.b16 %v490
    %v619 = vunpack.c.l.b16 %v491
    %v620 = vunpack.c.l.b16 %v492
    %v621 = vunpack.c.l.b16 %v493
    %v622 = vunpack.c.l.b16 %v494
    %v623 = vunpack.c.l.b16 %v495
    %v624 = vunpack.c.l.b16 %v496
    %v625 = vunpack.c.l.b16 %v497
    %v626 = vunpack.c.l.b16 %v498
    %v627 = vunpack.c.l.b16 %v499
    %v628 = vunpack.c.l.b16 %v500
    %v629 = vunpack.c.l.b16 %v501
    %v630 = vunpack.c.l.b16 %v502
    %v631 = vunpack.c.l.b16 %v503
    %v632 = vunpack.c.l.b16 %v504
    %v633 = vunpack.c.l.b16 %v505
    %v634 = vunpack.c.l.b16 %v506
    %v635 = vunpack.c.l.b16 %v507
    %v636 = vunpack.c.l.b16 %v508
    %v637 = vunpack.c.l.b16 %v509
    %v638 = vunpack.c.l.b16 %v510
    %v639 = vunpack.c.l.b16 %v511
    %v640 = vunpack.c.l.b16 %v512
    %v641 = vunpack.c.l.b16 %v513
    %v642 = vunpack.c.l.b16 %v514
    %v643 = vunpack.c.l.b16 %v515
    %v644 = vunpack.c.l.b16 %v516
    %v645 = vunpack.c.l.b16 %v517
    %v646 = vpack.c.b16 %v583, %v582
    %v647 = vpack.c.b16 %v585, %v584
    %v648 = vpack.c.b16 %v587, %v586
    %v649 = vpack.c.b16 %v589, %v588
    %v650 = vpack.c.b16 %v591, %v590
    %v651 = vpack.c.b16 %v593, %v592
    %v652 = vpack.c.b16 %v595, %v594
    %v653 = vpack.c.b16 %v597, %v596
    %v654 = vpack.c.b16 %v599, %v598
    %v655 = vpack.c.b16 %v601, %v600
    %v656 = vpack.c.b16 %v603, %v602
    %v657 = vpack.c.b16 %v605, %v604
    %v658 = vpack.c.b16 %v607, %v606
    %v659 = vpack.c.b16 %v609, %v608
    %v660 = vpack.c.b16 %v611, %v610
    %v661 = vpack.c.b16 %v613, %v612
    %v662 = vpack.c.b16 %v615, %v614
    %v663 = vpack.c.b16 %v617, %v616
    %v664 = vpack.c.b16 %v619, %v618
    %v665 = vpack.c.b16 %v621, %v620
    %v666 = vpack.c.b16 %v623, %v622
    %v667 = vpack.c.b16 %v625, %v624
    %v668 = vpack.c.b16 %v627, %v626
    %v669 = vpack.c.b16 %v629, %v628
    %v670 = vpack.c.b16 %v631, %v630
    %v671 = vpack.c.b16 %v633, %v632
    %v672 = vpack.c.b16 %v635, %v634
    %v673 = vpack.c.b16 %v637, %v636
    %v674 = vpack.c.b16 %v639, %v638
    %v675 = vpack.c.b16 %v641, %v640
    %v676 = vpack.c.b16 %v643, %v642
    %v677 = vpack.c.b16 %v645, %v644
    %710 = vmatpush.bf16.msra.mxu0 %v653
    %711 = vmatpush.bf16.msra.mxu0 %v652
    %712 = vmatpush.bf16.msra.mxu0 %v651
    %713 = vmatpush.bf16.msra.mxu0 %v650
    %714 = vmatpush.bf16.msra.mxu0 %v649
    %715 = vmatpush.bf16.msra.mxu0 %v648
    %716 = vmatpush.bf16.msra.mxu0 %v647
    %717 = vmatpush.bf16.msra.mxu0 %v646
    %718 = vmatmul.bf16.gmra.mxu0 %v446
    %v719 = vpop.f32.mrf.mxu0
    %v720 = vadd.f32 0.0, %v719
    %v721 = vpop.f32.mrf.mxu0
    %v722 = vadd.f32 0.0, %v721
    %723 = vmatmul.bf16.gmra.mxu0 %v450
    %v724 = vpop.f32.mrf.mxu0
    %v725 = vadd.f32 0.0, %v724
    %v726 = vpop.f32.mrf.mxu0
    %v727 = vadd.f32 0.0, %v726
    %728 = vdwg.mxu0
    %729 = vmatpush.bf16.msra.mxu0 %v661
    %730 = vmatpush.bf16.msra.mxu0 %v660
    %731 = vmatpush.bf16.msra.mxu0 %v659
    %732 = vmatpush.bf16.msra.mxu0 %v658
    %733 = vmatpush.bf16.msra.mxu0 %v657
    %734 = vmatpush.bf16.msra.mxu0 %v656
    %735 = vmatpush.bf16.msra.mxu0 %v655
    %736 = vmatpush.bf16.msra.mxu0 %v654
    %737 = vmatmul.bf16.gmra.mxu0 %v447
    %v738 = vpop.f32.mrf.mxu0
    %v739 = vadd.f32 %v720, %v738
    %v740 = vpop.f32.mrf.mxu0
    %v741 = vadd.f32 %v722, %v740
    %742 = vmatmul.bf16.gmra.mxu0 %v451
    %v743 = vpop.f32.mrf.mxu0
    %v744 = vadd.f32 %v725, %v743
    %v745 = vpop.f32.mrf.mxu0
    %v746 = vadd.f32 %v727, %v745
    %747 = vdwg.mxu0
    %748 = vmatpush.bf16.msra.mxu0 %v669
    %749 = vmatpush.bf16.msra.mxu0 %v668
    %750 = vmatpush.bf16.msra.mxu0 %v667
    %751 = vmatpush.bf16.msra.mxu0 %v666
    %752 = vmatpush.bf16.msra.mxu0 %v665
    %753 = vmatpush.bf16.msra.mxu0 %v664
    %754 = vmatpush.bf16.msra.mxu0 %v663
    %755 = vmatpush.bf16.msra.mxu0 %v662
    %756 = vmatmul.bf16.gmra.mxu0 %v448
    %v757 = vpop.f32.mrf.mxu0
    %v758 = vadd.f32 %v739, %v757
    %v759 = vpop.f32.mrf.mxu0
    %v760 = vadd.f32 %v741, %v759
    %761 = vmatmul.bf16.gmra.mxu0 %v452
    %v762 = vpop.f32.mrf.mxu0
    %v763 = vadd.f32 %v744, %v762
    %v764 = vpop.f32.mrf.mxu0
    %v765 = vadd.f32 %v746, %v764
    %766 = vdwg.mxu0
    %767 = vmatpush.bf16.msra.mxu0 %v677
    %768 = vmatpush.bf16.msra.mxu0 %v676
    %769 = vmatpush.bf16.msra.mxu0 %v675
    %770 = vmatpush.bf16.msra.mxu0 %v674
    %771 = vmatpush.bf16.msra.mxu0 %v673
    %772 = vmatpush.bf16.msra.mxu0 %v672
    %773 = vmatpush.bf16.msra.mxu0 %v671
    %774 = vmatpush.bf16.msra.mxu0 %v670
    %775 = vmatmul.bf16.gmra.mxu0 %v449
    %v776 = vpop.f32.mrf.mxu0
    %v777 = vadd.f32 %v758, %v776
    %v778 = vpop.f32.mrf.mxu0
    %v779 = vadd.f32 %v760, %v778
    %780 = vmatmul.bf16.gmra.mxu0 %v453
    %v781 = vpop.f32.mrf.mxu0
    %v782 = vadd.f32 %v763, %v781
    %v783 = vpop.f32.mrf.mxu0
    %v784 = vadd.f32 %v765, %v783
    %785 = vdwg.mxu0
    %v786 = vld [vmem:[%s3] sm:$0xf]
    %vm787 = vcmask 261120
    %v789 = vsel %vm787, %v786, 0
    %791 = vmatpush.msra.mxu0 0.0
    %792 = vmatpush.msra.mxu0 0.0
    %793 = vmatpush.msra.mxu0 0.0
    %794 = vmatpush.msra.mxu0 0.0
    %795 = vmatpush.msra.mxu0 0.0
    %796 = vmatpush.msra.mxu0 0.0
    %797 = vmatpush.msra.mxu0 0.0
    %798 = vmatpush.msra.mxu0 0.0
    %799 = vmatpush.msra.mxu0 0.0
    %800 = vmatpush.msra.mxu0 0.0
    %801 = vmatpush.msra.mxu0 0.0
    %802 = vmatpush.msra.mxu0 0.0
    %803 = vmatpush.msra.mxu0 %v784
    %804 = vmatpush.msra.mxu0 %v782
    %805 = vmatpush.msra.mxu0 %v779
    %806 = vmatpush.msra.mxu0 %v777
    %807 = vmatmul.f32.gmra.mxu0 %v789
    %v808 = vpop.f32.mrf.mxu0
    %v809 = vadd.f32 0.0, %v808
    %810 = vdwg.mxu0
    %812 = vrot.lane.b32.xlu0 %v809, 32
    %v813 = vpop.permute.xlu0 %812
    %vm815 = vcmask 257024
    %v816 = vsel %vm815, %v813, 0.0
    %817 = vadd.xlane.f32.xlu0 %v816
    %v818 = vpop.xlane.xlu0 %817
    %v819 = vmul.f32 %v777, %v777
    %v820 = vmul.f32 %v779, %v779
    %v821 = vmul.f32 %v782, %v782
    %v822 = vmul.f32 %v784, %v784
    %827 = vrot.lane.b32.xlu0 %v819, 32
    %v828 = vpop.permute.xlu0 %827
    %829 = vrot.lane.b32.xlu0 %v820, 32
    %v830 = vpop.permute.xlu0 %829
    %831 = vrot.lane.b32.xlu0 %v821, 32
    %v832 = vpop.permute.xlu0 %831
    %833 = vrot.lane.b32.xlu0 %v822, 32
    %v834 = vpop.permute.xlu0 %833
    %839 = vmatpush.msra.mxu0 0.0
    %840 = vmatpush.msra.mxu0 0.0
    %841 = vmatpush.msra.mxu0 0.0
    %842 = vmatpush.msra.mxu0 0.0
    %843 = vmatpush.msra.mxu0 0.0
    %844 = vmatpush.msra.mxu0 0.0
    %845 = vmatpush.msra.mxu0 0.0
    %846 = vmatpush.msra.mxu0 0.0
    %847 = vmatpush.msra.mxu0 0.0
    %848 = vmatpush.msra.mxu0 0.0
    %849 = vmatpush.msra.mxu0 0.0
    %850 = vmatpush.msra.mxu0 0.0
    %851 = vmatpush.msra.mxu0 %v834
    %852 = vmatpush.msra.mxu0 %v832
    %853 = vmatpush.msra.mxu0 %v830
    %854 = vmatpush.msra.mxu0 %v828
    %855 = vmatmul.f32.gmra.mxu0 %v789
    %v856 = vpop.f32.mrf.mxu0
    %v857 = vadd.f32 0.0, %v856
    %858 = vdwg.mxu0
    %v859 = vsel %vm815, %v857, 0.0
    %860 = vadd.xlane.f32.xlu0 %v859
    %v861 = vpop.xlane.xlu0 %860
    %v862 = vrcp.pop 256.0
    %v863 = vmul.f32 256.0, %v862
    %v864 = vsub.f32 1.0, %v863
    %v865 = vmul.f32 %v862, %v864
    %v866 = vadd.f32 %v862, %v865
    %vm867 = vweird.f32 %v862
    %v868 = vsel %vm867, %v862, %v866
    %v869 = vmul.f32 %v818, %v868
    %v870 = vmul.f32 %v861, %v868
    %v871 = vmul.f32 %v869, %v869
    %v872 = vsub.f32 %v870, %v871
    %v873 = vadd.f32 %v872, 1e-05
    %v874 = vrsqrt.pop %v873
    %v875 = vmul.f32 %v874, %v873
    %v876 = vmul.f32 %v875, %v874
    %v877 = vmul.f32 0.5, %v876
    %v878 = vsub.f32 1.5, %v877
    %v879 = vmul.f32 %v874, %v878
    %vm880 = vweird.f32 %v873
    %vm881 = vweird.f32 %v874
    %vm882 = vmor %vm880, %vm881
    %v883 = vsel %vm882, %v874, %v879
    %v884 = vld [vmem:[%s15] sm:$0x1]
    %v886 = vperm.slane %v884, 0
    %v888 = vmul.f32 %v869, %v886
    %v889 = vsub.f32 %v809, %v888
    %v890 = vmul.f32 %v883, %v889
    %v891 = vld [vmem:[%s17] sm:$0x1]
    %v893 = vperm.slane %v891, 0
    %v895 = vadd.f32 %v890, %v893
    %vm896 = vcmask 519168
    %v897 = vsel %vm896, %v895, 0.0
    %898 = vadd.xlane.f32.xlu0 %v897
    %v899 = vpop.xlane.xlu0 %898
    %v900 = vrcp.pop 64.0
    %v901 = vmul.f32 64.0, %v900
    %v902 = vsub.f32 1.0, %v901
    %v903 = vmul.f32 %v900, %v902
    %v904 = vadd.f32 %v900, %v903
    %vm905 = vweird.f32 %v900
    %v906 = vsel %vm905, %v900, %v904
    %v907 = vmul.f32 %v899, %v906
    %v908 = vsub.f32 %v895, %v907
    %v909 = vmul.f32 %v908, %v908
    %v910 = vsel %vm896, %v909, 0.0
    %911 = vadd.xlane.f32.xlu0 %v910
    %v912 = vpop.xlane.xlu0 %911
    %v913 = vmul.f32 %v912, %v906
    %v914 = vadd.f32 %v913, 1e-05
    %v915 = vrsqrt.pop %v914
    %v916 = vmul.f32 %v915, %v914
    %v917 = vmul.f32 %v916, %v915
    %v918 = vmul.f32 0.5, %v917
    %v919 = vsub.f32 1.5, %v918
    %v920 = vmul.f32 %v915, %v919
    %vm921 = vweird.f32 %v914
    %vm922 = vweird.f32 %v915
    %vm923 = vmor %vm921, %vm922
    %v924 = vsel %vm923, %v915, %v920
    %v925 = vmul.f32 %v908, %v924
    %v926 = vld [vmem:[#allocation6] sm:$0x1]
    %v928 = vperm.slane %v926, 0
    %v930 = vmul.f32 %v925, %v928
    %v931 = vld [vmem:[#allocation8] sm:$0x1]
    %v933 = vperm.slane %v931, 0
    %v935 = vadd.f32 %v930, %v933
    %v936 = vld [vmem:[%s9] sm:$0xf]
    %v937 = vadd.f32 %v935, %v936
    %v938 = vld [vmem:[#allocation9] sm:$0x1]
    %v940 = vperm.slane %v938, 0
    %vm942 = vcmask 517120
    %943 = vst.msk [vmem:[#allocation2] sm:$0x3] %vm942, %v940
    %944 = vst.msk [vmem:[#allocation2 + $0x2] sm:$0xf] %vm896, %v937
    %v945 = vld [vmem:[#allocation2] sm:$0x3f]
    %v946 = vld [vmem:[%s5] sm:$0x3f]
    %v947 = vld [vmem:[#allocation11] sm:$0x1]
    %v948 = vmul.f32 %v945, %v945
    %vm949 = vcmask 521216
    %v950 = vsel %vm949, %v948, 0.0
    %951 = vadd.xlane.f32.xlu0 %v950
    %v952 = vpop.xlane.xlu0 %951
    %v953 = vmul.f32 %v952, %v906
    %v954 = vadd.f32 %v953, 1e-06
    %v955 = vrsqrt.pop %v954
    %v956 = vmul.f32 %v955, %v954
    %v957 = vmul.f32 %v956, %v955
    %v958 = vmul.f32 0.5, %v957
    %v959 = vsub.f32 1.5, %v958
    %v960 = vmul.f32 %v955, %v959
    %vm961 = vweird.f32 %v954
    %vm962 = vweird.f32 %v955
    %vm963 = vmor %vm961, %vm962
    %v964 = vsel %vm963, %v955, %v960
    %v965 = vmul.f32 %v945, %v964
    %v967 = vperm.slane %v947, 0
    %v969 = vmul.f32 %v965, %v967
    %v970 = vpack.c.bf16 %v969, %v969
    %v971 = vld [vmem:[%s29] sm:$0xff]
    %v972 = vld [vmem:[%s29 + $0x8] sm:$0xff]
    %v973 = vld [vmem:[%s29 + $0x10] sm:$0xff]
    %v974 = vld [vmem:[%s29 + $0x18] sm:$0xff]
    %v975 = vld [vmem:[%s29 + $0x20] sm:$0xff]
    %v976 = vld [vmem:[%s29 + $0x28] sm:$0xff]
    %v977 = vld [vmem:[%s29 + $0x30] sm:$0xff]
    %v978 = vld [vmem:[%s29 + $0x38] sm:$0xff]
    %v987 = vunpack.c.l.b16 %v971
    %v988 = vunpack.c.h.b16 %v971
    %v989 = vunpack.c.l.b16 %v972
    %v990 = vunpack.c.h.b16 %v972
    %v991 = vunpack.c.l.b16 %v973
    %v992 = vunpack.c.h.b16 %v973
    %v993 = vunpack.c.l.b16 %v974
    %v994 = vunpack.c.h.b16 %v974
    %v995 = vunpack.c.l.b16 %v975
    %v996 = vunpack.c.h.b16 %v975
    %v997 = vunpack.c.l.b16 %v976
    %v998 = vunpack.c.h.b16 %v976
    %v999 = vunpack.c.l.b16 %v977
    %v1000 = vunpack.c.h.b16 %v977
    %v1001 = vunpack.c.l.b16 %v978
    %v1002 = vunpack.c.h.b16 %v978
    %v1003 = vpack.c.b16 %v989, %v987
    %v1004 = vpack.c.b16 %v990, %v988
    %v1005 = vpack.c.b16 %v993, %v991
    %v1006 = vpack.c.b16 %v994, %v992
    %v1007 = vpack.c.b16 %v997, %v995
    %v1008 = vpack.c.b16 %v998, %v996
    %v1009 = vpack.c.b16 %v1001, %v999
    %v1010 = vpack.c.b16 %v1002, %v1000
    %vm1019 = vcmask 523264
    %v1021 = vsel %vm1019, %v970, 0
    %1023 = vmatpush.bf16.msra.mxu0 0
    %1024 = vmatpush.bf16.msra.mxu0 0
    %1025 = vmatpush.bf16.msra.mxu0 0
    %1026 = vmatpush.bf16.msra.mxu0 0
    %1027 = vmatpush.bf16.msra.mxu0 %v1009
    %1028 = vmatpush.bf16.msra.mxu0 %v1007
    %1029 = vmatpush.bf16.msra.mxu0 %v1005
    %1030 = vmatpush.bf16.msra.mxu0 %v1003
    %1031 = vmatmul.bf16.gmra.mxu0 %v1021
    %v1032 = vpop.f32.mrf.mxu0
    %v1033 = vadd.f32 0.0, %v1032
    %v1034 = vpop.f32.mrf.mxu0
    %1035 = vdwg.mxu0
    %1036 = vmatpush.bf16.msra.mxu0 0
    %1037 = vmatpush.bf16.msra.mxu0 0
    %1038 = vmatpush.bf16.msra.mxu0 0
    %1039 = vmatpush.bf16.msra.mxu0 0
    %1040 = vmatpush.bf16.msra.mxu0 %v1010
    %1041 = vmatpush.bf16.msra.mxu0 %v1008
    %1042 = vmatpush.bf16.msra.mxu0 %v1006
    %1043 = vmatpush.bf16.msra.mxu0 %v1004
    %1044 = vmatmul.bf16.gmra.mxu0 %v1021
    %v1045 = vpop.f32.mrf.mxu0
    %v1046 = vadd.f32 0.0, %v1045
    %v1047 = vpop.f32.mrf.mxu0
    %1048 = vdwg.mxu0
    %v1049 = vmul.f32 %v1033, 0.17677669
    %v1050 = vpack.c.bf16 %v1049, %v1049
    %v1051 = vpack.c.bf16 %v1033, %v1033
    %v1052 = vpack.c.bf16 %v1046, %v1046
    %v1054 = vunpack.c.l.b16 %v1051
    %v1055 = vpack.c.b16 %v1054, %v1054
    %1056 = vrot.lane.b32.xlu0 %v1055, 64
    %v1057 = vpop.permute.xlu0 %1056
    %v1059 = vsel %vm787, %v1050, 0
    %v1062 = vsel %vm787, %v1057, 0
    %1064 = vmatpush.bf16.xpose.msra.mxu0 0
    %1065 = vmatpush.bf16.xpose.msra.mxu0 0
    %1066 = vmatpush.bf16.xpose.msra.mxu0 0
    %1067 = vmatpush.bf16.xpose.msra.mxu0 0
    %1068 = vmatpush.bf16.xpose.msra.mxu0 0
    %1069 = vmatpush.bf16.xpose.msra.mxu0 0
    %1070 = vmatpush.bf16.xpose.msra.mxu0 0
    %1071 = vmatpush.bf16.xpose.msra.mxu0 %v1062
    %1072 = vmatmul.bf16.gmra.mxu0 %v1059
    %v1073 = vpop.f32.mrf.mxu0
    %v1074 = vadd.f32 %v946, %v1073
    %v1075 = vpop.f32.mrf.mxu0
    %1076 = vdwg.mxu0
    %vm1077 = vcmask 46080
    %v1078 = vsel %vm1077, %v1074, -inf
    %1079 = vmax.xlane.f32.xlu0 %v1078
    %v1080 = vpop.xlane.xlu0 %1079
    %v1081 = vsub.f32 %v1074, %v1080
    %v1082 = vmul.f32 %v1081, 1.442695
    %v1083 = vpow.pop %v1082
    %v1084 = vsel %vm1077, %v1083, 0.0
    %1085 = vadd.xlane.f32.xlu0 %v1084
    %v1086 = vpop.xlane.xlu0 %1085
    %v1087 = vrcp.pop %v1086
    %v1088 = vmul.f32 %v1083, %v1087
    %v1089 = vpack.c.bf16 %v1088, %v1088
    %vm1090 = vcmask 48128
    %v1092 = vsel %vm1090, %v1089, 0
    %vm1094 = vcmask 1042432
    %v1096 = vsel %vm1094, %v1052, 0
    %1098 = vmatpush.bf16.msra.mxu0 0
    %1099 = vmatpush.bf16.msra.mxu0 0
    %1100 = vmatpush.bf16.msra.mxu0 0
    %1101 = vmatpush.bf16.msra.mxu0 0
    %1102 = vmatpush.bf16.msra.mxu0 0
    %1103 = vmatpush.bf16.msra.mxu0 0
    %1104 = vmatpush.bf16.msra.mxu0 0
    %1105 = vmatpush.bf16.msra.mxu0 %v1096
    %1106 = vmatmul.bf16.gmra.mxu0 %v1092
    %v1107 = vpop.f32.mrf.mxu0
    %v1108 = vadd.f32 0.0, %v1107
    %v1109 = vpop.f32.mrf.mxu0
    %1110 = vdwg.mxu0
    %v1111 = vpack.c.bf16 %v1108, %v1108
    %v1112 = vld [vmem:[#allocation12] sm:$0xf]
    %v1113 = vld [vmem:[#allocation12 + $0x4] sm:$0xf]
    %v1114 = vld [vmem:[#allocation12 + $0x8] sm:$0xf]
    %v1115 = vld [vmem:[#allocation12 + $0xc] sm:$0xf]
    %v1117 = vunpack.c.l.b16 %v1050
    %v1118 = vpack.c.b16 %v1117, %v1117
    %1119 = vrot.lane.b32.xlu0 %v1118, 96
    %v1120 = vpop.permute.xlu0 %1119
    %1121 = vrot.lane.b32.xlu0 %v1055, 32
    %v1122 = vpop.permute.xlu0 %1121
    %v1124 = vsel %vm787, %v1120, 0
    %v1127 = vsel %vm787, %v1122, 0
    %1129 = vmatpush.bf16.xpose.msra.mxu0 0
    %1130 = vmatpush.bf16.xpose.msra.mxu0 0
    %1131 = vmatpush.bf16.xpose.msra.mxu0 0
    %1132 = vmatpush.bf16.xpose.msra.mxu0 0
    %1133 = vmatpush.bf16.xpose.msra.mxu0 0
    %1134 = vmatpush.bf16.xpose.msra.mxu0 0
    %1135 = vmatpush.bf16.xpose.msra.mxu0 0
    %1136 = vmatpush.bf16.xpose.msra.mxu0 %v1127
    %1137 = vmatmul.bf16.gmra.mxu0 %v1124
    %v1138 = vpop.f32.mrf.mxu0
    %v1139 = vadd.f32 %v946, %v1138
    %v1140 = vpop.f32.mrf.mxu0
    %1141 = vdwg.mxu0
    %v1142 = vsel %vm1077, %v1139, -inf
    %1143 = vmax.xlane.f32.xlu0 %v1142
    %v1144 = vpop.xlane.xlu0 %1143
    %v1145 = vsub.f32 %v1139, %v1144
    %v1146 = vmul.f32 %v1145, 1.442695
    %v1147 = vpow.pop %v1146
    %v1148 = vsel %vm1077, %v1147, 0.0
    %1149 = vadd.xlane.f32.xlu0 %v1148
    %v1150 = vpop.xlane.xlu0 %1149
    %v1151 = vrcp.pop %v1150
    %v1152 = vmul.f32 %v1147, %v1151
    %v1153 = vpack.c.bf16 %v1152, %v1152
    %v1155 = vunpack.c.l.b16 %v1052
    %v1156 = vpack.c.b16 %v1155, %v1155
    %1157 = vrot.lane.b32.xlu0 %v1156, 96
    %v1158 = vpop.permute.xlu0 %1157
    %v1160 = vsel %vm1090, %v1153, 0
    %v1163 = vsel %vm1094, %v1158, 0
    %1165 = vmatpush.bf16.msra.mxu0 0
    %1166 = vmatpush.bf16.msra.mxu0 0
    %1167 = vmatpush.bf16.msra.mxu0 0
    %1168 = vmatpush.bf16.msra.mxu0 0
    %1169 = vmatpush.bf16.msra.mxu0 0
    %1170 = vmatpush.bf16.msra.mxu0 0
    %1171 = vmatpush.bf16.msra.mxu0 0
    %1172 = vmatpush.bf16.msra.mxu0 %v1163
    %1173 = vmatmul.bf16.gmra.mxu0 %v1160
    %v1174 = vpop.f32.mrf.mxu0
    %v1175 = vadd.f32 0.0, %v1174
    %v1176 = vpop.f32.mrf.mxu0
    %1177 = vdwg.mxu0
    %v1178 = vpack.c.bf16 %v1175, %v1175
    %v1179 = vld [vmem:[#allocation12 + $0x10] sm:$0xf]
    %v1180 = vld [vmem:[#allocation12 + $0x14] sm:$0xf]
    %v1181 = vld [vmem:[#allocation12 + $0x18] sm:$0xf]
    %v1182 = vld [vmem:[#allocation12 + $0x1c] sm:$0xf]
    %v1187 = vunpack.c.l.b16 %v1179
    %v1188 = vunpack.c.l.b16 %v1180
    %v1189 = vunpack.c.l.b16 %v1181
    %v1190 = vunpack.c.l.b16 %v1182
    %v1191 = vpack.c.b16 %v1188, %v1187
    %v1192 = vpack.c.b16 %v1190, %v1189
    %v1196 = vsel %vm787, %v1178, 0
    %1198 = vmatpush.bf16.msra.mxu0 0
    %1199 = vmatpush.bf16.msra.mxu0 0
    %1200 = vmatpush.bf16.msra.mxu0 0
    %1201 = vmatpush.bf16.msra.mxu0 0
    %1202 = vmatpush.bf16.msra.mxu0 0
    %1203 = vmatpush.bf16.msra.mxu0 0
    %1204 = vmatpush.bf16.msra.mxu0 %v1192
    %1205 = vmatpush.bf16.msra.mxu0 %v1191
    %1206 = vmatmul.bf16.gmra.mxu0 %v1196
    %v1207 = vpop.f32.mrf.mxu0
    %v1208 = vadd.f32 0.0, %v1207
    %v1209 = vpop.f32.mrf.mxu0
    %1210 = vdwg.mxu0
    %v1215 = vunpack.c.l.b16 %v1112
    %v1216 = vunpack.c.l.b16 %v1113
    %v1217 = vunpack.c.l.b16 %v1114
    %v1218 = vunpack.c.l.b16 %v1115
    %v1219 = vpack.c.b16 %v1216, %v1215
    %v1220 = vpack.c.b16 %v1218, %v1217
    %v1224 = vsel %vm787, %v1111, 0
    %1226 = vmatpush.bf16.msra.mxu0 0
    %1227 = vmatpush.bf16.msra.mxu0 0
    %1228 = vmatpush.bf16.msra.mxu0 0
    %1229 = vmatpush.bf16.msra.mxu0 0
    %1230 = vmatpush.bf16.msra.mxu0 0
    %1231 = vmatpush.bf16.msra.mxu0 0
    %1232 = vmatpush.bf16.msra.mxu0 %v1220
    %1233 = vmatpush.bf16.msra.mxu0 %v1219
    %1234 = vmatmul.bf16.gmra.mxu0 %v1224
    %v1235 = vpop.f32.mrf.mxu0
    %v1236 = vadd.f32 %v1208, %v1235
    %v1237 = vpop.f32.mrf.mxu0
    %1238 = vdwg.mxu0
    %v1239 = vadd.f32 %v945, %v1236
    %v1240 = vld [vmem:[#allocation14] sm:$0x1]
    %v1241 = vmul.f32 %v1239, %v1239
    %v1242 = vsel %vm949, %v1241, 0.0
    %1243 = vadd.xlane.f32.xlu0 %v1242
    %v1244 = vpop.xlane.xlu0 %1243
    %v1245 = vmul.f32 %v1244, %v906
    %v1246 = vadd.f32 %v1245, 1e-06
    %v1247 = vrsqrt.pop %v1246
    %v1248 = vmul.f32 %v1247, %v1246
    %v1249 = vmul.f32 %v1248, %v1247
    %v1250 = vmul.f32 0.5, %v1249
    %v1251 = vsub.f32 1.5, %v1250
    %v1252 = vmul.f32 %v1247, %v1251
    %vm1253 = vweird.f32 %v1246
    %vm1254 = vweird.f32 %v1247
    %vm1255 = vmor %vm1253, %vm1254
    %v1256 = vsel %vm1255, %v1247, %v1252
    %v1257 = vmul.f32 %v1239, %v1256
    %v1259 = vperm.slane %v1240, 0
    %v1261 = vmul.f32 %v1257, %v1259
    %v1262 = vpack.c.bf16 %v1261, %v1261
    %v1263 = vld [vmem:[#allocation15] sm:$0xf]
    %v1264 = vld [vmem:[#allocation15 + $0x4] sm:$0xf]
    %v1265 = vld [vmem:[#allocation15 + $0x8] sm:$0xf]
    %v1266 = vld [vmem:[#allocation15 + $0xc] sm:$0xf]
    %v1267 = vld [vmem:[#allocation15 + $0x10] sm:$0xf]
    %v1268 = vld [vmem:[#allocation15 + $0x14] sm:$0xf]
    %v1269 = vld [vmem:[#allocation15 + $0x18] sm:$0xf]
    %v1270 = vld [vmem:[#allocation15 + $0x1c] sm:$0xf]
    %v1271 = vld [vmem:[#allocation17] sm:$0x1]
    %v1273 = vperm.slane %v1271, 0
    %v1283 = vunpack.c.l.b16 %v1263
    %v1284 = vunpack.c.l.b16 %v1264
    %v1285 = vunpack.c.l.b16 %v1265
    %v1286 = vunpack.c.l.b16 %v1266
    %v1287 = vunpack.c.l.b16 %v1267
    %v1288 = vunpack.c.l.b16 %v1268
    %v1289 = vunpack.c.l.b16 %v1269
    %v1290 = vunpack.c.l.b16 %v1270
    %v1291 = vpack.c.b16 %v1284, %v1283
    %v1292 = vpack.c.b16 %v1286, %v1285
    %v1293 = vpack.c.b16 %v1288, %v1287
    %v1294 = vpack.c.b16 %v1290, %v1289
    %v1300 = vsel %vm1019, %v1262, 0
    %1302 = vmatpush.bf16.msra.mxu0 0
    %1303 = vmatpush.bf16.msra.mxu0 0
    %1304 = vmatpush.bf16.msra.mxu0 0
    %1305 = vmatpush.bf16.msra.mxu0 0
    %1306 = vmatpush.bf16.msra.mxu0 %v1294
    %1307 = vmatpush.bf16.msra.mxu0 %v1293
    %1308 = vmatpush.bf16.msra.mxu0 %v1292
    %1309 = vmatpush.bf16.msra.mxu0 %v1291
    %1310 = vmatmul.bf16.gmra.mxu0 %v1300
    %v1311 = vpop.f32.mrf.mxu0
    %v1312 = vadd.f32 %v1273, %v1311
    %v1313 = vpop.f32.mrf.mxu0
    %1314 = vdwg.mxu0
    %v1315 = vmul.f32 %v1312, %v1312
    %v1316 = vmul.f32 %v1312, %v1315
    %v1317 = vmul.f32 %v1316, 0.044715
    %v1318 = vadd.f32 %v1312, %v1317
    %v1319 = vmul.f32 %v1318, 0.7978846
    %v1320 = vtanh.pop %v1319
    %v1321 = vadd.f32 %v1320, 1.0
    %v1322 = vmul.f32 %v1321, 0.5
    %v1323 = vmul.f32 %v1312, %v1322
    %v1324 = vpack.c.bf16 %v1323, %v1323
    %v1325 = vld [vmem:[%s39] sm:$0xf]
    %v1326 = vld [vmem:[%s39 + $0x4] sm:$0xf]
    %v1327 = vld [vmem:[%s39 + $0x8] sm:$0xf]
    %v1328 = vld [vmem:[%s39 + $0xc] sm:$0xf]
    %v1329 = vld [vmem:[%s39 + $0x10] sm:$0xf]
    %v1330 = vld [vmem:[%s39 + $0x14] sm:$0xf]
    %v1331 = vld [vmem:[%s39 + $0x18] sm:$0xf]
    %v1332 = vld [vmem:[%s39 + $0x1c] sm:$0xf]
    %v1333 = vld [vmem:[%s39 + $0x20] sm:$0xf]
    %v1334 = vld [vmem:[%s39 + $0x24] sm:$0xf]
    %v1335 = vld [vmem:[%s39 + $0x28] sm:$0xf]
    %v1336 = vld [vmem:[%s39 + $0x2c] sm:$0xf]
    %v1337 = vld [vmem:[%s39 + $0x30] sm:$0xf]
    %v1338 = vld [vmem:[%s39 + $0x34] sm:$0xf]
    %v1339 = vld [vmem:[%s39 + $0x38] sm:$0xf]
    %v1340 = vld [vmem:[%s39 + $0x3c] sm:$0xf]
    %v1357 = vunpack.c.l.b16 %v1325
    %v1358 = vunpack.c.l.b16 %v1326
    %v1359 = vunpack.c.l.b16 %v1327
    %v1360 = vunpack.c.l.b16 %v1328
    %v1361 = vunpack.c.l.b16 %v1329
    %v1362 = vunpack.c.l.b16 %v1330
    %v1363 = vunpack.c.l.b16 %v1331
    %v1364 = vunpack.c.l.b16 %v1332
    %v1365 = vunpack.c.l.b16 %v1333
    %v1366 = vunpack.c.l.b16 %v1334
    %v1367 = vunpack.c.l.b16 %v1335
    %v1368 = vunpack.c.l.b16 %v1336
    %v1369 = vunpack.c.l.b16 %v1337
    %v1370 = vunpack.c.l.b16 %v1338
    %v1371 = vunpack.c.l.b16 %v1339
    %v1372 = vunpack.c.l.b16 %v1340
    %v1373 = vpack.c.b16 %v1358, %v1357
    %v1374 = vpack.c.b16 %v1360, %v1359
    %v1375 = vpack.c.b16 %v1362, %v1361
    %v1376 = vpack.c.b16 %v1364, %v1363
    %v1377 = vpack.c.b16 %v1366, %v1365
    %v1378 = vpack.c.b16 %v1368, %v1367
    %v1379 = vpack.c.b16 %v1370, %v1369
    %v1380 = vpack.c.b16 %v1372, %v1371
    %1389 = vmatpush.bf16.msra.mxu0 %v1380
    %1390 = vmatpush.bf16.msra.mxu0 %v1379
    %1391 = vmatpush.bf16.msra.mxu0 %v1378
    %1392 = vmatpush.bf16.msra.mxu0 %v1377
    %1393 = vmatpush.bf16.msra.mxu0 %v1376
    %1394 = vmatpush.bf16.msra.mxu0 %v1375
    %1395 = vmatpush.bf16.msra.mxu0 %v1374
    %1396 = vmatpush.bf16.msra.mxu0 %v1373
    %1397 = vmatmul.bf16.gmra.mxu0 %v1324
    %v1398 = vpop.f32.mrf.mxu0
    %v1399 = vadd.f32 0.0, %v1398
    %v1400 = vpop.f32.mrf.mxu0
    %1401 = vdwg.mxu0
    %v1402 = vadd.f32 %v1239, %v1399
    %v1403 = vld [vmem:[#allocation18] sm:$0x1]
    %v1405 = vperm.slane %v1403, 0
    %v1407 = vadd.f32 %v1402, %v1405
    %v1408 = vld [vmem:[#allocation20] sm:$0x1]
    %v1409 = vmul.f32 %v1407, %v1407
    %v1410 = vsel %vm949, %v1409, 0.0
    %1411 = vadd.xlane.f32.xlu0 %v1410
    %v1412 = vpop.xlane.xlu0 %1411
    %v1413 = vmul.f32 %v1412, %v906
    %v1414 = vadd.f32 %v1413, 1e-06
    %v1415 = vrsqrt.pop %v1414
    %v1416 = vmul.f32 %v1415, %v1414
    %v1417 = vmul.f32 %v1416, %v1415
    %v1418 = vmul.f32 0.5, %v1417
    %v1419 = vsub.f32 1.5, %v1418
    %v1420 = vmul.f32 %v1415, %v1419
    %vm1421 = vweird.f32 %v1414
    %vm1422 = vweird.f32 %v1415
    %vm1423 = vmor %vm1421, %vm1422
    %v1424 = vsel %vm1423, %v1415, %v1420
    %v1425 = vmul.f32 %v1407, %v1424
    %v1427 = vperm.slane %v1408, 0
    %v1429 = vmul.f32 %v1425, %v1427
    %v1430 = vpack.c.bf16 %v1429, %v1429
    %v1431 = vld [vmem:[%s45] sm:$0xff]
    %v1432 = vld [vmem:[%s45 + $0x8] sm:$0xff]
    %v1433 = vld [vmem:[%s45 + $0x10] sm:$0xff]
    %v1434 = vld [vmem:[%s45 + $0x18] sm:$0xff]
    %v1435 = vld [vmem:[%s45 + $0x20] sm:$0xff]
    %v1436 = vld [vmem:[%s45 + $0x28] sm:$0xff]
    %v1437 = vld [vmem:[%s45 + $0x30] sm:$0xff]
    %v1438 = vld [vmem:[%s45 + $0x38] sm:$0xff]
    %v1439 = vld [vmem:[%s47] sm:$0x3]
    %v1441 = vperm.slane %v1439, 0
    %v1442 = vperm.slane %v1439, 1
    %v1453 = vunpack.c.l.b16 %v1431
    %v1454 = vunpack.c.h.b16 %v1431
    %v1455 = vunpack.c.l.b16 %v1432
    %v1456 = vunpack.c.h.b16 %v1432
    %v1457 = vunpack.c.l.b16 %v1433
    %v1458 = vunpack.c.h.b16 %v1433
    %v1459 = vunpack.c.l.b16 %v1434
    %v1460 = vunpack.c.h.b16 %v1434
    %v1461 = vunpack.c.l.b16 %v1435
    %v1462 = vunpack.c.h.b16 %v1435
    %v1463 = vunpack.c.l.b16 %v1436
    %v1464 = vunpack.c.h.b16 %v1436
    %v1465 = vunpack.c.l.b16 %v1437
    %v1466 = vunpack.c.h.b16 %v1437
    %v1467 = vunpack.c.l.b16 %v1438
    %v1468 = vunpack.c.h.b16 %v1438
    %v1469 = vpack.c.b16 %v1455, %v1453
    %v1470 = vpack.c.b16 %v1456, %v1454
    %v1471 = vpack.c.b16 %v1459, %v1457
    %v1472 = vpack.c.b16 %v1460, %v1458
    %v1473 = vpack.c.b16 %v1463, %v1461
    %v1474 = vpack.c.b16 %v1464, %v1462
    %v1475 = vpack.c.b16 %v1467, %v1465
    %v1476 = vpack.c.b16 %v1468, %v1466
    %v1486 = vsel %vm1019, %v1430, 0
    %1488 = vmatpush.bf16.msra.mxu0 0
    %1489 = vmatpush.bf16.msra.mxu0 0
    %1490 = vmatpush.bf16.msra.mxu0 0
    %1491 = vmatpush.bf16.msra.mxu0 0
    %1492 = vmatpush.bf16.msra.mxu0 %v1475
    %1493 = vmatpush.bf16.msra.mxu0 %v1473
    %1494 = vmatpush.bf16.msra.mxu0 %v1471
    %1495 = vmatpush.bf16.msra.mxu0 %v1469
    %1496 = vmatmul.bf16.gmra.mxu0 %v1486
    %v1497 = vpop.f32.mrf.mxu0
    %v1498 = vadd.f32 %v1441, %v1497
    %v1499 = vpop.f32.mrf.mxu0
    %1500 = vdwg.mxu0
    %1501 = vmatpush.bf16.msra.mxu0 0
    %1502 = vmatpush.bf16.msra.mxu0 0
    %1503 = vmatpush.bf16.msra.mxu0 0
    %1504 = vmatpush.bf16.msra.mxu0 0
    %1505 = vmatpush.bf16.msra.mxu0 %v1476
    %1506 = vmatpush.bf16.msra.mxu0 %v1474
    %1507 = vmatpush.bf16.msra.mxu0 %v1472
    %1508 = vmatpush.bf16.msra.mxu0 %v1470
    %1509 = vmatmul.bf16.gmra.mxu0 %v1486
    %v1510 = vpop.f32.mrf.mxu0
    %v1511 = vadd.f32 %v1442, %v1510
    %v1512 = vpop.f32.mrf.mxu0
    %1513 = vdwg.mxu0
    %1515 = vrot.lane.b32.xlu0 %v1498, 64
    %v1516 = vpop.permute.xlu0 %1515
    %v1518 = vadd.f32 %v777, %v1516
    %v1519 = vld [vmem:[%s11] sm:$0x1]
    %v1520 = vperm.slane %v1519, 0
    %1522 = vrot.lane.b32.xlu0 %v1520, 64
    %v1523 = vpop.permute.xlu0 %1522
    %v1525 = vadd.f32 %v1518, %v1523
    %1527 = vrot.lane.b32.xlu0 %v1525, 64
    %v1528 = vpop.permute.xlu0 %1527
    %1530 = vst.msk [vmem:[#allocation3] sm:$0xf] %vm815, %v1528
    %v1531 = vrot.slane %v1498, 4
    %1532 = vrot.lane.b32.xlu0 %v1531, 32
    %v1533 = vpop.permute.xlu0 %1532
    %v1535 = vadd.f32 %v777, %v1533
    %v1536 = vld [vmem:[%s11 + $0x1] sm:$0x1]
    %v1537 = vperm.slane %v1536, 0
    %1539 = vrot.lane.b32.xlu0 %v1537, 64
    %v1540 = vpop.permute.xlu0 %1539
    %v1542 = vadd.f32 %v1535, %v1540
    %1544 = vrot.lane.b32.xlu0 %v1542, 64
    %v1545 = vpop.permute.xlu0 %1544
    %vm1547 = vcmask 261124
    %1548 = vst.msk [vmem:[#allocation3] sm:$0xf0] %vm1547, %v1545
    %v1549 = vadd.f32 %v779, %v1498
    %v1550 = vld [vmem:[%s11 + $0x2] sm:$0x1]
    %v1551 = vperm.slane %v1550, 0
    %1553 = vrot.lane.b32.xlu0 %v1551, 64
    %v1554 = vpop.permute.xlu0 %1553
    %v1556 = vadd.f32 %v1549, %v1554
    %1558 = vrot.lane.b32.xlu0 %v1556, 64
    %v1559 = vpop.permute.xlu0 %1558
    %1561 = vst.msk [vmem:[#allocation3 + $0x8] sm:$0xf] %vm815, %v1559
    %1562 = vrot.lane.b32.xlu0 %v1531, 96
    %v1563 = vpop.permute.xlu0 %1562
    %v1565 = vadd.f32 %v779, %v1563
    %v1566 = vld [vmem:[%s11 + $0x3] sm:$0x1]
    %v1567 = vperm.slane %v1566, 0
    %1569 = vrot.lane.b32.xlu0 %v1567, 64
    %v1570 = vpop.permute.xlu0 %1569
    %v1572 = vadd.f32 %v1565, %v1570
    %1574 = vrot.lane.b32.xlu0 %v1572, 64
    %v1575 = vpop.permute.xlu0 %1574
    %1577 = vst.msk [vmem:[#allocation3 + $0x8] sm:$0xf0] %vm1547, %v1575
    %1579 = vrot.lane.b32.xlu0 %v1511, 64
    %v1580 = vpop.permute.xlu0 %1579
    %v1582 = vadd.f32 %v782, %v1580
    %v1583 = vld [vmem:[%s11 + $0x4] sm:$0x1]
    %v1584 = vperm.slane %v1583, 0
    %1586 = vrot.lane.b32.xlu0 %v1584, 64
    %v1587 = vpop.permute.xlu0 %1586
    %v1589 = vadd.f32 %v1582, %v1587
    %1591 = vrot.lane.b32.xlu0 %v1589, 64
    %v1592 = vpop.permute.xlu0 %1591
    %1594 = vst.msk [vmem:[#allocation3 + $0x10] sm:$0xf] %vm815, %v1592
    %v1595 = vrot.slane %v1511, 4
    %1596 = vrot.lane.b32.xlu0 %v1595, 32
    %v1597 = vpop.permute.xlu0 %1596
    %v1599 = vadd.f32 %v782, %v1597
    %v1600 = vld [vmem:[%s11 + $0x5] sm:$0x1]
    %v1601 = vperm.slane %v1600, 0
    %1603 = vrot.lane.b32.xlu0 %v1601, 64
    %v1604 = vpop.permute.xlu0 %1603
    %v1606 = vadd.f32 %v1599, %v1604
    %1608 = vrot.lane.b32.xlu0 %v1606, 64
    %v1609 = vpop.permute.xlu0 %1608
    %1611 = vst.msk [vmem:[#allocation3 + $0x10] sm:$0xf0] %vm1547, %v1609
    %v1612 = vadd.f32 %v784, %v1511
    %v1613 = vld [vmem:[%s11 + $0x6] sm:$0x1]
    %v1614 = vperm.slane %v1613, 0
    %1616 = vrot.lane.b32.xlu0 %v1614, 64
    %v1617 = vpop.permute.xlu0 %1616
    %v1619 = vadd.f32 %v1612, %v1617
    %1621 = vrot.lane.b32.xlu0 %v1619, 64
    %v1622 = vpop.permute.xlu0 %1621
    %1624 = vst.msk [vmem:[#allocation3 + $0x18] sm:$0xf] %vm815, %v1622
    %1625 = vrot.lane.b32.xlu0 %v1595, 96
    %v1626 = vpop.permute.xlu0 %1625
    %v1628 = vadd.f32 %v784, %v1626
    %v1629 = vld [vmem:[%s11 + $0x7] sm:$0x1]
    %v1630 = vperm.slane %v1629, 0
    %1632 = vrot.lane.b32.xlu0 %v1630, 64
    %v1633 = vpop.permute.xlu0 %1632
    %v1635 = vadd.f32 %v1628, %v1633
    %1637 = vrot.lane.b32.xlu0 %v1635, 64
    %v1638 = vpop.permute.xlu0 %1637
    %1640 = vst.msk [vmem:[#allocation3 + $0x18] sm:$0xf0] %vm1547, %v1638
    %v1641 = vld [vmem:[%s25] sm:$0x1]
    %v1643 = vperm.slane %v1641, 0
    %1645 = vst.msk [vmem:[#allocation3 + $0x20] sm:$0xf] %vm815, %v1643
    %v1646 = vld [vmem:[#allocation3] sm:$0xff]
    %v1647 = vld [vmem:[#allocation3 + $0x8] sm:$0xff]
    %v1648 = vld [vmem:[#allocation3 + $0x10] sm:$0xff]
    %v1649 = vld [vmem:[#allocation3 + $0x18] sm:$0xff]
    %v1650 = vld [vmem:[#allocation3 + $0x20] sm:$0xf]
    %v1651 = vld [vmem:[%s7] sm:$0xff]
    %v1652 = vld [vmem:[%s7 + $0x8] sm:$0xff]
    %v1653 = vld [vmem:[%s7 + $0x10] sm:$0xff]
    %v1654 = vld [vmem:[%s7 + $0x18] sm:$0xff]
    %v1655 = vld [vmem:[%s7 + $0x20] sm:$0xf]
    %v1656 = vld [vmem:[#allocation21] sm:$0x1]
    %v1657 = vmul.f32 %v1646, %v1646
    %v1658 = vmul.f32 %v1647, %v1647
    %v1659 = vmul.f32 %v1648, %v1648
    %v1660 = vmul.f32 %v1649, %v1649
    %v1661 = vmul.f32 %v1650, %v1650
    %v1662 = vsel %vm787, %v1657, 0.0
    %1663 = vadd.xlane.f32.xlu0 %v1662
    %v1664 = vpop.xlane.xlu0 %1663
    %v1665 = vsel %vm787, %v1658, 0.0
    %1666 = vadd.xlane.f32.xlu0 %v1665
    %v1667 = vpop.xlane.xlu0 %1666
    %v1668 = vsel %vm787, %v1659, 0.0
    %1669 = vadd.xlane.f32.xlu0 %v1668
    %v1670 = vpop.xlane.xlu0 %1669
    %v1671 = vsel %vm787, %v1660, 0.0
    %1672 = vadd.xlane.f32.xlu0 %v1671
    %v1673 = vpop.xlane.xlu0 %1672
    %v1674 = vsel %vm815, %v1661, 0.0
    %1675 = vadd.xlane.f32.xlu0 %v1674
    %v1676 = vpop.xlane.xlu0 %1675
    %v1677 = vrcp.pop 32.0
    %v1678 = vmul.f32 32.0, %v1677
    %v1679 = vsub.f32 1.0, %v1678
    %v1680 = vmul.f32 %v1677, %v1679
    %v1681 = vadd.f32 %v1677, %v1680
    %vm1682 = vweird.f32 %v1677
    %v1683 = vsel %vm1682, %v1677, %v1681
    %v1684 = vmul.f32 %v1664, %v1683
    %v1685 = vmul.f32 %v1667, %v1683
    %v1686 = vmul.f32 %v1670, %v1683
    %v1687 = vmul.f32 %v1673, %v1683
    %v1688 = vmul.f32 %v1676, %v1683
    %v1689 = vadd.f32 %v1684, 1e-06
    %v1690 = vadd.f32 %v1685, 1e-06
    %v1691 = vadd.f32 %v1686, 1e-06
    %v1692 = vadd.f32 %v1687, 1e-06
    %v1693 = vadd.f32 %v1688, 1e-06
    %v1694 = vrsqrt.pop %v1689
    %v1695 = vmul.f32 %v1694, %v1689
    %v1696 = vmul.f32 %v1695, %v1694
    %v1697 = vmul.f32 0.5, %v1696
    %v1698 = vsub.f32 1.5, %v1697
    %v1699 = vmul.f32 %v1694, %v1698
    %vm1700 = vweird.f32 %v1689
    %vm1701 = vweird.f32 %v1694
    %vm1702 = vmor %vm1700, %vm1701
    %v1703 = vsel %vm1702, %v1694, %v1699
    %v1704 = vrsqrt.pop %v1690
    %v1705 = vmul.f32 %v1704, %v1690
    %v1706 = vmul.f32 %v1705, %v1704
    %v1707 = vmul.f32 0.5, %v1706
    %v1708 = vsub.f32 1.5, %v1707
    %v1709 = vmul.f32 %v1704, %v1708
    %vm1710 = vweird.f32 %v1690
    %vm1711 = vweird.f32 %v1704
    %vm1712 = vmor %vm1710, %vm1711
    %v1713 = vsel %vm1712, %v1704, %v1709
    %v1714 = vrsqrt.pop %v1691
    %v1715 = vmul.f32 %v1714, %v1691
    %v1716 = vmul.f32 %v1715, %v1714
    %v1717 = vmul.f32 0.5, %v1716
    %v1718 = vsub.f32 1.5, %v1717
    %v1719 = vmul.f32 %v1714, %v1718
    %vm1720 = vweird.f32 %v1691
    %vm1721 = vweird.f32 %v1714
    %vm1722 = vmor %vm1720, %vm1721
    %v1723 = vsel %vm1722, %v1714, %v1719
    %v1724 = vrsqrt.pop %v1692
    %v1725 = vmul.f32 %v1724, %v1692
    %v1726 = vmul.f32 %v1725, %v1724
    %v1727 = vmul.f32 0.5, %v1726
    %v1728 = vsub.f32 1.5, %v1727
    %v1729 = vmul.f32 %v1724, %v1728
    %vm1730 = vweird.f32 %v1692
    %vm1731 = vweird.f32 %v1724
    %vm1732 = vmor %vm1730, %vm1731
    %v1733 = vsel %vm1732, %v1724, %v1729
    %v1734 = vrsqrt.pop %v1693
    %v1735 = vmul.f32 %v1734, %v1693
    %v1736 = vmul.f32 %v1735, %v1734
    %v1737 = vmul.f32 0.5, %v1736
    %v1738 = vsub.f32 1.5, %v1737
    %v1739 = vmul.f32 %v1734, %v1738
    %vm1740 = vweird.f32 %v1693
    %vm1741 = vweird.f32 %v1734
    %vm1742 = vmor %vm1740, %vm1741
    %v1743 = vsel %vm1742, %v1734, %v1739
    %v1744 = vmul.f32 %v1646, %v1703
    %v1745 = vmul.f32 %v1647, %v1713
    %v1746 = vmul.f32 %v1648, %v1723
    %v1747 = vmul.f32 %v1649, %v1733
    %v1748 = vmul.f32 %v1650, %v1743
    %v1750 = vperm.slane %v1656, 0
    %v1752 = vmul.f32 %v1744, %v1750
    %v1753 = vmul.f32 %v1745, %v1750
    %v1754 = vmul.f32 %v1746, %v1750
    %v1755 = vmul.f32 %v1747, %v1750
    %v1756 = vmul.f32 %v1748, %v1750
    %v1757 = vpack.c.bf16 %v1753, %v1752
    %v1758 = vpack.c.bf16 %v1755, %v1754
    %v1759 = vpack.c.bf16 %v1756, %v1756
    %v1760 = vld [vmem:[%s51] sm:$0xf]
    %v1761 = vld [vmem:[%s51 + $0x4] sm:$0xf]
    %v1762 = vld [vmem:[%s51 + $0x8] sm:$0xf]
    %v1763 = vld [vmem:[%s51 + $0xc] sm:$0xf]
    %v1768 = vunpack.c.l.b16 %v1760
    %v1769 = vunpack.c.l.b16 %v1761
    %v1770 = vunpack.c.l.b16 %v1762
    %v1771 = vunpack.c.l.b16 %v1763
    %v1772 = vpack.c.b16 %v1769, %v1768
    %v1773 = vpack.c.b16 %v1771, %v1770
    %v1777 = vsel %vm787, %v1757, 0
    %v1780 = vsel %vm787, %v1758, 0
    %v1783 = vsel %vm787, %v1759, 0
    %1785 = vmatpush.bf16.msra.mxu0 0
    %1786 = vmatpush.bf16.msra.mxu0 0
    %1787 = vmatpush.bf16.msra.mxu0 0
    %1788 = vmatpush.bf16.msra.mxu0 0
    %1789 = vmatpush.bf16.msra.mxu0 0
    %1790 = vmatpush.bf16.msra.mxu0 0
    %1791 = vmatpush.bf16.msra.mxu0 %v1773
    %1792 = vmatpush.bf16.msra.mxu0 %v1772
    %1793 = vmatmul.bf16.gmra.mxu0 %v1777
    %v1794 = vpop.f32.mrf.mxu0
    %v1795 = vadd.f32 0.0, %v1794
    %v1796 = vpop.f32.mrf.mxu0
    %v1797 = vadd.f32 0.0, %v1796
    %1798 = vmatmul.bf16.gmra.mxu0 %v1780
    %v1799 = vpop.f32.mrf.mxu0
    %v1800 = vadd.f32 0.0, %v1799
    %v1801 = vpop.f32.mrf.mxu0
    %v1802 = vadd.f32 0.0, %v1801
    %1803 = vmatmul.bf16.gmra.mxu0 %v1783
    %v1804 = vpop.f32.mrf.mxu0
    %v1805 = vadd.f32 0.0, %v1804
    %v1806 = vpop.f32.mrf.mxu0
    %1807 = vdwg.mxu0
    %v1808 = vmul.f32 %v1795, 0.25
    %v1809 = vmul.f32 %v1797, 0.25
    %v1810 = vmul.f32 %v1800, 0.25
    %v1811 = vmul.f32 %v1802, 0.25
    %v1812 = vmul.f32 %v1805, 0.25
    %v1813 = vpack.c.bf16 %v1808, %v1808
    %v1814 = vpack.c.bf16 %v1809, %v1809
    %v1815 = vpack.c.bf16 %v1810, %v1810
    %v1816 = vpack.c.bf16 %v1811, %v1811
    %v1817 = vpack.c.bf16 %v1812, %v1812
    %v1818 = vpack.c.bf16 %v1795, %v1795
    %v1819 = vpack.c.bf16 %v1797, %v1797
    %v1820 = vpack.c.bf16 %v1800, %v1800
    %v1821 = vpack.c.bf16 %v1802, %v1802
    %v1822 = vpack.c.bf16 %v1805, %v1805
    %v1828 = vunpack.c.l.b16 %v1813
    %v1829 = vunpack.c.l.b16 %v1814
    %v1830 = vunpack.c.l.b16 %v1815
    %v1831 = vunpack.c.l.b16 %v1816
    %v1832 = vunpack.c.l.b16 %v1817
    %v1833 = vpack.c.b16 %v1829, %v1828
    %v1834 = vpack.c.b16 %v1831, %v1830
    %v1835 = vpack.c.b16 %v1832, %v1832
    %v1841 = vunpack.c.l.b16 %v1818
    %v1842 = vunpack.c.l.b16 %v1819
    %v1843 = vunpack.c.l.b16 %v1820
    %v1844 = vunpack.c.l.b16 %v1821
    %v1845 = vunpack.c.l.b16 %v1822
    %v1846 = vpack.c.b16 %v1842, %v1841
    %v1847 = vpack.c.b16 %v1844, %v1843
    %v1848 = vpack.c.b16 %v1845, %v1845
    %1849 = vrot.lane.b32.xlu0 %v1846, 96
    %v1850 = vpop.permute.xlu0 %1849
    %1851 = vrot.lane.b32.xlu0 %v1847, 96
    %v1852 = vpop.permute.xlu0 %1851
    %1853 = vrot.lane.b32.xlu0 %v1848, 96
    %v1854 = vpop.permute.xlu0 %1853
    %vm1855 = vcmask 130048
    %v1857 = vsel %vm1855, %v1833, 0
    %v1860 = vsel %vm1855, %v1834, 0
    %v1863 = vsel %vm1855, %v1835, 0
    %v1866 = vsel %vm1855, %v1850, 0
    %v1869 = vsel %vm1855, %v1852, 0
    %v1872 = vsel %vm1855, %v1854, 0
    %1874 = vmatpush.bf16.xpose.msra.mxu0 0
    %1875 = vmatpush.bf16.xpose.msra.mxu0 0
    %1876 = vmatpush.bf16.xpose.msra.mxu0 0
    %1877 = vmatpush.bf16.xpose.msra.mxu0 0
    %1878 = vmatpush.bf16.xpose.msra.mxu0 0
    %1879 = vmatpush.bf16.xpose.msra.mxu0 %v1872
    %1880 = vmatpush.bf16.xpose.msra.mxu0 %v1869
    %1881 = vmatpush.bf16.xpose.msra.mxu0 %v1866
    %1882 = vmatmul.bf16.gmra.mxu0 %v1857
    %v1883 = vpop.f32.mrf.mxu0
    %v1884 = vadd.f32 %v1651, %v1883
    %v1885 = vpop.f32.mrf.mxu0
    %v1886 = vadd.f32 %v1652, %v1885
    %1887 = vmatmul.bf16.gmra.mxu0 %v1860
    %v1888 = vpop.f32.mrf.mxu0
    %v1889 = vadd.f32 %v1653, %v1888
    %v1890 = vpop.f32.mrf.mxu0
    %v1891 = vadd.f32 %v1654, %v1890
    %1892 = vmatmul.bf16.gmra.mxu0 %v1863
    %v1893 = vpop.f32.mrf.mxu0
    %v1894 = vadd.f32 %v1655, %v1893
    %v1895 = vpop.f32.mrf.mxu0
    %1896 = vdwg.mxu0
    %vm1897 = vcmask 293888
    %v1898 = vsel %vm1897, %v1884, -inf
    %1899 = vmax.xlane.f32.xlu0 %v1898
    %v1900 = vpop.xlane.xlu0 %1899
    %v1901 = vsel %vm1897, %v1886, -inf
    %1902 = vmax.xlane.f32.xlu0 %v1901
    %v1903 = vpop.xlane.xlu0 %1902
    %v1904 = vsel %vm1897, %v1889, -inf
    %1905 = vmax.xlane.f32.xlu0 %v1904
    %v1906 = vpop.xlane.xlu0 %1905
    %v1907 = vsel %vm1897, %v1891, -inf
    %1908 = vmax.xlane.f32.xlu0 %v1907
    %v1909 = vpop.xlane.xlu0 %1908
    %vm1910 = vcmask 289792
    %v1911 = vsel %vm1910, %v1894, -inf
    %1912 = vmax.xlane.f32.xlu0 %v1911
    %v1913 = vpop.xlane.xlu0 %1912
    %v1914 = vsub.f32 %v1884, %v1900
    %v1915 = vsub.f32 %v1886, %v1903
    %v1916 = vsub.f32 %v1889, %v1906
    %v1917 = vsub.f32 %v1891, %v1909
    %v1918 = vsub.f32 %v1894, %v1913
    %v1919 = vmul.f32 %v1914, 1.442695
    %v1920 = vpow.pop %v1919
    %v1921 = vmul.f32 %v1915, 1.442695
    %v1922 = vpow.pop %v1921
    %v1923 = vmul.f32 %v1916, 1.442695
    %v1924 = vpow.pop %v1923
    %v1925 = vmul.f32 %v1917, 1.442695
    %v1926 = vpow.pop %v1925
    %v1927 = vmul.f32 %v1918, 1.442695
    %v1928 = vpow.pop %v1927
    %v1929 = vsel %vm1897, %v1920, 0.0
    %1930 = vadd.xlane.f32.xlu0 %v1929
    %v1931 = vpop.xlane.xlu0 %1930
    %v1932 = vsel %vm1897, %v1922, 0.0
    %1933 = vadd.xlane.f32.xlu0 %v1932
    %v1934 = vpop.xlane.xlu0 %1933
    %v1935 = vsel %vm1897, %v1924, 0.0
    %1936 = vadd.xlane.f32.xlu0 %v1935
    %v1937 = vpop.xlane.xlu0 %1936
    %v1938 = vsel %vm1897, %v1926, 0.0
    %1939 = vadd.xlane.f32.xlu0 %v1938
    %v1940 = vpop.xlane.xlu0 %1939
    %v1941 = vsel %vm1910, %v1928, 0.0
    %1942 = vadd.xlane.f32.xlu0 %v1941
    %v1943 = vpop.xlane.xlu0 %1942
    %v1944 = vrcp.pop %v1931
    %v1945 = vrcp.pop %v1934
    %v1946 = vrcp.pop %v1937
    %v1947 = vrcp.pop %v1940
    %v1948 = vrcp.pop %v1943
    %v1949 = vmul.f32 %v1920, %v1944
    %v1950 = vmul.f32 %v1922, %v1945
    %v1951 = vmul.f32 %v1924, %v1946
    %v1952 = vmul.f32 %v1926, %v1947
    %v1953 = vmul.f32 %v1928, %v1948
    %v1954 = vpack.c.bf16 %v1950, %v1949
    %v1955 = vpack.c.bf16 %v1952, %v1951
    %v1956 = vpack.c.bf16 %v1953, %v1953
    %1957 = vrot.lane.b32.xlu0 %v1846, 64
    %v1958 = vpop.permute.xlu0 %1957
    %1959 = vrot.lane.b32.xlu0 %v1847, 64
    %v1960 = vpop.permute.xlu0 %1959
    %1961 = vrot.lane.b32.xlu0 %v1848, 64
    %v1962 = vpop.permute.xlu0 %1961
    %v1966 = vsel %vm1897, %v1954, 0
    %v1969 = vsel %vm1897, %v1955, 0
    %v1972 = vsel %vm1897, %v1956, 0
    %vm1974 = vcmask 1041408
    %v1976 = vsel %vm1974, %v1962, 0
    %1978 = vmatpush.bf16.msra.mxu0 0
    %1979 = vmatpush.bf16.msra.mxu0 0
    %1980 = vmatpush.bf16.msra.mxu0 0
    %1981 = vmatpush.bf16.msra.mxu0 0
    %1982 = vmatpush.bf16.msra.mxu0 0
    %1983 = vmatpush.bf16.msra.mxu0 %v1976
    %1984 = vmatpush.bf16.msra.mxu0 %v1960
    %1985 = vmatpush.bf16.msra.mxu0 %v1958
    %1986 = vmatmul.bf16.gmra.mxu0 %v1966
    %v1987 = vpop.f32.mrf.mxu0
    %v1988 = vadd.f32 0.0, %v1987
    %v1989 = vpop.f32.mrf.mxu0
    %v1990 = vadd.f32 0.0, %v1989
    %1991 = vmatmul.bf16.gmra.mxu0 %v1969
    %v1992 = vpop.f32.mrf.mxu0
    %v1993 = vadd.f32 0.0, %v1992
    %v1994 = vpop.f32.mrf.mxu0
    %v1995 = vadd.f32 0.0, %v1994
    %1996 = vmatmul.bf16.gmra.mxu0 %v1972
    %v1997 = vpop.f32.mrf.mxu0
    %v1998 = vadd.f32 0.0, %v1997
    %v1999 = vpop.f32.mrf.mxu0
    %2000 = vdwg.mxu0
    %v2001 = vpack.c.bf16 %v1990, %v1988
    %v2002 = vpack.c.bf16 %v1995, %v1993
    %v2003 = vpack.c.bf16 %v1998, %v1998
    %v2004 = vld [vmem:[#allocation23] sm:$0xf]
    %v2005 = vld [vmem:[#allocation23 + $0x4] sm:$0xf]
    %2006 = vrot.lane.b32.xlu0 %v1833, 112
    %v2007 = vpop.permute.xlu0 %2006
    %2008 = vrot.lane.b32.xlu0 %v1834, 112
    %v2009 = vpop.permute.xlu0 %2008
    %2010 = vrot.lane.b32.xlu0 %v1835, 112
    %v2011 = vpop.permute.xlu0 %2010
    %2012 = vrot.lane.b32.xlu0 %v1846, 80
    %v2013 = vpop.permute.xlu0 %2012
    %2014 = vrot.lane.b32.xlu0 %v1847, 80
    %v2015 = vpop.permute.xlu0 %2014
    %2016 = vrot.lane.b32.xlu0 %v1848, 80
    %v2017 = vpop.permute.xlu0 %2016
    %v2019 = vsel %vm1855, %v2007, 0
    %v2022 = vsel %vm1855, %v2009, 0
    %v2025 = vsel %vm1855, %v2011, 0
    %v2028 = vsel %vm1855, %v2013, 0
    %v2031 = vsel %vm1855, %v2015, 0
    %v2034 = vsel %vm1855, %v2017, 0
    %2036 = vmatpush.bf16.xpose.msra.mxu0 0
    %2037 = vmatpush.bf16.xpose.msra.mxu0 0
    %2038 = vmatpush.bf16.xpose.msra.mxu0 0
    %2039 = vmatpush.bf16.xpose.msra.mxu0 0
    %2040 = vmatpush.bf16.xpose.msra.mxu0 0
    %2041 = vmatpush.bf16.xpose.msra.mxu0 %v2034
    %2042 = vmatpush.bf16.xpose.msra.mxu0 %v2031
    %2043 = vmatpush.bf16.xpose.msra.mxu0 %v2028
    %2044 = vmatmul.bf16.gmra.mxu0 %v2019
    %v2045 = vpop.f32.mrf.mxu0
    %v2046 = vadd.f32 %v1651, %v2045
    %v2047 = vpop.f32.mrf.mxu0
    %v2048 = vadd.f32 %v1652, %v2047
    %2049 = vmatmul.bf16.gmra.mxu0 %v2022
    %v2050 = vpop.f32.mrf.mxu0
    %v2051 = vadd.f32 %v1653, %v2050
    %v2052 = vpop.f32.mrf.mxu0
    %v2053 = vadd.f32 %v1654, %v2052
    %2054 = vmatmul.bf16.gmra.mxu0 %v2025
    %v2055 = vpop.f32.mrf.mxu0
    %v2056 = vadd.f32 %v1655, %v2055
    %v2057 = vpop.f32.mrf.mxu0
    %2058 = vdwg.mxu0
    %v2059 = vsel %vm1897, %v2046, -inf
    %2060 = vmax.xlane.f32.xlu0 %v2059
    %v2061 = vpop.xlane.xlu0 %2060
    %v2062 = vsel %vm1897, %v2048, -inf
    %2063 = vmax.xlane.f32.xlu0 %v2062
    %v2064 = vpop.xlane.xlu0 %2063
    %v2065 = vsel %vm1897, %v2051, -inf
    %2066 = vmax.xlane.f32.xlu0 %v2065
    %v2067 = vpop.xlane.xlu0 %2066
    %v2068 = vsel %vm1897, %v2053, -inf
    %2069 = vmax.xlane.f32.xlu0 %v2068
    %v2070 = vpop.xlane.xlu0 %2069
    %v2071 = vsel %vm1910, %v2056, -inf
    %2072 = vmax.xlane.f32.xlu0 %v2071
    %v2073 = vpop.xlane.xlu0 %2072
    %v2074 = vsub.f32 %v2046, %v2061
    %v2075 = vsub.f32 %v2048, %v2064
    %v2076 = vsub.f32 %v2051, %v2067
    %v2077 = vsub.f32 %v2053, %v2070
    %v2078 = vsub.f32 %v2056, %v2073
    %v2079 = vmul.f32 %v2074, 1.442695
    %v2080 = vpow.pop %v2079
    %v2081 = vmul.f32 %v2075, 1.442695
    %v2082 = vpow.pop %v2081
    %v2083 = vmul.f32 %v2076, 1.442695
    %v2084 = vpow.pop %v2083
    %v2085 = vmul.f32 %v2077, 1.442695
    %v2086 = vpow.pop %v2085
    %v2087 = vmul.f32 %v2078, 1.442695
    %v2088 = vpow.pop %v2087
    %v2089 = vsel %vm1897, %v2080, 0.0
    %2090 = vadd.xlane.f32.xlu0 %v2089
    %v2091 = vpop.xlane.xlu0 %2090
    %v2092 = vsel %vm1897, %v2082, 0.0
    %2093 = vadd.xlane.f32.xlu0 %v2092
    %v2094 = vpop.xlane.xlu0 %2093
    %v2095 = vsel %vm1897, %v2084, 0.0
    %2096 = vadd.xlane.f32.xlu0 %v2095
    %v2097 = vpop.xlane.xlu0 %2096
    %v2098 = vsel %vm1897, %v2086, 0.0
    %2099 = vadd.xlane.f32.xlu0 %v2098
    %v2100 = vpop.xlane.xlu0 %2099
    %v2101 = vsel %vm1910, %v2088, 0.0
    %2102 = vadd.xlane.f32.xlu0 %v2101
    %v2103 = vpop.xlane.xlu0 %2102
    %v2104 = vrcp.pop %v2091
    %v2105 = vrcp.pop %v2094
    %v2106 = vrcp.pop %v2097
    %v2107 = vrcp.pop %v2100
    %v2108 = vrcp.pop %v2103
    %v2109 = vmul.f32 %v2080, %v2104
    %v2110 = vmul.f32 %v2082, %v2105
    %v2111 = vmul.f32 %v2084, %v2106
    %v2112 = vmul.f32 %v2086, %v2107
    %v2113 = vmul.f32 %v2088, %v2108
    %v2114 = vpack.c.bf16 %v2110, %v2109
    %v2115 = vpack.c.bf16 %v2112, %v2111
    %v2116 = vpack.c.bf16 %v2113, %v2113
    %2117 = vrot.lane.b32.xlu0 %v1846, 48
    %v2118 = vpop.permute.xlu0 %2117
    %2119 = vrot.lane.b32.xlu0 %v1847, 48
    %v2120 = vpop.permute.xlu0 %2119
    %2121 = vrot.lane.b32.xlu0 %v1848, 48
    %v2122 = vpop.permute.xlu0 %2121
    %v2126 = vsel %vm1897, %v2114, 0
    %v2129 = vsel %vm1897, %v2115, 0
    %v2132 = vsel %vm1897, %v2116, 0
    %v2135 = vsel %vm1974, %v2122, 0
    %2137 = vmatpush.bf16.msra.mxu0 0
    %2138 = vmatpush.bf16.msra.mxu0 0
    %2139 = vmatpush.bf16.msra.mxu0 0
    %2140 = vmatpush.bf16.msra.mxu0 0
    %2141 = vmatpush.bf16.msra.mxu0 0
    %2142 = vmatpush.bf16.msra.mxu0 %v2135
    %2143 = vmatpush.bf16.msra.mxu0 %v2120
    %2144 = vmatpush.bf16.msra.mxu0 %v2118
    %2145 = vmatmul.bf16.gmra.mxu0 %v2126
    %v2146 = vpop.f32.mrf.mxu0
    %v2147 = vadd.f32 0.0, %v2146
    %v2148 = vpop.f32.mrf.mxu0
    %v2149 = vadd.f32 0.0, %v2148
    %2150 = vmatmul.bf16.gmra.mxu0 %v2129
    %v2151 = vpop.f32.mrf.mxu0
    %v2152 = vadd.f32 0.0, %v2151
    %v2153 = vpop.f32.mrf.mxu0
    %v2154 = vadd.f32 0.0, %v2153
    %2155 = vmatmul.bf16.gmra.mxu0 %v2132
    %v2156 = vpop.f32.mrf.mxu0
    %v2157 = vadd.f32 0.0, %v2156
    %v2158 = vpop.f32.mrf.mxu0
    %2159 = vdwg.mxu0
    %v2160 = vpack.c.bf16 %v2149, %v2147
    %v2161 = vpack.c.bf16 %v2154, %v2152
    %v2162 = vpack.c.bf16 %v2157, %v2157
    %v2163 = vld [vmem:[#allocation23 + $0x8] sm:$0xf]
    %v2164 = vld [vmem:[#allocation23 + $0xc] sm:$0xf]
    %v2167 = vunpack.c.l.b16 %v2163
    %v2168 = vunpack.c.l.b16 %v2164
    %v2169 = vpack.c.b16 %v2168, %v2167
    %v2172 = vsel %vm1855, %v2160, 0
    %v2175 = vsel %vm1855, %v2161, 0
    %v2178 = vsel %vm1855, %v2162, 0
    %2180 = vmatpush.bf16.msra.mxu0 0
    %2181 = vmatpush.bf16.msra.mxu0 0
    %2182 = vmatpush.bf16.msra.mxu0 0
    %2183 = vmatpush.bf16.msra.mxu0 0
    %2184 = vmatpush.bf16.msra.mxu0 0
    %2185 = vmatpush.bf16.msra.mxu0 0
    %2186 = vmatpush.bf16.msra.mxu0 0
    %2187 = vmatpush.bf16.msra.mxu0 %v2169
    %2188 = vmatmul.bf16.gmra.mxu0 %v2172
    %v2189 = vpop.f32.mrf.mxu0
    %v2190 = vadd.f32 0.0, %v2189
    %v2191 = vpop.f32.mrf.mxu0
    %v2192 = vadd.f32 0.0, %v2191
    %2193 = vmatmul.bf16.gmra.mxu0 %v2175
    %v2194 = vpop.f32.mrf.mxu0
    %v2195 = vadd.f32 0.0, %v2194
    %v2196 = vpop.f32.mrf.mxu0
    %v2197 = vadd.f32 0.0, %v2196
    %2198 = vmatmul.bf16.gmra.mxu0 %v2178
    %v2199 = vpop.f32.mrf.mxu0
    %v2200 = vadd.f32 0.0, %v2199
    %v2201 = vpop.f32.mrf.mxu0
    %2202 = vdwg.mxu0
    %v2205 = vunpack.c.l.b16 %v2004
    %v2206 = vunpack.c.l.b16 %v2005
    %v2207 = vpack.c.b16 %v2206, %v2205
    %v2210 = vsel %vm1855, %v2001, 0
    %v2213 = vsel %vm1855, %v2002, 0
    %v2216 = vsel %vm1855, %v2003, 0
    %2218 = vmatpush.bf16.msra.mxu0 0
    %2219 = vmatpush.bf16.msra.mxu0 0
    %2220 = vmatpush.bf16.msra.mxu0 0
    %2221 = vmatpush.bf16.msra.mxu0 0
    %2222 = vmatpush.bf16.msra.mxu0 0
    %2223 = vmatpush.bf16.msra.mxu0 0
    %2224 = vmatpush.bf16.msra.mxu0 0
    %2225 = vmatpush.bf16.msra.mxu0 %v2207
    %2226 = vmatmul.bf16.gmra.mxu0 %v2210
    %v2227 = vpop.f32.mrf.mxu0
    %v2228 = vadd.f32 %v2190, %v2227
    %v2229 = vpop.f32.mrf.mxu0
    %v2230 = vadd.f32 %v2192, %v2229
    %2231 = vmatmul.bf16.gmra.mxu0 %v2213
    %v2232 = vpop.f32.mrf.mxu0
    %v2233 = vadd.f32 %v2195, %v2232
    %v2234 = vpop.f32.mrf.mxu0
    %v2235 = vadd.f32 %v2197, %v2234
    %2236 = vmatmul.bf16.gmra.mxu0 %v2216
    %v2237 = vpop.f32.mrf.mxu0
    %v2238 = vadd.f32 %v2200, %v2237
    %v2239 = vpop.f32.mrf.mxu0
    %2240 = vdwg.mxu0
    %v2241 = vadd.f32 %v1646, %v2228
    %v2242 = vadd.f32 %v1647, %v2230
    %v2243 = vadd.f32 %v1648, %v2233
    %v2244 = vadd.f32 %v1649, %v2235
    %v2245 = vadd.f32 %v1650, %v2238
    %v2246 = vld [vmem:[#allocation24] sm:$0x1]
    %v2247 = vmul.f32 %v2241, %v2241
    %v2248 = vmul.f32 %v2242, %v2242
    %v2249 = vmul.f32 %v2243, %v2243
    %v2250 = vmul.f32 %v2244, %v2244
    %v2251 = vmul.f32 %v2245, %v2245
    %v2252 = vsel %vm787, %v2247, 0.0
    %2253 = vadd.xlane.f32.xlu0 %v2252
    %v2254 = vpop.xlane.xlu0 %2253
    %v2255 = vsel %vm787, %v2248, 0.0
    %2256 = vadd.xlane.f32.xlu0 %v2255
    %v2257 = vpop.xlane.xlu0 %2256
    %v2258 = vsel %vm787, %v2249, 0.0
    %2259 = vadd.xlane.f32.xlu0 %v2258
    %v2260 = vpop.xlane.xlu0 %2259
    %v2261 = vsel %vm787, %v2250, 0.0
    %2262 = vadd.xlane.f32.xlu0 %v2261
    %v2263 = vpop.xlane.xlu0 %2262
    %v2264 = vsel %vm815, %v2251, 0.0
    %2265 = vadd.xlane.f32.xlu0 %v2264
    %v2266 = vpop.xlane.xlu0 %2265
    %v2267 = vmul.f32 %v2254, %v1683
    %v2268 = vmul.f32 %v2257, %v1683
    %v2269 = vmul.f32 %v2260, %v1683
    %v2270 = vmul.f32 %v2263, %v1683
    %v2271 = vmul.f32 %v2266, %v1683
    %v2272 = vadd.f32 %v2267, 1e-06
    %v2273 = vadd.f32 %v2268, 1e-06
    %v2274 = vadd.f32 %v2269, 1e-06
    %v2275 = vadd.f32 %v2270, 1e-06
    %v2276 = vadd.f32 %v2271, 1e-06
    %v2277 = vrsqrt.pop %v2272
    %v2278 = vmul.f32 %v2277, %v2272
    %v2279 = vmul.f32 %v2278, %v2277
    %v2280 = vmul.f32 0.5, %v2279
    %v2281 = vsub.f32 1.5, %v2280
    %v2282 = vmul.f32 %v2277, %v2281
    %vm2283 = vweird.f32 %v2272
    %vm2284 = vweird.f32 %v2277
    %vm2285 = vmor %vm2283, %vm2284
    %v2286 = vsel %vm2285, %v2277, %v2282
    %v2287 = vrsqrt.pop %v2273
    %v2288 = vmul.f32 %v2287, %v2273
    %v2289 = vmul.f32 %v2288, %v2287
    %v2290 = vmul.f32 0.5, %v2289
    %v2291 = vsub.f32 1.5, %v2290
    %v2292 = vmul.f32 %v2287, %v2291
    %vm2293 = vweird.f32 %v2273
    %vm2294 = vweird.f32 %v2287
    %vm2295 = vmor %vm2293, %vm2294
    %v2296 = vsel %vm2295, %v2287, %v2292
    %v2297 = vrsqrt.pop %v2274
    %v2298 = vmul.f32 %v2297, %v2274
    %v2299 = vmul.f32 %v2298, %v2297
    %v2300 = vmul.f32 0.5, %v2299
    %v2301 = vsub.f32 1.5, %v2300
    %v2302 = vmul.f32 %v2297, %v2301
    %vm2303 = vweird.f32 %v2274
    %vm2304 = vweird.f32 %v2297
    %vm2305 = vmor %vm2303, %vm2304
    %v2306 = vsel %vm2305, %v2297, %v2302
    %v2307 = vrsqrt.pop %v2275
    %v2308 = vmul.f32 %v2307, %v2275
    %v2309 = vmul.f32 %v2308, %v2307
    %v2310 = vmul.f32 0.5, %v2309
    %v2311 = vsub.f32 1.5, %v2310
    %v2312 = vmul.f32 %v2307, %v2311
    %vm2313 = vweird.f32 %v2275
    %vm2314 = vweird.f32 %v2307
    %vm2315 = vmor %vm2313, %vm2314
    %v2316 = vsel %vm2315, %v2307, %v2312
    %v2317 = vrsqrt.pop %v2276
    %v2318 = vmul.f32 %v2317, %v2276
    %v2319 = vmul.f32 %v2318, %v2317
    %v2320 = vmul.f32 0.5, %v2319
    %v2321 = vsub.f32 1.5, %v2320
    %v2322 = vmul.f32 %v2317, %v2321
    %vm2323 = vweird.f32 %v2276
    %vm2324 = vweird.f32 %v2317
    %vm2325 = vmor %vm2323, %vm2324
    %v2326 = vsel %vm2325, %v2317, %v2322
    %v2327 = vmul.f32 %v2241, %v2286
    %v2328 = vmul.f32 %v2242, %v2296
    %v2329 = vmul.f32 %v2243, %v2306
    %v2330 = vmul.f32 %v2244, %v2316
    %v2331 = vmul.f32 %v2245, %v2326
    %v2333 = vperm.slane %v2246, 0
    %v2335 = vmul.f32 %v2327, %v2333
    %v2336 = vmul.f32 %v2328, %v2333
    %v2337 = vmul.f32 %v2329, %v2333
    %v2338 = vmul.f32 %v2330, %v2333
    %v2339 = vmul.f32 %v2331, %v2333
    %v2340 = vpack.c.bf16 %v2336, %v2335
    %v2341 = vpack.c.bf16 %v2338, %v2337
    %v2342 = vpack.c.bf16 %v2339, %v2339
    %v2343 = vld [vmem:[#allocation26] sm:$0xf]
    %v2344 = vld [vmem:[#allocation26 + $0x4] sm:$0xf]
    %v2345 = vld [vmem:[#allocation26 + $0x8] sm:$0xf]
    %v2346 = vld [vmem:[#allocation26 + $0xc] sm:$0xf]
    %v2347 = vld [vmem:[#allocation27] sm:$0x1]
    %v2349 = vperm.slane %v2347, 0
    %v2355 = vunpack.c.l.b16 %v2343
    %v2356 = vunpack.c.l.b16 %v2344
    %v2357 = vunpack.c.l.b16 %v2345
    %v2358 = vunpack.c.l.b16 %v2346
    %v2359 = vpack.c.b16 %v2356, %v2355
    %v2360 = vpack.c.b16 %v2358, %v2357
    %v2364 = vsel %vm787, %v2340, 0
    %v2367 = vsel %vm787, %v2341, 0
    %v2370 = vsel %vm787, %v2342, 0
    %2372 = vmatpush.bf16.msra.mxu0 0
    %2373 = vmatpush.bf16.msra.mxu0 0
    %2374 = vmatpush.bf16.msra.mxu0 0
    %2375 = vmatpush.bf16.msra.mxu0 0
    %2376 = vmatpush.bf16.msra.mxu0 0
    %2377 = vmatpush.bf16.msra.mxu0 0
    %2378 = vmatpush.bf16.msra.mxu0 %v2360
    %2379 = vmatpush.bf16.msra.mxu0 %v2359
    %2380 = vmatmul.bf16.gmra.mxu0 %v2364
    %v2381 = vpop.f32.mrf.mxu0
    %v2382 = vadd.f32 %v2349, %v2381
    %v2383 = vpop.f32.mrf.mxu0
    %v2384 = vadd.f32 %v2349, %v2383
    %2385 = vmatmul.bf16.gmra.mxu0 %v2367
    %v2386 = vpop.f32.mrf.mxu0
    %v2387 = vadd.f32 %v2349, %v2386
    %v2388 = vpop.f32.mrf.mxu0
    %v2389 = vadd.f32 %v2349, %v2388
    %2390 = vmatmul.bf16.gmra.mxu0 %v2370
    %v2391 = vpop.f32.mrf.mxu0
    %v2392 = vadd.f32 %v2349, %v2391
    %v2393 = vpop.f32.mrf.mxu0
    %2394 = vdwg.mxu0
    %v2395 = vmul.f32 %v2382, %v2382
    %v2396 = vmul.f32 %v2384, %v2384
    %v2397 = vmul.f32 %v2387, %v2387
    %v2398 = vmul.f32 %v2389, %v2389
    %v2399 = vmul.f32 %v2392, %v2392
    %v2400 = vmul.f32 %v2382, %v2395
    %v2401 = vmul.f32 %v2384, %v2396
    %v2402 = vmul.f32 %v2387, %v2397
    %v2403 = vmul.f32 %v2389, %v2398
    %v2404 = vmul.f32 %v2392, %v2399
    %v2405 = vmul.f32 %v2400, 0.044715
    %v2406 = vmul.f32 %v2401, 0.044715
    %v2407 = vmul.f32 %v2402, 0.044715
    %v2408 = vmul.f32 %v2403, 0.044715
    %v2409 = vmul.f32 %v2404, 0.044715
    %v2410 = vadd.f32 %v2382, %v2405
    %v2411 = vadd.f32 %v2384, %v2406
    %v2412 = vadd.f32 %v2387, %v2407
    %v2413 = vadd.f32 %v2389, %v2408
    %v2414 = vadd.f32 %v2392, %v2409
    %v2415 = vmul.f32 %v2410, 0.7978846
    %v2416 = vmul.f32 %v2411, 0.7978846
    %v2417 = vmul.f32 %v2412, 0.7978846
    %v2418 = vmul.f32 %v2413, 0.7978846
    %v2419 = vmul.f32 %v2414, 0.7978846
    %v2420 = vtanh.pop %v2415
    %v2421 = vtanh.pop %v2416
    %v2422 = vtanh.pop %v2417
    %v2423 = vtanh.pop %v2418
    %v2424 = vtanh.pop %v2419
    %v2425 = vadd.f32 %v2420, 1.0
    %v2426 = vadd.f32 %v2421, 1.0
    %v2427 = vadd.f32 %v2422, 1.0
    %v2428 = vadd.f32 %v2423, 1.0
    %v2429 = vadd.f32 %v2424, 1.0
    %v2430 = vmul.f32 %v2425, 0.5
    %v2431 = vmul.f32 %v2426, 0.5
    %v2432 = vmul.f32 %v2427, 0.5
    %v2433 = vmul.f32 %v2428, 0.5
    %v2434 = vmul.f32 %v2429, 0.5
    %v2435 = vmul.f32 %v2382, %v2430
    %v2436 = vmul.f32 %v2384, %v2431
    %v2437 = vmul.f32 %v2387, %v2432
    %v2438 = vmul.f32 %v2389, %v2433
    %v2439 = vmul.f32 %v2392, %v2434
    %v2440 = vpack.c.bf16 %v2436, %v2435
    %v2441 = vpack.c.bf16 %v2438, %v2437
    %v2442 = vpack.c.bf16 %v2439, %v2439
    %v2443 = vld [vmem:[%s61] sm:$0xf]
    %v2444 = vld [vmem:[%s61 + $0x4] sm:$0xf]
    %v2445 = vld [vmem:[%s61 + $0x8] sm:$0xf]
    %v2446 = vld [vmem:[%s61 + $0xc] sm:$0xf]
    %v2447 = vld [vmem:[%s61 + $0x10] sm:$0xf]
    %v2448 = vld [vmem:[%s61 + $0x14] sm:$0xf]
    %v2449 = vld [vmem:[%s61 + $0x18] sm:$0xf]
    %v2450 = vld [vmem:[%s61 + $0x1c] sm:$0xf]
    %v2459 = vunpack.c.l.b16 %v2443
    %v2460 = vunpack.c.l.b16 %v2444
    %v2461 = vunpack.c.l.b16 %v2445
    %v2462 = vunpack.c.l.b16 %v2446
    %v2463 = vunpack.c.l.b16 %v2447
    %v2464 = vunpack.c.l.b16 %v2448
    %v2465 = vunpack.c.l.b16 %v2449
    %v2466 = vunpack.c.l.b16 %v2450
    %v2467 = vpack.c.b16 %v2460, %v2459
    %v2468 = vpack.c.b16 %v2462, %v2461
    %v2469 = vpack.c.b16 %v2464, %v2463
    %v2470 = vpack.c.b16 %v2466, %v2465
    %v2476 = vsel %vm1019, %v2440, 0
    %v2479 = vsel %vm1019, %v2441, 0
    %v2482 = vsel %vm1019, %v2442, 0
    %2484 = vmatpush.bf16.msra.mxu0 0
    %2485 = vmatpush.bf16.msra.mxu0 0
    %2486 = vmatpush.bf16.msra.mxu0 0
    %2487 = vmatpush.bf16.msra.mxu0 0
    %2488 = vmatpush.bf16.msra.mxu0 %v2470
    %2489 = vmatpush.bf16.msra.mxu0 %v2469
    %2490 = vmatpush.bf16.msra.mxu0 %v2468
    %2491 = vmatpush.bf16.msra.mxu0 %v2467
    %2492 = vmatmul.bf16.gmra.mxu0 %v2476
    %v2493 = vpop.f32.mrf.mxu0
    %v2494 = vadd.f32 0.0, %v2493
    %v2495 = vpop.f32.mrf.mxu0
    %v2496 = vadd.f32 0.0, %v2495
    %2497 = vmatmul.bf16.gmra.mxu0 %v2479
    %v2498 = vpop.f32.mrf.mxu0
    %v2499 = vadd.f32 0.0, %v2498
    %v2500 = vpop.f32.mrf.mxu0
    %v2501 = vadd.f32 0.0, %v2500
    %2502 = vmatmul.bf16.gmra.mxu0 %v2482
    %v2503 = vpop.f32.mrf.mxu0
    %v2504 = vpop.f32.mrf.mxu0
    %2505 = vdwg.mxu0
    %v2506 = vadd.f32 %v2241, %v2494
    %v2507 = vadd.f32 %v2242, %v2496
    %v2508 = vadd.f32 %v2243, %v2499
    %v2509 = vadd.f32 %v2244, %v2501
    %v2510 = vld [vmem:[#allocation29] sm:$0x1]
    %v2512 = vperm.slane %v2510, 0
    %v2514 = vadd.f32 %v2506, %v2512
    %v2515 = vadd.f32 %v2507, %v2512
    %v2516 = vadd.f32 %v2508, %v2512
    %v2517 = vadd.f32 %v2509, %v2512
    %v2518 = vld [vmem:[#allocation30] sm:$0x1]
    %v2519 = vmul.f32 %v2514, %v2514
    %v2520 = vmul.f32 %v2515, %v2515
    %v2521 = vmul.f32 %v2516, %v2516
    %v2522 = vmul.f32 %v2517, %v2517
    %v2523 = vsel %vm787, %v2519, 0.0
    %2524 = vadd.xlane.f32.xlu0 %v2523
    %v2525 = vpop.xlane.xlu0 %2524
    %v2526 = vsel %vm787, %v2520, 0.0
    %2527 = vadd.xlane.f32.xlu0 %v2526
    %v2528 = vpop.xlane.xlu0 %2527
    %v2529 = vsel %vm787, %v2521, 0.0
    %2530 = vadd.xlane.f32.xlu0 %v2529
    %v2531 = vpop.xlane.xlu0 %2530
    %v2532 = vsel %vm787, %v2522, 0.0
    %2533 = vadd.xlane.f32.xlu0 %v2532
    %v2534 = vpop.xlane.xlu0 %2533
    %v2535 = vmul.f32 %v2525, %v1683
    %v2536 = vmul.f32 %v2528, %v1683
    %v2537 = vmul.f32 %v2531, %v1683
    %v2538 = vmul.f32 %v2534, %v1683
    %v2539 = vadd.f32 %v2535, 1e-06
    %v2540 = vadd.f32 %v2536, 1e-06
    %v2541 = vadd.f32 %v2537, 1e-06
    %v2542 = vadd.f32 %v2538, 1e-06
    %v2543 = vrsqrt.pop %v2539
    %v2544 = vmul.f32 %v2543, %v2539
    %v2545 = vmul.f32 %v2544, %v2543
    %v2546 = vmul.f32 0.5, %v2545
    %v2547 = vsub.f32 1.5, %v2546
    %v2548 = vmul.f32 %v2543, %v2547
    %vm2549 = vweird.f32 %v2539
    %vm2550 = vweird.f32 %v2543
    %vm2551 = vmor %vm2549, %vm2550
    %v2552 = vsel %vm2551, %v2543, %v2548
    %v2553 = vrsqrt.pop %v2540
    %v2554 = vmul.f32 %v2553, %v2540
    %v2555 = vmul.f32 %v2554, %v2553
    %v2556 = vmul.f32 0.5, %v2555
    %v2557 = vsub.f32 1.5, %v2556
    %v2558 = vmul.f32 %v2553, %v2557
    %vm2559 = vweird.f32 %v2540
    %vm2560 = vweird.f32 %v2553
    %vm2561 = vmor %vm2559, %vm2560
    %v2562 = vsel %vm2561, %v2553, %v2558
    %v2563 = vrsqrt.pop %v2541
    %v2564 = vmul.f32 %v2563, %v2541
    %v2565 = vmul.f32 %v2564, %v2563
    %v2566 = vmul.f32 0.5, %v2565
    %v2567 = vsub.f32 1.5, %v2566
    %v2568 = vmul.f32 %v2563, %v2567
    %vm2569 = vweird.f32 %v2541
    %vm2570 = vweird.f32 %v2563
    %vm2571 = vmor %vm2569, %vm2570
    %v2572 = vsel %vm2571, %v2563, %v2568
    %v2573 = vrsqrt.pop %v2542
    %v2574 = vmul.f32 %v2573, %v2542
    %v2575 = vmul.f32 %v2574, %v2573
    %v2576 = vmul.f32 0.5, %v2575
    %v2577 = vsub.f32 1.5, %v2576
    %v2578 = vmul.f32 %v2573, %v2577
    %vm2579 = vweird.f32 %v2542
    %vm2580 = vweird.f32 %v2573
    %vm2581 = vmor %vm2579, %vm2580
    %v2582 = vsel %vm2581, %v2573, %v2578
    %v2583 = vmul.f32 %v2514, %v2552
    %v2584 = vmul.f32 %v2515, %v2562
    %v2585 = vmul.f32 %v2516, %v2572
    %v2586 = vmul.f32 %v2517, %v2582
    %v2588 = vperm.slane %v2518, 0
    %v2590 = vmul.f32 %v2583, %v2588
    %v2591 = vmul.f32 %v2584, %v2588
    %v2592 = vmul.f32 %v2585, %v2588
    %v2593 = vmul.f32 %v2586, %v2588
    %2594 = vst.msk [vmem:[%s67] sm:$0xff] %vm787, %v2590
    %2595 = vst.msk [vmem:[%s67 + $0x8] sm:$0xff] %vm787, %v2591
    %2596 = vst.msk [vmem:[%s67 + $0x10] sm:$0xff] %vm787, %v2592
    %2597 = vst.msk [vmem:[%s67 + $0x18] sm:$0xff] %vm787, %v2593
    // Predicated region
    $region206: #{mblm_encoder_forward.1} parent=1 // pred_check
      _
    $region207: #{mblm_encoder_forward.1} parent=1 // pred_check_branch
      %2599 = sbr.rel (0) target = $region209
    $region208: #{mblm_encoder_forward.1} parent=1 // pred_region
      _
    $region209: #{mblm_encoder_forward.1} parent=1 // pred_fallthru
      _
    // Predicated region
    $region210: #{mblm_encoder_forward.1} parent=1 // pred_check
      _
    $region211: #{mblm_encoder_forward.1} parent=1 // pred_check_branch
      %2601 = sbr.rel (0) target = $region213
    $region212: #{mblm_encoder_forward.1} parent=1 // pred_region
      _
    $region213: #{mblm_encoder_forward.1} parent=1 // pred_fallthru
      _
    %2602 = vsyncpa [#allocation5], 1
    %2603 = vsyncpa [#allocation7], 1
    %2604 = vsyncpa [#allocation10], 1
    %2605 = vsyncpa [#allocation13], 1
    %2606 = vsyncpa [#allocation16], 1
    %2607 = vsyncpa [#allocation19], 1
    %2608 = vsyncpa [#allocation22], 1
    %2609 = vsyncpa [#allocation25], 1
    %2610 = vsyncpa [#allocation28], 1
    %2611 = vsyncpa [#allocation31], 1

</llo_original>
